<compile_context>
chip_gen: v7x
topology: tpu7x:2x2x1
jax: 0.10.0
libtpu: 0.0.40
codegen_flags: <defaults>
</compile_context>

<pallas_src>
import functools

import jax
import jax.numpy as jnp
from jax import lax
from jax.experimental import pallas as pl
from jax.experimental.pallas import tpu as pltpu

_LN_EPS = 1e-5          # PyTorch nn.LayerNorm default
_LEFT = 16              # interior column start in the padded scratch
                        # (multiple of the sublane tile for both f32 and bf16)


def _conv_compute_dtype():
    """bf16 depthwise conv on chips with bf16 VALUs (v6e/v7x); f32 elsewhere."""
    try:
        kind = jax.devices()[0].device_kind.lower()
    except Exception:
        return jnp.float32
    if ("v6" in kind) or ("v7" in kind) or ("7x" in kind):
        return jnp.bfloat16
    return jnp.float32


def _pick_tile_h(H):
    """Largest H-tile <= 8 that divides H (8 rows x W cols = MXU-friendly M)."""
    for cand in (8, 4, 2, 1):
        if H % cand == 0:
            return cand
    return H


# ---------------------------------------------------------------------------
# Fused Pallas kernel: depthwise conv -> LN -> adaLN -> MLP -> gate -> +res
# ---------------------------------------------------------------------------

def _convnext_kernel(x_ref, ssg_ref, dww_ref, dwb_ref, w1_ref, b1_ref,
                     w2_ref, b2_ref, o_ref, xp_ref, *,
                     H, W, C, k, tile_h, left, conv_dtype):
    pad = k // 2
    wp = left + W + pad
    n_rows = tile_h + 2 * pad
    t = pl.program_id(1)

    # ---- once per batch (first H-tile): refresh the padded copy of x -------
    # Halo-only zeroing (interior is fully overwritten); gated on the tile
    # index — NOT program_id(0) — so every core zeroes its own scratch halo
    # even when the batch axis is megacore-sharded.
    @pl.when(t == 0)
    def _():
        xp_ref[0:pad, :, :] = jnp.zeros((pad, wp, C), conv_dtype)
        xp_ref[pad + H:pad + H + pad, :, :] = jnp.zeros((pad, wp, C), conv_dtype)
        xp_ref[pad:pad + H, 0:left, :] = jnp.zeros((H, left, C), conv_dtype)
        xp_ref[pad:pad + H, left + W:left + W + pad, :] = (
            jnp.zeros((H, pad, C), conv_dtype))
        # Sublane-aligned, unmasked interior store (starts at column `left`).
        xp_ref[pad:pad + H, left:left + W, :] = x_ref[0].astype(conv_dtype)

    # ---- depthwise k x k conv for this tile of rows -------------------------
    # One W-shifted slab load per kernel column (the only misaligned reads),
    # reused for all k row taps; row-tap slices only touch the leading
    # (non-layout) dim. acc + slab stay within the 64-vreg file.
    r0 = pl.multiple_of(t * tile_h, tile_h)
    acc = jnp.zeros((tile_h, W, C), conv_dtype)
    for dw in range(k):
        c0 = left - pad + dw
        slab = xp_ref[pl.ds(r0, n_rows), c0:c0 + W, :]     # (tile_h+2p, W, C)
        for dh in range(k):
            wt = dww_ref[dh * k + dw]                      # (C,) read from VMEM
            acc = acc + slab[dh:dh + tile_h] * wt

    # ---- LayerNorm -> adaLN -> MLP -> gate -> residual, in (tile_h*W, C) ----
    m = tile_h * W
    y = acc.astype(jnp.float32).reshape(m, C) + dwb_ref[...]
    mean = jnp.mean(y, axis=-1, keepdims=True)
    var = jnp.mean(jnp.square(y - mean), axis=-1, keepdims=True)
    yn = (y - mean) * lax.rsqrt(var + _LN_EPS)

    ssg = ssg_ref[0]                                       # (3, C) f32
    xln = (1.0 + ssg[0]) * yn + ssg[1]

    # Pointwise MLP on the MXU: bf16 operands, f32 accumulation.
    h1 = jnp.dot(xln.astype(jnp.bfloat16), w1_ref[...],
                 preferred_element_type=jnp.float32) + b1_ref[...]
    h1 = h1 * jax.nn.sigmoid(h1)                           # SiLU
    out = jnp.dot(h1.astype(jnp.bfloat16), w2_ref[...],
                  preferred_element_type=jnp.float32) + b2_ref[...]

    res = x_ref[:, pl.ds(r0, tile_h), :, :].reshape(m, C)  # residual (f32)
    o_ref[...] = (out * ssg[2] + res)[None].astype(o_ref.dtype)


# ---------------------------------------------------------------------------
# Forward wrapper
# ---------------------------------------------------------------------------

def convnext_forward(params, x_nchw, c):
    """x_nchw:[N,C,H,W] f32, c:[N,Cc] f32 -> [N,C,H,W] f32 (PyTorch semantics)."""
    k, r = params["k"], params["r"]
    pad = k // 2
    x = jnp.transpose(x_nchw, (0, 2, 3, 1))                 # channels_last
    N, H, W, C = x.shape
    Cr = C * r

    conv_dtype = _conv_compute_dtype()
    conv_bytes = jnp.dtype(conv_dtype).itemsize
    tile_h = _pick_tile_h(H)
    n_tiles = H // tile_h
    wp = _LEFT + W + pad

    # affine_map(c) = SiLU -> Linear -> Rearrange('b (c ssg) -> ssg b () () c')
    # Plain XLA: M ~= batch rows, a Pallas launch here is pure overhead.
    aff = jax.nn.silu(c) @ params["aff_w"] + params["aff_b"]       # [N, 3C]
    ssg = jnp.transpose(aff.reshape(N, C, 3), (0, 2, 1))           # [N, 3, C]

    # VMEM budget computed from actual buffer sizes (not a hard-coded limit);
    # cap at v7x's 64 MiB physical VMEM.
    blk_bytes = (H * W * C * 4                      # x block (resident/batch)
                 + tile_h * W * C * 4               # out tile
                 + 3 * C * 4                        # ssg
                 + k * k * C * conv_bytes + C * 4   # dw conv params
                 + C * Cr * 2 + Cr * 4              # mlp w1 / b1
                 + Cr * C * 2 + C * 4)              # mlp w2 / b2
    scratch_bytes = (H + 2 * pad) * wp * C * conv_bytes
    need = 2 * blk_bytes + scratch_bytes            # double-buffered blocks
    vmem_limit = int(min(64 << 20, max(16 << 20, 2 * need + (4 << 20))))

    flops = N * (2 * H * W * C * k * k + 4 * H * W * C * Cr + 10 * H * W * C)
    transcendentals = N * H * W * Cr
    bytes_accessed = (2 * N * H * W * C * 4 + N * 3 * C * 4
                      + k * k * C * conv_bytes + 2 * C * Cr * 2
                      + (2 * C + Cr) * 4)

    kern = functools.partial(_convnext_kernel, H=H, W=W, C=C, k=k,
                             tile_h=tile_h, left=_LEFT, conv_dtype=conv_dtype)
    out_flat = pl.pallas_call(
        kern,
        out_shape=jax.ShapeDtypeStruct((N, H * W, C), jnp.float32),
        grid=(N, n_tiles),
        in_specs=[
            # x block indexed by batch only: DMA'd once per batch, resident
            # across all H-tiles; also provides the residual.
            pl.BlockSpec((1, H, W, C), lambda b, t: (b, 0, 0, 0)),
            pl.BlockSpec((1, 3, C), lambda b, t: (b, 0, 0)),       # scale/shift/gate
            pl.BlockSpec((k * k, C), lambda b, t: (0, 0)),         # dw weight
            pl.BlockSpec((1, C), lambda b, t: (0, 0)),             # dw bias
            pl.BlockSpec((C, Cr), lambda b, t: (0, 0)),            # mlp w1 (bf16)
            pl.BlockSpec((1, Cr), lambda b, t: (0, 0)),            # mlp b1
            pl.BlockSpec((Cr, C), lambda b, t: (0, 0)),            # mlp w2 (bf16)
            pl.BlockSpec((1, C), lambda b, t: (0, 0)),             # mlp b2
        ],
        out_specs=pl.BlockSpec((1, tile_h * W, C), lambda b, t: (b, t, 0)),
        scratch_shapes=[pltpu.VMEM((H + 2 * pad, wp, C), conv_dtype)],
        compiler_params=pltpu.CompilerParams(
            dimension_semantics=("parallel", "arbitrary"),
            vmem_limit_bytes=vmem_limit),
        cost_estimate=pl.CostEstimate(flops=flops,
                                      transcendentals=transcendentals,
                                      bytes_accessed=bytes_accessed),
    )(x, ssg,
      params["dw_w"].astype(conv_dtype), params["dw_b"].reshape(1, C),
      params["mlp_w1"], params["mlp_b1"].reshape(1, Cr),
      params["mlp_w2"], params["mlp_b2"].reshape(1, C))

    out = out_flat.reshape(N, H, W, C)
    return jnp.transpose(out, (0, 3, 1, 2))                 # channels_first


# ---------------------------------------------------------------------------
# Pure-JAX f32 reference of the PyTorch forward (verification only)
# ---------------------------------------------------------------------------

def convnext_reference(params, x_nchw, c):
    k = params["k"]
    x = jnp.transpose(x_nchw, (0, 2, 3, 1))
    N, H, W, C = x.shape
    res = x

    sc = jax.nn.silu(c)
    aff = sc @ params["aff_w"].astype(jnp.float32) + params["aff_b"]
    aff = aff.reshape(N, C, 3)
    scale = aff[:, :, 0][:, None, None, :]
    shift = aff[:, :, 1][:, None, None, :]
    gate = aff[:, :, 2][:, None, None, :]

    dw_w = params["dw_w"].reshape(k, k, 1, C)
    y = lax.conv_general_dilated(
        x, dw_w, window_strides=(1, 1), padding="SAME",
        dimension_numbers=("NHWC", "HWIO", "NHWC"),
        feature_group_count=C) + params["dw_b"]

    mean = jnp.mean(y, axis=-1, keepdims=True)
    var = jnp.mean(jnp.square(y - mean), axis=-1, keepdims=True)
    yn = (y - mean) / jnp.sqrt(var + _LN_EPS)

    t = (1.0 + scale) * yn + shift
    h1 = t @ params["mlp_w1"].astype(jnp.float32) + params["mlp_b1"]
    h1 = jax.nn.silu(h1)
    out = h1 @ params["mlp_w2"].astype(jnp.float32) + params["mlp_b2"]
    out = out * gate + res
    return jnp.transpose(out, (0, 3, 1, 2))


# ---------------------------------------------------------------------------
# Deterministic synthetic parameters
# ---------------------------------------------------------------------------

def init_params(key, *, channels, channels_c, k=7, r=4):
    C, Cc, Cr = channels, channels_c, channels * r
    ks = jax.random.split(key, 8)

    def w(kk, shape, std=0.05):
        return std * jax.random.normal(kk, shape, jnp.float32)

    return {
        "k": k, "r": r,
        # depthwise conv, stored (k*k, C): row dh*k+dw <-> PyTorch weight[c,0,dh,dw]
        "dw_w": w(ks[0], (k * k, C)),
        "dw_b": w(ks[1], (C,)),
        # pointwise MLP weights stored bf16 (native MXU operand dtype)
        "mlp_w1": w(ks[2], (C, Cr)).astype(jnp.bfloat16),
        "mlp_b1": w(ks[3], (Cr,)),
        "mlp_w2": w(ks[4], (Cr, C)).astype(jnp.bfloat16),
        "mlp_b2": w(ks[5], (C,)),
        # affine_map Linear (plain XLA, f32): column order is (channel-major,
        # ssg-minor), matching Rearrange('b (c ssg) -> ssg b () () c', ssg=3).
        "aff_w": w(ks[6], (Cc, 3 * C)),
        "aff_b": w(ks[7], (3 * C,)),
    }


# ---------------------------------------------------------------------------
# Demo
# ---------------------------------------------------------------------------

if __name__ == "__main__":
    key = jax.random.PRNGKey(0)
    kx, kc, kp = jax.random.split(key, 3)

    # ConvNext(channels=128, channels_c=32, k=7, r=4); channel count chosen
    # lane-dense (multiple of 128) so MXU lanes are full and stores unmasked.
    N, C, H, W = 2, 128, 16, 16
    Cc = 32

    x = jax.random.normal(kx, (N, C, H, W), jnp.float32)
    c = jax.random.normal(kc, (N, Cc), jnp.float32)
    params = init_params(kp, channels=C, channels_c=Cc, k=7, r=4)

    out = convnext_forward(params, x, c)
    out = jax.block_until_ready(out)

    assert out.shape == (N, C, H, W), out.shape
    assert bool(jnp.all(jnp.isfinite(out)))

    # Verify against a pure-JAX f32 reference of the PyTorch forward
    # (expected deviation: bf16 rounding of matmul operands and, on v6e/v7x,
    # of the depthwise-conv accumulation).
    ref = convnext_reference(params, x, c)
    err = float(jnp.max(jnp.abs(out - ref)))
    assert err < 5e-2, f"max abs error vs reference: {err}"

    print("KERNEL_OK")
</pallas_src>

<mosaic_0001>
module attributes {stable_mosaic.version = 11 : i64} {
  func.func @_convnext_kernel(%arg0: i32, %arg1: i32, %arg2: memref<1x16x16x128xf32, #tpu.memory_space<vmem>>, %arg3: memref<1x3x128xf32, #tpu.memory_space<vmem>>, %arg4: memref<49x128xf32, #tpu.memory_space<vmem>>, %arg5: memref<1x128xf32, #tpu.memory_space<vmem>>, %arg6: memref<128x512xbf16, #tpu.memory_space<vmem>>, %arg7: memref<1x512xf32, #tpu.memory_space<vmem>>, %arg8: memref<512x128xbf16, #tpu.memory_space<vmem>>, %arg9: memref<1x128xf32, #tpu.memory_space<vmem>>, %arg10: memref<1x128x128xf32, #tpu.memory_space<vmem>>, %arg11: memref<22x35x128xf32, #tpu.memory_space<vmem>>) attributes {dimension_semantics = [#tpu.dimension_semantics<parallel>, #tpu.dimension_semantics<arbitrary>], iteration_bounds = array<i64: 2, 2>, scalar_prefetch = 0 : i64, scratch_operands = 1 : i64, tpu.core_type = #tpu.core_type<tc>, window_params = [{transform_indices = @transform_0, window_bounds = array<i64: 1, 16, 16, 128>}, {transform_indices = @transform_1, window_bounds = array<i64: 1, 3, 128>}, {pipeline_mode = #tpu.pipeline_mode<synchronous>, transform_indices = @transform_2, window_bounds = array<i64: 49, 128>}, {pipeline_mode = #tpu.pipeline_mode<synchronous>, transform_indices = @transform_3, window_bounds = array<i64: 1, 128>}, {pipeline_mode = #tpu.pipeline_mode<synchronous>, transform_indices = @transform_4, window_bounds = array<i64: 128, 512>}, {pipeline_mode = #tpu.pipeline_mode<synchronous>, transform_indices = @transform_5, window_bounds = array<i64: 1, 512>}, {pipeline_mode = #tpu.pipeline_mode<synchronous>, transform_indices = @transform_6, window_bounds = array<i64: 512, 128>}, {pipeline_mode = #tpu.pipeline_mode<synchronous>, transform_indices = @transform_7, window_bounds = array<i64: 1, 128>}, {transform_indices = @transform_8, window_bounds = array<i64: 1, 128, 128>}]} {
    %c0_i32 = arith.constant 0 : i32
    %0 = arith.cmpi eq, %arg1, %c0_i32 : i32
    %1 = arith.extui %0 : i1 to i32
    %c0_i32_0 = arith.constant 0 : i32
    %2 = arith.cmpi ne, %1, %c0_i32_0 : i32
    scf.if %2 {
      %cst_92 = arith.constant 0.000000e+00 : f32
      %428 = vector.broadcast %cst_92 : f32 to vector<3x35x128xf32>
      %c0_93 = arith.constant 0 : index
      %c0_94 = arith.constant 0 : index
      %c0_95 = arith.constant 0 : index
      %429 = vector.load %arg11[%c0_93, %c0_94, %c0_95] : memref<22x35x128xf32, #tpu.memory_space<vmem>>, vector<3x35x128xf32>
      tpu.vector_store %arg11[%c0_93, %c0_94, %c0_95], %428 {strides = array<i32>} : memref<22x35x128xf32, #tpu.memory_space<vmem>>, vector<3x35x128xf32>,
      %cst_96 = arith.constant 0.000000e+00 : f32
      %430 = vector.broadcast %cst_96 : f32 to vector<3x35x128xf32>
      %c19_97 = arith.constant 19 : index
      %c0_98 = arith.constant 0 : index
      %c0_99 = arith.constant 0 : index
      %431 = vector.load %arg11[%c19_97, %c0_98, %c0_99] : memref<22x35x128xf32, #tpu.memory_space<vmem>>, vector<3x35x128xf32>
      tpu.vector_store %arg11[%c19_97, %c0_98, %c0_99], %430 {strides = array<i32>} : memref<22x35x128xf32, #tpu.memory_space<vmem>>, vector<3x35x128xf32>,
      %cst_100 = arith.constant 0.000000e+00 : f32
      %432 = vector.broadcast %cst_100 : f32 to vector<16x16x128xf32>
      %c3_101 = arith.constant 3 : index
      %c0_102 = arith.constant 0 : index
      %c0_103 = arith.constant 0 : index
      %433 = vector.load %arg11[%c3_101, %c0_102, %c0_103] : memref<22x35x128xf32, #tpu.memory_space<vmem>>, vector<16x16x128xf32>
      tpu.vector_store %arg11[%c3_101, %c0_102, %c0_103], %432 {strides = array<i32>} : memref<22x35x128xf32, #tpu.memory_space<vmem>>, vector<16x16x128xf32>,
      %cst_104 = arith.constant 0.000000e+00 : f32
      %434 = vector.broadcast %cst_104 : f32 to vector<16x3x128xf32>
      %c3_105 = arith.constant 3 : index
      %c32_106 = arith.constant 32 : index
      %c0_107 = arith.constant 0 : index
      %435 = vector.load %arg11[%c3_105, %c32_106, %c0_107] : memref<22x35x128xf32, #tpu.memory_space<vmem>>, vector<16x3x128xf32>
      tpu.vector_store %arg11[%c3_105, %c32_106, %c0_107], %434 {strides = array<i32>} : memref<22x35x128xf32, #tpu.memory_space<vmem>>, vector<16x3x128xf32>,
      %c0_108 = arith.constant 0 : index
      %c0_109 = arith.constant 0 : index
      %c0_110 = arith.constant 0 : index
      %c0_111 = arith.constant 0 : index
      %436 = vector.load %arg2[%c0_108, %c0_109, %c0_110, %c0_111] : memref<1x16x16x128xf32, #tpu.memory_space<vmem>>, vector<1x16x16x128xf32>
      %437 = vector.shape_cast %436 : vector<1x16x16x128xf32> to vector<16x16x128xf32>
      %c3_112 = arith.constant 3 : index
      %c16_113 = arith.constant 16 : index
      %c0_114 = arith.constant 0 : index
      %438 = vector.load %arg11[%c3_112, %c16_113, %c0_114] : memref<22x35x128xf32, #tpu.memory_space<vmem>>, vector<16x16x128xf32>
      tpu.vector_store %arg11[%c3_112, %c16_113, %c0_114], %437 {strides = array<i32>} : memref<22x35x128xf32, #tpu.memory_space<vmem>>, vector<16x16x128xf32>,
    } else {
    }
    %c8_i32 = arith.constant 8 : i32
    %3 = arith.muli %arg1, %c8_i32 : i32
    %4 = tpu.assume_multiple %3, 8 : i32
    %cst = arith.constant 0.000000e+00 : f32
    %5 = vector.broadcast %cst : f32 to vector<8x16x128xf32>
    %6 = arith.index_cast %4 : i32 to index
    %c13 = arith.constant 13 : index
    %c0 = arith.constant 0 : index
    %7 = vector.load %arg11[%6, %c13, %c0] : memref<22x35x128xf32, #tpu.memory_space<vmem>>, vector<14x16x128xf32>
    %c0_1 = arith.constant 0 : index
    %c0_2 = arith.constant 0 : index
    %8 = vector.load %arg4[%c0_1, %c0_2] : memref<49x128xf32, #tpu.memory_space<vmem>>, vector<1x128xf32>
    %9 = vector.shape_cast %8 : vector<1x128xf32> to vector<128xf32>
    %10 = vector.extract_strided_slice %7 {offsets = [0, 0, 0], sizes = [8, 16, 128], strides = [1, 1, 1]} : vector<14x16x128xf32> to vector<8x16x128xf32>
    %11 = vector.shape_cast %9 : vector<128xf32> to vector<1x1x128xf32>
    %12 = vector.broadcast %11 : vector<1x1x128xf32> to vector<8x16x128xf32>
    %13 = arith.mulf %10, %12 : vector<8x16x128xf32>
    %14 = arith.addf %5, %13 : vector<8x16x128xf32>
    %c7 = arith.constant 7 : index
    %c0_3 = arith.constant 0 : index
    %15 = vector.load %arg4[%c7, %c0_3] : memref<49x128xf32, #tpu.memory_space<vmem>>, vector<1x128xf32>
    %16 = vector.shape_cast %15 : vector<1x128xf32> to vector<128xf32>
    %17 = vector.extract_strided_slice %7 {offsets = [1, 0, 0], sizes = [8, 16, 128], strides = [1, 1, 1]} : vector<14x16x128xf32> to vector<8x16x128xf32>
    %18 = vector.shape_cast %16 : vector<128xf32> to vector<1x1x128xf32>
    %19 = vector.broadcast %18 : vector<1x1x128xf32> to vector<8x16x128xf32>
    %20 = arith.mulf %17, %19 : vector<8x16x128xf32>
    %21 = arith.addf %14, %20 : vector<8x16x128xf32>
    %c14 = arith.constant 14 : index
    %c0_4 = arith.constant 0 : index
    %22 = vector.load %arg4[%c14, %c0_4] : memref<49x128xf32, #tpu.memory_space<vmem>>, vector<1x128xf32>
    %23 = vector.shape_cast %22 : vector<1x128xf32> to vector<128xf32>
    %24 = vector.extract_strided_slice %7 {offsets = [2, 0, 0], sizes = [8, 16, 128], strides = [1, 1, 1]} : vector<14x16x128xf32> to vector<8x16x128xf32>
    %25 = vector.shape_cast %23 : vector<128xf32> to vector<1x1x128xf32>
    %26 = vector.broadcast %25 : vector<1x1x128xf32> to vector<8x16x128xf32>
    %27 = arith.mulf %24, %26 : vector<8x16x128xf32>
    %28 = arith.addf %21, %27 : vector<8x16x128xf32>
    %c21 = arith.constant 21 : index
    %c0_5 = arith.constant 0 : index
    %29 = vector.load %arg4[%c21, %c0_5] : memref<49x128xf32, #tpu.memory_space<vmem>>, vector<1x128xf32>
    %30 = vector.shape_cast %29 : vector<1x128xf32> to vector<128xf32>
    %31 = vector.extract_strided_slice %7 {offsets = [3, 0, 0], sizes = [8, 16, 128], strides = [1, 1, 1]} : vector<14x16x128xf32> to vector<8x16x128xf32>
    %32 = vector.shape_cast %30 : vector<128xf32> to vector<1x1x128xf32>
    %33 = vector.broadcast %32 : vector<1x1x128xf32> to vector<8x16x128xf32>
    %34 = arith.mulf %31, %33 : vector<8x16x128xf32>
    %35 = arith.addf %28, %34 : vector<8x16x128xf32>
    %c28 = arith.constant 28 : index
    %c0_6 = arith.constant 0 : index
    %36 = vector.load %arg4[%c28, %c0_6] : memref<49x128xf32, #tpu.memory_space<vmem>>, vector<1x128xf32>
    %37 = vector.shape_cast %36 : vector<1x128xf32> to vector<128xf32>
    %38 = vector.extract_strided_slice %7 {offsets = [4, 0, 0], sizes = [8, 16, 128], strides = [1, 1, 1]} : vector<14x16x128xf32> to vector<8x16x128xf32>
    %39 = vector.shape_cast %37 : vector<128xf32> to vector<1x1x128xf32>
    %40 = vector.broadcast %39 : vector<1x1x128xf32> to vector<8x16x128xf32>
    %41 = arith.mulf %38, %40 : vector<8x16x128xf32>
    %42 = arith.addf %35, %41 : vector<8x16x128xf32>
    %c35 = arith.constant 35 : index
    %c0_7 = arith.constant 0 : index
    %43 = vector.load %arg4[%c35, %c0_7] : memref<49x128xf32, #tpu.memory_space<vmem>>, vector<1x128xf32>
    %44 = vector.shape_cast %43 : vector<1x128xf32> to vector<128xf32>
    %45 = vector.extract_strided_slice %7 {offsets = [5, 0, 0], sizes = [8, 16, 128], strides = [1, 1, 1]} : vector<14x16x128xf32> to vector<8x16x128xf32>
    %46 = vector.shape_cast %44 : vector<128xf32> to vector<1x1x128xf32>
    %47 = vector.broadcast %46 : vector<1x1x128xf32> to vector<8x16x128xf32>
    %48 = arith.mulf %45, %47 : vector<8x16x128xf32>
    %49 = arith.addf %42, %48 : vector<8x16x128xf32>
    %c42 = arith.constant 42 : index
    %c0_8 = arith.constant 0 : index
    %50 = vector.load %arg4[%c42, %c0_8] : memref<49x128xf32, #tpu.memory_space<vmem>>, vector<1x128xf32>
    %51 = vector.shape_cast %50 : vector<1x128xf32> to vector<128xf32>
    %52 = vector.extract_strided_slice %7 {offsets = [6, 0, 0], sizes = [8, 16, 128], strides = [1, 1, 1]} : vector<14x16x128xf32> to vector<8x16x128xf32>
    %53 = vector.shape_cast %51 : vector<128xf32> to vector<1x1x128xf32>
    %54 = vector.broadcast %53 : vector<1x1x128xf32> to vector<8x16x128xf32>
    %55 = arith.mulf %52, %54 : vector<8x16x128xf32>
    %56 = arith.addf %49, %55 : vector<8x16x128xf32>
    %57 = arith.index_cast %4 : i32 to index
    %c14_9 = arith.constant 14 : index
    %c0_10 = arith.constant 0 : index
    %58 = vector.load %arg11[%57, %c14_9, %c0_10] : memref<22x35x128xf32, #tpu.memory_space<vmem>>, vector<14x16x128xf32>
    %c1 = arith.constant 1 : index
    %c0_11 = arith.constant 0 : index
    %59 = vector.load %arg4[%c1, %c0_11] : memref<49x128xf32, #tpu.memory_space<vmem>>, vector<1x128xf32>
    %60 = vector.shape_cast %59 : vector<1x128xf32> to vector<128xf32>
    %61 = vector.extract_strided_slice %58 {offsets = [0, 0, 0], sizes = [8, 16, 128], strides = [1, 1, 1]} : vector<14x16x128xf32> to vector<8x16x128xf32>
    %62 = vector.shape_cast %60 : vector<128xf32> to vector<1x1x128xf32>
    %63 = vector.broadcast %62 : vector<1x1x128xf32> to vector<8x16x128xf32>
    %64 = arith.mulf %61, %63 : vector<8x16x128xf32>
    %65 = arith.addf %56, %64 : vector<8x16x128xf32>
    %c8 = arith.constant 8 : index
    %c0_12 = arith.constant 0 : index
    %66 = vector.load %arg4[%c8, %c0_12] : memref<49x128xf32, #tpu.memory_space<vmem>>, vector<1x128xf32>
    %67 = vector.shape_cast %66 : vector<1x128xf32> to vector<128xf32>
    %68 = vector.extract_strided_slice %58 {offsets = [1, 0, 0], sizes = [8, 16, 128], strides = [1, 1, 1]} : vector<14x16x128xf32> to vector<8x16x128xf32>
    %69 = vector.shape_cast %67 : vector<128xf32> to vector<1x1x128xf32>
    %70 = vector.broadcast %69 : vector<1x1x128xf32> to vector<8x16x128xf32>
    %71 = arith.mulf %68, %70 : vector<8x16x128xf32>
    %72 = arith.addf %65, %71 : vector<8x16x128xf32>
    %c15 = arith.constant 15 : index
    %c0_13 = arith.constant 0 : index
    %73 = vector.load %arg4[%c15, %c0_13] : memref<49x128xf32, #tpu.memory_space<vmem>>, vector<1x128xf32>
    %74 = vector.shape_cast %73 : vector<1x128xf32> to vector<128xf32>
    %75 = vector.extract_strided_slice %58 {offsets = [2, 0, 0], sizes = [8, 16, 128], strides = [1, 1, 1]} : vector<14x16x128xf32> to vector<8x16x128xf32>
    %76 = vector.shape_cast %74 : vector<128xf32> to vector<1x1x128xf32>
    %77 = vector.broadcast %76 : vector<1x1x128xf32> to vector<8x16x128xf32>
    %78 = arith.mulf %75, %77 : vector<8x16x128xf32>
    %79 = arith.addf %72, %78 : vector<8x16x128xf32>
    %c22 = arith.constant 22 : index
    %c0_14 = arith.constant 0 : index
    %80 = vector.load %arg4[%c22, %c0_14] : memref<49x128xf32, #tpu.memory_space<vmem>>, vector<1x128xf32>
    %81 = vector.shape_cast %80 : vector<1x128xf32> to vector<128xf32>
    %82 = vector.extract_strided_slice %58 {offsets = [3, 0, 0], sizes = [8, 16, 128], strides = [1, 1, 1]} : vector<14x16x128xf32> to vector<8x16x128xf32>
    %83 = vector.shape_cast %81 : vector<128xf32> to vector<1x1x128xf32>
    %84 = vector.broadcast %83 : vector<1x1x128xf32> to vector<8x16x128xf32>
    %85 = arith.mulf %82, %84 : vector<8x16x128xf32>
    %86 = arith.addf %79, %85 : vector<8x16x128xf32>
    %c29 = arith.constant 29 : index
    %c0_15 = arith.constant 0 : index
    %87 = vector.load %arg4[%c29, %c0_15] : memref<49x128xf32, #tpu.memory_space<vmem>>, vector<1x128xf32>
    %88 = vector.shape_cast %87 : vector<1x128xf32> to vector<128xf32>
    %89 = vector.extract_strided_slice %58 {offsets = [4, 0, 0], sizes = [8, 16, 128], strides = [1, 1, 1]} : vector<14x16x128xf32> to vector<8x16x128xf32>
    %90 = vector.shape_cast %88 : vector<128xf32> to vector<1x1x128xf32>
    %91 = vector.broadcast %90 : vector<1x1x128xf32> to vector<8x16x128xf32>
    %92 = arith.mulf %89, %91 : vector<8x16x128xf32>
    %93 = arith.addf %86, %92 : vector<8x16x128xf32>
    %c36 = arith.constant 36 : index
    %c0_16 = arith.constant 0 : index
    %94 = vector.load %arg4[%c36, %c0_16] : memref<49x128xf32, #tpu.memory_space<vmem>>, vector<1x128xf32>
    %95 = vector.shape_cast %94 : vector<1x128xf32> to vector<128xf32>
    %96 = vector.extract_strided_slice %58 {offsets = [5, 0, 0], sizes = [8, 16, 128], strides = [1, 1, 1]} : vector<14x16x128xf32> to vector<8x16x128xf32>
    %97 = vector.shape_cast %95 : vector<128xf32> to vector<1x1x128xf32>
    %98 = vector.broadcast %97 : vector<1x1x128xf32> to vector<8x16x128xf32>
    %99 = arith.mulf %96, %98 : vector<8x16x128xf32>
    %100 = arith.addf %93, %99 : vector<8x16x128xf32>
    %c43 = arith.constant 43 : index
    %c0_17 = arith.constant 0 : index
    %101 = vector.load %arg4[%c43, %c0_17] : memref<49x128xf32, #tpu.memory_space<vmem>>, vector<1x128xf32>
    %102 = vector.shape_cast %101 : vector<1x128xf32> to vector<128xf32>
    %103 = vector.extract_strided_slice %58 {offsets = [6, 0, 0], sizes = [8, 16, 128], strides = [1, 1, 1]} : vector<14x16x128xf32> to vector<8x16x128xf32>
    %104 = vector.shape_cast %102 : vector<128xf32> to vector<1x1x128xf32>
    %105 = vector.broadcast %104 : vector<1x1x128xf32> to vector<8x16x128xf32>
    %106 = arith.mulf %103, %105 : vector<8x16x128xf32>
    %107 = arith.addf %100, %106 : vector<8x16x128xf32>
    %108 = arith.index_cast %4 : i32 to index
    %c15_18 = arith.constant 15 : index
    %c0_19 = arith.constant 0 : index
    %109 = vector.load %arg11[%108, %c15_18, %c0_19] : memref<22x35x128xf32, #tpu.memory_space<vmem>>, vector<14x16x128xf32>
    %c2 = arith.constant 2 : index
    %c0_20 = arith.constant 0 : index
    %110 = vector.load %arg4[%c2, %c0_20] : memref<49x128xf32, #tpu.memory_space<vmem>>, vector<1x128xf32>
    %111 = vector.shape_cast %110 : vector<1x128xf32> to vector<128xf32>
    %112 = vector.extract_strided_slice %109 {offsets = [0, 0, 0], sizes = [8, 16, 128], strides = [1, 1, 1]} : vector<14x16x128xf32> to vector<8x16x128xf32>
    %113 = vector.shape_cast %111 : vector<128xf32> to vector<1x1x128xf32>
    %114 = vector.broadcast %113 : vector<1x1x128xf32> to vector<8x16x128xf32>
    %115 = arith.mulf %112, %114 : vector<8x16x128xf32>
    %116 = arith.addf %107, %115 : vector<8x16x128xf32>
    %c9 = arith.constant 9 : index
    %c0_21 = arith.constant 0 : index
    %117 = vector.load %arg4[%c9, %c0_21] : memref<49x128xf32, #tpu.memory_space<vmem>>, vector<1x128xf32>
    %118 = vector.shape_cast %117 : vector<1x128xf32> to vector<128xf32>
    %119 = vector.extract_strided_slice %109 {offsets = [1, 0, 0], sizes = [8, 16, 128], strides = [1, 1, 1]} : vector<14x16x128xf32> to vector<8x16x128xf32>
    %120 = vector.shape_cast %118 : vector<128xf32> to vector<1x1x128xf32>
    %121 = vector.broadcast %120 : vector<1x1x128xf32> to vector<8x16x128xf32>
    %122 = arith.mulf %119, %121 : vector<8x16x128xf32>
    %123 = arith.addf %116, %122 : vector<8x16x128xf32>
    %c16 = arith.constant 16 : index
    %c0_22 = arith.constant 0 : index
    %124 = vector.load %arg4[%c16, %c0_22] : memref<49x128xf32, #tpu.memory_space<vmem>>, vector<1x128xf32>
    %125 = vector.shape_cast %124 : vector<1x128xf32> to vector<128xf32>
    %126 = vector.extract_strided_slice %109 {offsets = [2, 0, 0], sizes = [8, 16, 128], strides = [1, 1, 1]} : vector<14x16x128xf32> to vector<8x16x128xf32>
    %127 = vector.shape_cast %125 : vector<128xf32> to vector<1x1x128xf32>
    %128 = vector.broadcast %127 : vector<1x1x128xf32> to vector<8x16x128xf32>
    %129 = arith.mulf %126, %128 : vector<8x16x128xf32>
    %130 = arith.addf %123, %129 : vector<8x16x128xf32>
    %c23 = arith.constant 23 : index
    %c0_23 = arith.constant 0 : index
    %131 = vector.load %arg4[%c23, %c0_23] : memref<49x128xf32, #tpu.memory_space<vmem>>, vector<1x128xf32>
    %132 = vector.shape_cast %131 : vector<1x128xf32> to vector<128xf32>
    %133 = vector.extract_strided_slice %109 {offsets = [3, 0, 0], sizes = [8, 16, 128], strides = [1, 1, 1]} : vector<14x16x128xf32> to vector<8x16x128xf32>
    %134 = vector.shape_cast %132 : vector<128xf32> to vector<1x1x128xf32>
    %135 = vector.broadcast %134 : vector<1x1x128xf32> to vector<8x16x128xf32>
    %136 = arith.mulf %133, %135 : vector<8x16x128xf32>
    %137 = arith.addf %130, %136 : vector<8x16x128xf32>
    %c30 = arith.constant 30 : index
    %c0_24 = arith.constant 0 : index
    %138 = vector.load %arg4[%c30, %c0_24] : memref<49x128xf32, #tpu.memory_space<vmem>>, vector<1x128xf32>
    %139 = vector.shape_cast %138 : vector<1x128xf32> to vector<128xf32>
    %140 = vector.extract_strided_slice %109 {offsets = [4, 0, 0], sizes = [8, 16, 128], strides = [1, 1, 1]} : vector<14x16x128xf32> to vector<8x16x128xf32>
    %141 = vector.shape_cast %139 : vector<128xf32> to vector<1x1x128xf32>
    %142 = vector.broadcast %141 : vector<1x1x128xf32> to vector<8x16x128xf32>
    %143 = arith.mulf %140, %142 : vector<8x16x128xf32>
    %144 = arith.addf %137, %143 : vector<8x16x128xf32>
    %c37 = arith.constant 37 : index
    %c0_25 = arith.constant 0 : index
    %145 = vector.load %arg4[%c37, %c0_25] : memref<49x128xf32, #tpu.memory_space<vmem>>, vector<1x128xf32>
    %146 = vector.shape_cast %145 : vector<1x128xf32> to vector<128xf32>
    %147 = vector.extract_strided_slice %109 {offsets = [5, 0, 0], sizes = [8, 16, 128], strides = [1, 1, 1]} : vector<14x16x128xf32> to vector<8x16x128xf32>
    %148 = vector.shape_cast %146 : vector<128xf32> to vector<1x1x128xf32>
    %149 = vector.broadcast %148 : vector<1x1x128xf32> to vector<8x16x128xf32>
    %150 = arith.mulf %147, %149 : vector<8x16x128xf32>
    %151 = arith.addf %144, %150 : vector<8x16x128xf32>
    %c44 = arith.constant 44 : index
    %c0_26 = arith.constant 0 : index
    %152 = vector.load %arg4[%c44, %c0_26] : memref<49x128xf32, #tpu.memory_space<vmem>>, vector<1x128xf32>
    %153 = vector.shape_cast %152 : vector<1x128xf32> to vector<128xf32>
    %154 = vector.extract_strided_slice %109 {offsets = [6, 0, 0], sizes = [8, 16, 128], strides = [1, 1, 1]} : vector<14x16x128xf32> to vector<8x16x128xf32>
    %155 = vector.shape_cast %153 : vector<128xf32> to vector<1x1x128xf32>
    %156 = vector.broadcast %155 : vector<1x1x128xf32> to vector<8x16x128xf32>
    %157 = arith.mulf %154, %156 : vector<8x16x128xf32>
    %158 = arith.addf %151, %157 : vector<8x16x128xf32>
    %159 = arith.index_cast %4 : i32 to index
    %c16_27 = arith.constant 16 : index
    %c0_28 = arith.constant 0 : index
    %160 = vector.load %arg11[%159, %c16_27, %c0_28] : memref<22x35x128xf32, #tpu.memory_space<vmem>>, vector<14x16x128xf32>
    %c3 = arith.constant 3 : index
    %c0_29 = arith.constant 0 : index
    %161 = vector.load %arg4[%c3, %c0_29] : memref<49x128xf32, #tpu.memory_space<vmem>>, vector<1x128xf32>
    %162 = vector.shape_cast %161 : vector<1x128xf32> to vector<128xf32>
    %163 = vector.extract_strided_slice %160 {offsets = [0, 0, 0], sizes = [8, 16, 128], strides = [1, 1, 1]} : vector<14x16x128xf32> to vector<8x16x128xf32>
    %164 = vector.shape_cast %162 : vector<128xf32> to vector<1x1x128xf32>
    %165 = vector.broadcast %164 : vector<1x1x128xf32> to vector<8x16x128xf32>
    %166 = arith.mulf %163, %165 : vector<8x16x128xf32>
    %167 = arith.addf %158, %166 : vector<8x16x128xf32>
    %c10 = arith.constant 10 : index
    %c0_30 = arith.constant 0 : index
    %168 = vector.load %arg4[%c10, %c0_30] : memref<49x128xf32, #tpu.memory_space<vmem>>, vector<1x128xf32>
    %169 = vector.shape_cast %168 : vector<1x128xf32> to vector<128xf32>
    %170 = vector.extract_strided_slice %160 {offsets = [1, 0, 0], sizes = [8, 16, 128], strides = [1, 1, 1]} : vector<14x16x128xf32> to vector<8x16x128xf32>
    %171 = vector.shape_cast %169 : vector<128xf32> to vector<1x1x128xf32>
    %172 = vector.broadcast %171 : vector<1x1x128xf32> to vector<8x16x128xf32>
    %173 = arith.mulf %170, %172 : vector<8x16x128xf32>
    %174 = arith.addf %167, %173 : vector<8x16x128xf32>
    %c17 = arith.constant 17 : index
    %c0_31 = arith.constant 0 : index
    %175 = vector.load %arg4[%c17, %c0_31] : memref<49x128xf32, #tpu.memory_space<vmem>>, vector<1x128xf32>
    %176 = vector.shape_cast %175 : vector<1x128xf32> to vector<128xf32>
    %177 = vector.extract_strided_slice %160 {offsets = [2, 0, 0], sizes = [8, 16, 128], strides = [1, 1, 1]} : vector<14x16x128xf32> to vector<8x16x128xf32>
    %178 = vector.shape_cast %176 : vector<128xf32> to vector<1x1x128xf32>
    %179 = vector.broadcast %178 : vector<1x1x128xf32> to vector<8x16x128xf32>
    %180 = arith.mulf %177, %179 : vector<8x16x128xf32>
    %181 = arith.addf %174, %180 : vector<8x16x128xf32>
    %c24 = arith.constant 24 : index
    %c0_32 = arith.constant 0 : index
    %182 = vector.load %arg4[%c24, %c0_32] : memref<49x128xf32, #tpu.memory_space<vmem>>, vector<1x128xf32>
    %183 = vector.shape_cast %182 : vector<1x128xf32> to vector<128xf32>
    %184 = vector.extract_strided_slice %160 {offsets = [3, 0, 0], sizes = [8, 16, 128], strides = [1, 1, 1]} : vector<14x16x128xf32> to vector<8x16x128xf32>
    %185 = vector.shape_cast %183 : vector<128xf32> to vector<1x1x128xf32>
    %186 = vector.broadcast %185 : vector<1x1x128xf32> to vector<8x16x128xf32>
    %187 = arith.mulf %184, %186 : vector<8x16x128xf32>
    %188 = arith.addf %181, %187 : vector<8x16x128xf32>
    %c31 = arith.constant 31 : index
    %c0_33 = arith.constant 0 : index
    %189 = vector.load %arg4[%c31, %c0_33] : memref<49x128xf32, #tpu.memory_space<vmem>>, vector<1x128xf32>
    %190 = vector.shape_cast %189 : vector<1x128xf32> to vector<128xf32>
    %191 = vector.extract_strided_slice %160 {offsets = [4, 0, 0], sizes = [8, 16, 128], strides = [1, 1, 1]} : vector<14x16x128xf32> to vector<8x16x128xf32>
    %192 = vector.shape_cast %190 : vector<128xf32> to vector<1x1x128xf32>
    %193 = vector.broadcast %192 : vector<1x1x128xf32> to vector<8x16x128xf32>
    %194 = arith.mulf %191, %193 : vector<8x16x128xf32>
    %195 = arith.addf %188, %194 : vector<8x16x128xf32>
    %c38 = arith.constant 38 : index
    %c0_34 = arith.constant 0 : index
    %196 = vector.load %arg4[%c38, %c0_34] : memref<49x128xf32, #tpu.memory_space<vmem>>, vector<1x128xf32>
    %197 = vector.shape_cast %196 : vector<1x128xf32> to vector<128xf32>
    %198 = vector.extract_strided_slice %160 {offsets = [5, 0, 0], sizes = [8, 16, 128], strides = [1, 1, 1]} : vector<14x16x128xf32> to vector<8x16x128xf32>
    %199 = vector.shape_cast %197 : vector<128xf32> to vector<1x1x128xf32>
    %200 = vector.broadcast %199 : vector<1x1x128xf32> to vector<8x16x128xf32>
    %201 = arith.mulf %198, %200 : vector<8x16x128xf32>
    %202 = arith.addf %195, %201 : vector<8x16x128xf32>
    %c45 = arith.constant 45 : index
    %c0_35 = arith.constant 0 : index
    %203 = vector.load %arg4[%c45, %c0_35] : memref<49x128xf32, #tpu.memory_space<vmem>>, vector<1x128xf32>
    %204 = vector.shape_cast %203 : vector<1x128xf32> to vector<128xf32>
    %205 = vector.extract_strided_slice %160 {offsets = [6, 0, 0], sizes = [8, 16, 128], strides = [1, 1, 1]} : vector<14x16x128xf32> to vector<8x16x128xf32>
    %206 = vector.shape_cast %204 : vector<128xf32> to vector<1x1x128xf32>
    %207 = vector.broadcast %206 : vector<1x1x128xf32> to vector<8x16x128xf32>
    %208 = arith.mulf %205, %207 : vector<8x16x128xf32>
    %209 = arith.addf %202, %208 : vector<8x16x128xf32>
    %210 = arith.index_cast %4 : i32 to index
    %c17_36 = arith.constant 17 : index
    %c0_37 = arith.constant 0 : index
    %211 = vector.load %arg11[%210, %c17_36, %c0_37] : memref<22x35x128xf32, #tpu.memory_space<vmem>>, vector<14x16x128xf32>
    %c4 = arith.constant 4 : index
    %c0_38 = arith.constant 0 : index
    %212 = vector.load %arg4[%c4, %c0_38] : memref<49x128xf32, #tpu.memory_space<vmem>>, vector<1x128xf32>
    %213 = vector.shape_cast %212 : vector<1x128xf32> to vector<128xf32>
    %214 = vector.extract_strided_slice %211 {offsets = [0, 0, 0], sizes = [8, 16, 128], strides = [1, 1, 1]} : vector<14x16x128xf32> to vector<8x16x128xf32>
    %215 = vector.shape_cast %213 : vector<128xf32> to vector<1x1x128xf32>
    %216 = vector.broadcast %215 : vector<1x1x128xf32> to vector<8x16x128xf32>
    %217 = arith.mulf %214, %216 : vector<8x16x128xf32>
    %218 = arith.addf %209, %217 : vector<8x16x128xf32>
    %c11 = arith.constant 11 : index
    %c0_39 = arith.constant 0 : index
    %219 = vector.load %arg4[%c11, %c0_39] : memref<49x128xf32, #tpu.memory_space<vmem>>, vector<1x128xf32>
    %220 = vector.shape_cast %219 : vector<1x128xf32> to vector<128xf32>
    %221 = vector.extract_strided_slice %211 {offsets = [1, 0, 0], sizes = [8, 16, 128], strides = [1, 1, 1]} : vector<14x16x128xf32> to vector<8x16x128xf32>
    %222 = vector.shape_cast %220 : vector<128xf32> to vector<1x1x128xf32>
    %223 = vector.broadcast %222 : vector<1x1x128xf32> to vector<8x16x128xf32>
    %224 = arith.mulf %221, %223 : vector<8x16x128xf32>
    %225 = arith.addf %218, %224 : vector<8x16x128xf32>
    %c18 = arith.constant 18 : index
    %c0_40 = arith.constant 0 : index
    %226 = vector.load %arg4[%c18, %c0_40] : memref<49x128xf32, #tpu.memory_space<vmem>>, vector<1x128xf32>
    %227 = vector.shape_cast %226 : vector<1x128xf32> to vector<128xf32>
    %228 = vector.extract_strided_slice %211 {offsets = [2, 0, 0], sizes = [8, 16, 128], strides = [1, 1, 1]} : vector<14x16x128xf32> to vector<8x16x128xf32>
    %229 = vector.shape_cast %227 : vector<128xf32> to vector<1x1x128xf32>
    %230 = vector.broadcast %229 : vector<1x1x128xf32> to vector<8x16x128xf32>
    %231 = arith.mulf %228, %230 : vector<8x16x128xf32>
    %232 = arith.addf %225, %231 : vector<8x16x128xf32>
    %c25 = arith.constant 25 : index
    %c0_41 = arith.constant 0 : index
    %233 = vector.load %arg4[%c25, %c0_41] : memref<49x128xf32, #tpu.memory_space<vmem>>, vector<1x128xf32>
    %234 = vector.shape_cast %233 : vector<1x128xf32> to vector<128xf32>
    %235 = vector.extract_strided_slice %211 {offsets = [3, 0, 0], sizes = [8, 16, 128], strides = [1, 1, 1]} : vector<14x16x128xf32> to vector<8x16x128xf32>
    %236 = vector.shape_cast %234 : vector<128xf32> to vector<1x1x128xf32>
    %237 = vector.broadcast %236 : vector<1x1x128xf32> to vector<8x16x128xf32>
    %238 = arith.mulf %235, %237 : vector<8x16x128xf32>
    %239 = arith.addf %232, %238 : vector<8x16x128xf32>
    %c32 = arith.constant 32 : index
    %c0_42 = arith.constant 0 : index
    %240 = vector.load %arg4[%c32, %c0_42] : memref<49x128xf32, #tpu.memory_space<vmem>>, vector<1x128xf32>
    %241 = vector.shape_cast %240 : vector<1x128xf32> to vector<128xf32>
    %242 = vector.extract_strided_slice %211 {offsets = [4, 0, 0], sizes = [8, 16, 128], strides = [1, 1, 1]} : vector<14x16x128xf32> to vector<8x16x128xf32>
    %243 = vector.shape_cast %241 : vector<128xf32> to vector<1x1x128xf32>
    %244 = vector.broadcast %243 : vector<1x1x128xf32> to vector<8x16x128xf32>
    %245 = arith.mulf %242, %244 : vector<8x16x128xf32>
    %246 = arith.addf %239, %245 : vector<8x16x128xf32>
    %c39 = arith.constant 39 : index
    %c0_43 = arith.constant 0 : index
    %247 = vector.load %arg4[%c39, %c0_43] : memref<49x128xf32, #tpu.memory_space<vmem>>, vector<1x128xf32>
    %248 = vector.shape_cast %247 : vector<1x128xf32> to vector<128xf32>
    %249 = vector.extract_strided_slice %211 {offsets = [5, 0, 0], sizes = [8, 16, 128], strides = [1, 1, 1]} : vector<14x16x128xf32> to vector<8x16x128xf32>
    %250 = vector.shape_cast %248 : vector<128xf32> to vector<1x1x128xf32>
    %251 = vector.broadcast %250 : vector<1x1x128xf32> to vector<8x16x128xf32>
    %252 = arith.mulf %249, %251 : vector<8x16x128xf32>
    %253 = arith.addf %246, %252 : vector<8x16x128xf32>
    %c46 = arith.constant 46 : index
    %c0_44 = arith.constant 0 : index
    %254 = vector.load %arg4[%c46, %c0_44] : memref<49x128xf32, #tpu.memory_space<vmem>>, vector<1x128xf32>
    %255 = vector.shape_cast %254 : vector<1x128xf32> to vector<128xf32>
    %256 = vector.extract_strided_slice %211 {offsets = [6, 0, 0], sizes = [8, 16, 128], strides = [1, 1, 1]} : vector<14x16x128xf32> to vector<8x16x128xf32>
    %257 = vector.shape_cast %255 : vector<128xf32> to vector<1x1x128xf32>
    %258 = vector.broadcast %257 : vector<1x1x128xf32> to vector<8x16x128xf32>
    %259 = arith.mulf %256, %258 : vector<8x16x128xf32>
    %260 = arith.addf %253, %259 : vector<8x16x128xf32>
    %261 = arith.index_cast %4 : i32 to index
    %c18_45 = arith.constant 18 : index
    %c0_46 = arith.constant 0 : index
    %262 = vector.load %arg11[%261, %c18_45, %c0_46] : memref<22x35x128xf32, #tpu.memory_space<vmem>>, vector<14x16x128xf32>
    %c5 = arith.constant 5 : index
    %c0_47 = arith.constant 0 : index
    %263 = vector.load %arg4[%c5, %c0_47] : memref<49x128xf32, #tpu.memory_space<vmem>>, vector<1x128xf32>
    %264 = vector.shape_cast %263 : vector<1x128xf32> to vector<128xf32>
    %265 = vector.extract_strided_slice %262 {offsets = [0, 0, 0], sizes = [8, 16, 128], strides = [1, 1, 1]} : vector<14x16x128xf32> to vector<8x16x128xf32>
    %266 = vector.shape_cast %264 : vector<128xf32> to vector<1x1x128xf32>
    %267 = vector.broadcast %266 : vector<1x1x128xf32> to vector<8x16x128xf32>
    %268 = arith.mulf %265, %267 : vector<8x16x128xf32>
    %269 = arith.addf %260, %268 : vector<8x16x128xf32>
    %c12 = arith.constant 12 : index
    %c0_48 = arith.constant 0 : index
    %270 = vector.load %arg4[%c12, %c0_48] : memref<49x128xf32, #tpu.memory_space<vmem>>, vector<1x128xf32>
    %271 = vector.shape_cast %270 : vector<1x128xf32> to vector<128xf32>
    %272 = vector.extract_strided_slice %262 {offsets = [1, 0, 0], sizes = [8, 16, 128], strides = [1, 1, 1]} : vector<14x16x128xf32> to vector<8x16x128xf32>
    %273 = vector.shape_cast %271 : vector<128xf32> to vector<1x1x128xf32>
    %274 = vector.broadcast %273 : vector<1x1x128xf32> to vector<8x16x128xf32>
    %275 = arith.mulf %272, %274 : vector<8x16x128xf32>
    %276 = arith.addf %269, %275 : vector<8x16x128xf32>
    %c19 = arith.constant 19 : index
    %c0_49 = arith.constant 0 : index
    %277 = vector.load %arg4[%c19, %c0_49] : memref<49x128xf32, #tpu.memory_space<vmem>>, vector<1x128xf32>
    %278 = vector.shape_cast %277 : vector<1x128xf32> to vector<128xf32>
    %279 = vector.extract_strided_slice %262 {offsets = [2, 0, 0], sizes = [8, 16, 128], strides = [1, 1, 1]} : vector<14x16x128xf32> to vector<8x16x128xf32>
    %280 = vector.shape_cast %278 : vector<128xf32> to vector<1x1x128xf32>
    %281 = vector.broadcast %280 : vector<1x1x128xf32> to vector<8x16x128xf32>
    %282 = arith.mulf %279, %281 : vector<8x16x128xf32>
    %283 = arith.addf %276, %282 : vector<8x16x128xf32>
    %c26 = arith.constant 26 : index
    %c0_50 = arith.constant 0 : index
    %284 = vector.load %arg4[%c26, %c0_50] : memref<49x128xf32, #tpu.memory_space<vmem>>, vector<1x128xf32>
    %285 = vector.shape_cast %284 : vector<1x128xf32> to vector<128xf32>
    %286 = vector.extract_strided_slice %262 {offsets = [3, 0, 0], sizes = [8, 16, 128], strides = [1, 1, 1]} : vector<14x16x128xf32> to vector<8x16x128xf32>
    %287 = vector.shape_cast %285 : vector<128xf32> to vector<1x1x128xf32>
    %288 = vector.broadcast %287 : vector<1x1x128xf32> to vector<8x16x128xf32>
    %289 = arith.mulf %286, %288 : vector<8x16x128xf32>
    %290 = arith.addf %283, %289 : vector<8x16x128xf32>
    %c33 = arith.constant 33 : index
    %c0_51 = arith.constant 0 : index
    %291 = vector.load %arg4[%c33, %c0_51] : memref<49x128xf32, #tpu.memory_space<vmem>>, vector<1x128xf32>
    %292 = vector.shape_cast %291 : vector<1x128xf32> to vector<128xf32>
    %293 = vector.extract_strided_slice %262 {offsets = [4, 0, 0], sizes = [8, 16, 128], strides = [1, 1, 1]} : vector<14x16x128xf32> to vector<8x16x128xf32>
    %294 = vector.shape_cast %292 : vector<128xf32> to vector<1x1x128xf32>
    %295 = vector.broadcast %294 : vector<1x1x128xf32> to vector<8x16x128xf32>
    %296 = arith.mulf %293, %295 : vector<8x16x128xf32>
    %297 = arith.addf %290, %296 : vector<8x16x128xf32>
    %c40 = arith.constant 40 : index
    %c0_52 = arith.constant 0 : index
    %298 = vector.load %arg4[%c40, %c0_52] : memref<49x128xf32, #tpu.memory_space<vmem>>, vector<1x128xf32>
    %299 = vector.shape_cast %298 : vector<1x128xf32> to vector<128xf32>
    %300 = vector.extract_strided_slice %262 {offsets = [5, 0, 0], sizes = [8, 16, 128], strides = [1, 1, 1]} : vector<14x16x128xf32> to vector<8x16x128xf32>
    %301 = vector.shape_cast %299 : vector<128xf32> to vector<1x1x128xf32>
    %302 = vector.broadcast %301 : vector<1x1x128xf32> to vector<8x16x128xf32>
    %303 = arith.mulf %300, %302 : vector<8x16x128xf32>
    %304 = arith.addf %297, %303 : vector<8x16x128xf32>
    %c47 = arith.constant 47 : index
    %c0_53 = arith.constant 0 : index
    %305 = vector.load %arg4[%c47, %c0_53] : memref<49x128xf32, #tpu.memory_space<vmem>>, vector<1x128xf32>
    %306 = vector.shape_cast %305 : vector<1x128xf32> to vector<128xf32>
    %307 = vector.extract_strided_slice %262 {offsets = [6, 0, 0], sizes = [8, 16, 128], strides = [1, 1, 1]} : vector<14x16x128xf32> to vector<8x16x128xf32>
    %308 = vector.shape_cast %306 : vector<128xf32> to vector<1x1x128xf32>
    %309 = vector.broadcast %308 : vector<1x1x128xf32> to vector<8x16x128xf32>
    %310 = arith.mulf %307, %309 : vector<8x16x128xf32>
    %311 = arith.addf %304, %310 : vector<8x16x128xf32>
    %312 = arith.index_cast %4 : i32 to index
    %c19_54 = arith.constant 19 : index
    %c0_55 = arith.constant 0 : index
    %313 = vector.load %arg11[%312, %c19_54, %c0_55] : memref<22x35x128xf32, #tpu.memory_space<vmem>>, vector<14x16x128xf32>
    %c6 = arith.constant 6 : index
    %c0_56 = arith.constant 0 : index
    %314 = vector.load %arg4[%c6, %c0_56] : memref<49x128xf32, #tpu.memory_space<vmem>>, vector<1x128xf32>
    %315 = vector.shape_cast %314 : vector<1x128xf32> to vector<128xf32>
    %316 = vector.extract_strided_slice %313 {offsets = [0, 0, 0], sizes = [8, 16, 128], strides = [1, 1, 1]} : vector<14x16x128xf32> to vector<8x16x128xf32>
    %317 = vector.shape_cast %315 : vector<128xf32> to vector<1x1x128xf32>
    %318 = vector.broadcast %317 : vector<1x1x128xf32> to vector<8x16x128xf32>
    %319 = arith.mulf %316, %318 : vector<8x16x128xf32>
    %320 = arith.addf %311, %319 : vector<8x16x128xf32>
    %c13_57 = arith.constant 13 : index
    %c0_58 = arith.constant 0 : index
    %321 = vector.load %arg4[%c13_57, %c0_58] : memref<49x128xf32, #tpu.memory_space<vmem>>, vector<1x128xf32>
    %322 = vector.shape_cast %321 : vector<1x128xf32> to vector<128xf32>
    %323 = vector.extract_strided_slice %313 {offsets = [1, 0, 0], sizes = [8, 16, 128], strides = [1, 1, 1]} : vector<14x16x128xf32> to vector<8x16x128xf32>
    %324 = vector.shape_cast %322 : vector<128xf32> to vector<1x1x128xf32>
    %325 = vector.broadcast %324 : vector<1x1x128xf32> to vector<8x16x128xf32>
    %326 = arith.mulf %323, %325 : vector<8x16x128xf32>
    %327 = arith.addf %320, %326 : vector<8x16x128xf32>
    %c20 = arith.constant 20 : index
    %c0_59 = arith.constant 0 : index
    %328 = vector.load %arg4[%c20, %c0_59] : memref<49x128xf32, #tpu.memory_space<vmem>>, vector<1x128xf32>
    %329 = vector.shape_cast %328 : vector<1x128xf32> to vector<128xf32>
    %330 = vector.extract_strided_slice %313 {offsets = [2, 0, 0], sizes = [8, 16, 128], strides = [1, 1, 1]} : vector<14x16x128xf32> to vector<8x16x128xf32>
    %331 = vector.shape_cast %329 : vector<128xf32> to vector<1x1x128xf32>
    %332 = vector.broadcast %331 : vector<1x1x128xf32> to vector<8x16x128xf32>
    %333 = arith.mulf %330, %332 : vector<8x16x128xf32>
    %334 = arith.addf %327, %333 : vector<8x16x128xf32>
    %c27 = arith.constant 27 : index
    %c0_60 = arith.constant 0 : index
    %335 = vector.load %arg4[%c27, %c0_60] : memref<49x128xf32, #tpu.memory_space<vmem>>, vector<1x128xf32>
    %336 = vector.shape_cast %335 : vector<1x128xf32> to vector<128xf32>
    %337 = vector.extract_strided_slice %313 {offsets = [3, 0, 0], sizes = [8, 16, 128], strides = [1, 1, 1]} : vector<14x16x128xf32> to vector<8x16x128xf32>
    %338 = vector.shape_cast %336 : vector<128xf32> to vector<1x1x128xf32>
    %339 = vector.broadcast %338 : vector<1x1x128xf32> to vector<8x16x128xf32>
    %340 = arith.mulf %337, %339 : vector<8x16x128xf32>
    %341 = arith.addf %334, %340 : vector<8x16x128xf32>
    %c34 = arith.constant 34 : index
    %c0_61 = arith.constant 0 : index
    %342 = vector.load %arg4[%c34, %c0_61] : memref<49x128xf32, #tpu.memory_space<vmem>>, vector<1x128xf32>
    %343 = vector.shape_cast %342 : vector<1x128xf32> to vector<128xf32>
    %344 = vector.extract_strided_slice %313 {offsets = [4, 0, 0], sizes = [8, 16, 128], strides = [1, 1, 1]} : vector<14x16x128xf32> to vector<8x16x128xf32>
    %345 = vector.shape_cast %343 : vector<128xf32> to vector<1x1x128xf32>
    %346 = vector.broadcast %345 : vector<1x1x128xf32> to vector<8x16x128xf32>
    %347 = arith.mulf %344, %346 : vector<8x16x128xf32>
    %348 = arith.addf %341, %347 : vector<8x16x128xf32>
    %c41 = arith.constant 41 : index
    %c0_62 = arith.constant 0 : index
    %349 = vector.load %arg4[%c41, %c0_62] : memref<49x128xf32, #tpu.memory_space<vmem>>, vector<1x128xf32>
    %350 = vector.shape_cast %349 : vector<1x128xf32> to vector<128xf32>
    %351 = vector.extract_strided_slice %313 {offsets = [5, 0, 0], sizes = [8, 16, 128], strides = [1, 1, 1]} : vector<14x16x128xf32> to vector<8x16x128xf32>
    %352 = vector.shape_cast %350 : vector<128xf32> to vector<1x1x128xf32>
    %353 = vector.broadcast %352 : vector<1x1x128xf32> to vector<8x16x128xf32>
    %354 = arith.mulf %351, %353 : vector<8x16x128xf32>
    %355 = arith.addf %348, %354 : vector<8x16x128xf32>
    %c48 = arith.constant 48 : index
    %c0_63 = arith.constant 0 : index
    %356 = vector.load %arg4[%c48, %c0_63] : memref<49x128xf32, #tpu.memory_space<vmem>>, vector<1x128xf32>
    %357 = vector.shape_cast %356 : vector<1x128xf32> to vector<128xf32>
    %358 = vector.extract_strided_slice %313 {offsets = [6, 0, 0], sizes = [8, 16, 128], strides = [1, 1, 1]} : vector<14x16x128xf32> to vector<8x16x128xf32>
    %359 = vector.shape_cast %357 : vector<128xf32> to vector<1x1x128xf32>
    %360 = vector.broadcast %359 : vector<1x1x128xf32> to vector<8x16x128xf32>
    %361 = arith.mulf %358, %360 : vector<8x16x128xf32>
    %362 = arith.addf %355, %361 : vector<8x16x128xf32>
    %363 = vector.shape_cast %362 : vector<8x16x128xf32> to vector<128x128xf32>
    %c0_64 = arith.constant 0 : index
    %c0_65 = arith.constant 0 : index
    %364 = vector.load %arg5[%c0_64, %c0_65] : memref<1x128xf32, #tpu.memory_space<vmem>>, vector<1x128xf32>
    %365 = vector.broadcast %364 : vector<1x128xf32> to vector<128x128xf32>
    %366 = arith.addf %363, %365 : vector<128x128xf32>
    %cst_66 = arith.constant dense<0.000000e+00> : vector<128xf32>
    %367 = vector.multi_reduction <add>, %366, %cst_66 [1] : vector<128x128xf32> to vector<128xf32>
    %368 = vector.shape_cast %367 : vector<128xf32> to vector<128x1xf32>
    %cst_67 = arith.constant 1.280000e+02 : f32
    %369 = vector.broadcast %cst_67 : f32 to vector<128x1xf32>
    %370 = arith.divf %368, %369 : vector<128x1xf32>
    %371 = vector.broadcast %370 : vector<128x1xf32> to vector<128x128xf32>
    %372 = arith.subf %366, %371 : vector<128x128xf32>
    %373 = arith.mulf %372, %372 : vector<128x128xf32>
    %cst_68 = arith.constant dense<0.000000e+00> : vector<128xf32>
    %374 = vector.multi_reduction <add>, %373, %cst_68 [1] : vector<128x128xf32> to vector<128xf32>
    %375 = vector.shape_cast %374 : vector<128xf32> to vector<128x1xf32>
    %cst_69 = arith.constant 1.280000e+02 : f32
    %376 = vector.broadcast %cst_69 : f32 to vector<128x1xf32>
    %377 = arith.divf %375, %376 : vector<128x1xf32>
    %378 = vector.broadcast %370 : vector<128x1xf32> to vector<128x128xf32>
    %379 = arith.subf %366, %378 : vector<128x128xf32>
    %cst_70 = arith.constant 9.99999974E-6 : f32
    %380 = vector.broadcast %cst_70 : f32 to vector<128x1xf32>
    %381 = arith.addf %377, %380 : vector<128x1xf32>
    %382 = math.rsqrt %381 : vector<128x1xf32>
    %383 = vector.broadcast %382 : vector<128x1xf32> to vector<128x128xf32>
    %384 = arith.mulf %379, %383 : vector<128x128xf32>
    %c0_71 = arith.constant 0 : index
    %c0_72 = arith.constant 0 : index
    %c0_73 = arith.constant 0 : index
    %385 = vector.load %arg3[%c0_71, %c0_72, %c0_73] : memref<1x3x128xf32, #tpu.memory_space<vmem>>, vector<1x3x128xf32>
    %386 = vector.shape_cast %385 : vector<1x3x128xf32> to vector<3x128xf32>
    %387 = vector.extract_strided_slice %386 {offsets = [0, 0], sizes = [1, 128], strides = [1, 1]} : vector<3x128xf32> to vector<1x128xf32>
    %388 = vector.shape_cast %387 : vector<1x128xf32> to vector<128xf32>
    %cst_74 = arith.constant 1.000000e+00 : f32
    %389 = vector.broadcast %cst_74 : f32 to vector<128xf32>
    %390 = arith.addf %389, %388 : vector<128xf32>
    %391 = vector.shape_cast %390 : vector<128xf32> to vector<1x128xf32>
    %392 = vector.broadcast %391 : vector<1x128xf32> to vector<128x128xf32>
    %393 = arith.mulf %392, %384 : vector<128x128xf32>
    %394 = vector.extract_strided_slice %386 {offsets = [1, 0], sizes = [1, 128], strides = [1, 1]} : vector<3x128xf32> to vector<1x128xf32>
    %395 = vector.shape_cast %394 : vector<1x128xf32> to vector<128xf32>
    %396 = vector.shape_cast %395 : vector<128xf32> to vector<1x128xf32>
    %397 = vector.broadcast %396 : vector<1x128xf32> to vector<128x128xf32>
    %398 = arith.addf %393, %397 : vector<128x128xf32>
    %399 = arith.truncf %398 : vector<128x128xf32> to vector<128x128xbf16>
    %c0_75 = arith.constant 0 : index
    %c0_76 = arith.constant 0 : index
    %400 = vector.load %arg6[%c0_75, %c0_76] : memref<128x512xbf16, #tpu.memory_space<vmem>>, vector<128x512xbf16>
    %cst_77 = arith.constant dense<0.000000e+00> : vector<128x512xf32>
    %401 = tpu.matmul %399, %400, %cst_77 {dimension_numbers = #tpu.dot_dimension_numbers<[1], [0], [0], [1], [0, 0, 1, 1], [], []>} : vector<128x128xbf16>, vector<128x512xbf16>, vector<128x512xf32> -> vector<128x512xf32>
    %c0_78 = arith.constant 0 : index
    %c0_79 = arith.constant 0 : index
    %402 = vector.load %arg7[%c0_78, %c0_79] : memref<1x512xf32, #tpu.memory_space<vmem>>, vector<1x512xf32>
    %403 = vector.broadcast %402 : vector<1x512xf32> to vector<128x512xf32>
    %404 = arith.addf %401, %403 : vector<128x512xf32>
    %405 = arith.negf %404 : vector<128x512xf32>
    %406 = math.exp %405 : vector<128x512xf32>
    %cst_80 = arith.constant 1.000000e+00 : f32
    %407 = vector.broadcast %cst_80 : f32 to vector<128x512xf32>
    %408 = arith.addf %407, %406 : vector<128x512xf32>
    %409 = arith.divf %407, %408 : vector<128x512xf32>
    %410 = arith.mulf %404, %409 : vector<128x512xf32>
    %411 = arith.truncf %410 : vector<128x512xf32> to vector<128x512xbf16>
    %c0_81 = arith.constant 0 : index
    %c0_82 = arith.constant 0 : index
    %412 = vector.load %arg8[%c0_81, %c0_82] : memref<512x128xbf16, #tpu.memory_space<vmem>>, vector<512x128xbf16>
    %cst_83 = arith.constant dense<0.000000e+00> : vector<128x128xf32>
    %413 = tpu.matmul %411, %412, %cst_83 {dimension_numbers = #tpu.dot_dimension_numbers<[1], [0], [0], [1], [0, 0, 1, 1], [], []>} : vector<128x512xbf16>, vector<512x128xbf16>, vector<128x128xf32> -> vector<128x128xf32>
    %c0_84 = arith.constant 0 : index
    %c0_85 = arith.constant 0 : index
    %414 = vector.load %arg9[%c0_84, %c0_85] : memref<1x128xf32, #tpu.memory_space<vmem>>, vector<1x128xf32>
    %415 = vector.broadcast %414 : vector<1x128xf32> to vector<128x128xf32>
    %416 = arith.addf %413, %415 : vector<128x128xf32>
    %c0_86 = arith.constant 0 : index
    %417 = arith.index_cast %4 : i32 to index
    %c0_87 = arith.constant 0 : index
    %c0_88 = arith.constant 0 : index
    %418 = vector.load %arg2[%c0_86, %417, %c0_87, %c0_88] : memref<1x16x16x128xf32, #tpu.memory_space<vmem>>, vector<1x8x16x128xf32>
    %419 = vector.shape_cast %418 : vector<1x8x16x128xf32> to vector<128x128xf32>
    %420 = vector.extract_strided_slice %386 {offsets = [2, 0], sizes = [1, 128], strides = [1, 1]} : vector<3x128xf32> to vector<1x128xf32>
    %421 = vector.shape_cast %420 : vector<1x128xf32> to vector<128xf32>
    %422 = vector.shape_cast %421 : vector<128xf32> to vector<1x128xf32>
    %423 = vector.broadcast %422 : vector<1x128xf32> to vector<128x128xf32>
    %424 = arith.mulf %416, %423 : vector<128x128xf32>
    %425 = arith.addf %424, %419 : vector<128x128xf32>
    %426 = vector.shape_cast %425 : vector<128x128xf32> to vector<1x128x128xf32>
    %c0_89 = arith.constant 0 : index
    %c0_90 = arith.constant 0 : index
    %c0_91 = arith.constant 0 : index
    %427 = vector.load %arg10[%c0_89, %c0_90, %c0_91] : memref<1x128x128xf32, #tpu.memory_space<vmem>>, vector<1x128x128xf32>
    tpu.vector_store %arg10[%c0_89, %c0_90, %c0_91], %426 {strides = array<i32>} : memref<1x128x128xf32, #tpu.memory_space<vmem>>, vector<1x128x128xf32>,
    return
  }
  func.func @transform_0(%arg0: i32, %arg1: i32) -> (i32, i32, i32, i32) {
    %c0_i32 = arith.constant 0 : i32
    %c0_i32_0 = arith.constant 0 : i32
    %c0_i32_1 = arith.constant 0 : i32
    %c0_i32_2 = arith.constant 0 : i32
    return %arg0, %c0_i32, %c0_i32_0, %c0_i32_1 : i32, i32, i32, i32
  }
  func.func @transform_1(%arg0: i32, %arg1: i32) -> (i32, i32, i32) {
    %c0_i32 = arith.constant 0 : i32
    %c0_i32_0 = arith.constant 0 : i32
    %c0_i32_1 = arith.constant 0 : i32
    return %arg0, %c0_i32, %c0_i32_0 : i32, i32, i32
  }
  func.func @transform_2(%arg0: i32, %arg1: i32) -> (i32, i32) {
    %c0_i32 = arith.constant 0 : i32
    %c0_i32_0 = arith.constant 0 : i32
    %c0_i32_1 = arith.constant 0 : i32
    return %c0_i32, %c0_i32_0 : i32, i32
  }
  func.func @transform_3(%arg0: i32, %arg1: i32) -> (i32, i32) {
    %c0_i32 = arith.constant 0 : i32
    %c0_i32_0 = arith.constant 0 : i32
    %c0_i32_1 = arith.constant 0 : i32
    return %c0_i32, %c0_i32_0 : i32, i32
  }
  func.func @transform_4(%arg0: i32, %arg1: i32) -> (i32, i32) {
    %c0_i32 = arith.constant 0 : i32
    %c0_i32_0 = arith.constant 0 : i32
    %c0_i32_1 = arith.constant 0 : i32
    return %c0_i32, %c0_i32_0 : i32, i32
  }
  func.func @transform_5(%arg0: i32, %arg1: i32) -> (i32, i32) {
    %c0_i32 = arith.constant 0 : i32
    %c0_i32_0 = arith.constant 0 : i32
    %c0_i32_1 = arith.constant 0 : i32
    return %c0_i32, %c0_i32_0 : i32, i32
  }
  func.func @transform_6(%arg0: i32, %arg1: i32) -> (i32, i32) {
    %c0_i32 = arith.constant 0 : i32
    %c0_i32_0 = arith.constant 0 : i32
    %c0_i32_1 = arith.constant 0 : i32
    return %c0_i32, %c0_i32_0 : i32, i32
  }
  func.func @transform_7(%arg0: i32, %arg1: i32) -> (i32, i32) {
    %c0_i32 = arith.constant 0 : i32
    %c0_i32_0 = arith.constant 0 : i32
    %c0_i32_1 = arith.constant 0 : i32
    return %c0_i32, %c0_i32_0 : i32, i32
  }
  func.func @transform_8(%arg0: i32, %arg1: i32) -> (i32, i32, i32) {
    %c0_i32 = arith.constant 0 : i32
    %c0_i32_0 = arith.constant 0 : i32
    return %arg0, %arg1, %c0_i32 : i32, i32, i32
  }
}

</mosaic_0001>

<llo_original>
// kernel: tpu_custom_call.1
$region0: #{tpu_custom_call.1}
  #allocation0 [shape = 'u32[]', space=smem, size = 0x4, offset = 0x4, fixed_abs, tag = 'smem constant byte address 0x4 - core index']
  #allocation1 [shape = 'u32[144,128]{1,0:T(1,128)}', space=vmem, size = 0x12000, scoped, tag = 'internal scratch']
  #allocation2 [shape = 'f32[22,35,128]{2,1,0:T(8,128)}', space=vmem, size = 0x6e000, scoped, tag = 'scratch operand']
  %s0 = inlined_call_operand.hbm [shape: f32[2,16,16,128], index: 0, kind: input, shape index: {}]
  %s1 = inlined_call_operand.vmem [shape: f32[2,3,128], index: 1, kind: input, shape index: {}]
  %s2 = inlined_call_operand.hbm [shape: f32[49,128], index: 2, kind: input, shape index: {}]
  %s3 = inlined_call_operand.vmem [shape: f32[1,128], index: 3, kind: input, shape index: {}]
  %s4 = inlined_call_operand.hbm [shape: bf16[128,512], index: 4, kind: input, shape index: {}]
  %s5 = inlined_call_operand.vmem [shape: f32[1,512], index: 5, kind: input, shape index: {}]
  %s6 = inlined_call_operand.hbm [shape: bf16[512,128], index: 6, kind: input, shape index: {}]
  %s7 = inlined_call_operand.vmem [shape: f32[1,128], index: 7, kind: input, shape index: {}]
  %s8 = inlined_call_operand.hbm [shape: f32[2,256,128], index: 8, kind: output, shape index: {}]
  %s9 = sld [smem:[#allocation0]]
  $region85: #{tpu_custom_call.1} parent=0
    _
  %s11 = ssub.s32 1, %s9
  %s12 = scalar_select 0, %s11, %s9
  $region1: #{tpu_custom_call.1} parent=0
    #allocation3 [shape = 'u8[262144]{0}', space=vmem, size = 0x40000, scoped, tag = 'input window, operand 0']
    #allocation4 [shape = 's32[2]{0}', space=sflag, size = 0x8, scoped, tag = 'scoped memory for tpu_custom_call.1']
    #allocation5 [shape = 's32[2]{0}', space=sflag, size = 0x8, scoped, tag = 'scoped memory for tpu_custom_call.1']
    #allocation6 [shape = 'u8[28672]{0}', space=vmem, size = 0x7000, scoped, tag = 'input window, operand 2, single buffered']
    #allocation7 [shape = 's32[1]{0}', space=sflag, size = 0x4, scoped, tag = 'scoped memory for tpu_custom_call.1']
    #allocation8 [shape = 'u8[131072]{0}', space=vmem, size = 0x20000, scoped, tag = 'input window, operand 4, single buffered']
    #allocation9 [shape = 'u8[131072]{0}', space=vmem, size = 0x20000, scoped, tag = 'input window, operand 6, single buffered']
    #allocation10 [shape = 's32[1]{0}', space=sflag, size = 0x4, scoped, tag = 'scoped memory for tpu_custom_call.1']
    #allocation11 [shape = 'u8[131072]{0}', space=vmem, size = 0x20000, scoped, tag = 'output window, operand 0']
    %13 = vsyncpa [#allocation4], 0
    %s14 = scalar_lea.sflag [#allocation4], 1
    %15 = vsyncpa %s14, 0
    %16 = vsyncpa [#allocation7], 0
    %17 = vsyncpa [#allocation10], 0
    %18 = vsyncpa [#allocation5], 0
    %s19 = scalar_lea.sflag [#allocation5], 1
    %20 = vsyncpa %s19, 0
    loop: start=0, step=1, limit=6
    $region2: #{tpu_custom_call.1} parent=1 // loop_pre_header
      _
    $region3: #{tpu_custom_call.1} parent=1 // loop_header
      %s22 = sphi 0, %s26
      %p23 = scmp.ge.s32.totalorder %s22, 6
      %s29 = sphi 0, %s41
      %s30 = sphi 0, %s37
      %s31 = sphi 0, %s29
      %s32 = sphi 0, %s30
      %s33 = sphi 0, %s31
      %s34 = sphi 0, %s32
      %s44 = sphi 0, %s46
      %s47 = sphi 0, %s44
      %s48 = sphi 0, %s47
      %s64 = sphi 0, %s48
      %s70 = sphi 0, %s72
      %s73 = sphi 0, %s70
      %s74 = sphi 0, %s73
      %s90 = sphi 0, %s74
      %s94 = sphi 0, %s94
      %s96 = sphi 0, %s94
      %s97 = sphi 0, %s96
      %s111 = sphi 0, %s97
      %s115 = sphi 0, %s115
      %s117 = sphi 0, %s115
      %s118 = sphi 0, %s117
      %s132 = sphi 0, %s118
      %s136 = sphi 0, %s136
      %s138 = sphi 0, %s136
      %s139 = sphi 0, %s138
      %s153 = sphi 0, %s139
      %s157 = sphi 0, %s157
      %s159 = sphi 0, %s157
      %s160 = sphi 0, %s159
      %s174 = sphi 0, %s160
      %s178 = sphi 0, %s178
      %s180 = sphi 0, %s178
      %s181 = sphi 0, %s180
      %s195 = sphi 0, %s181
      %s199 = sphi 0, %s199
      %s201 = sphi 0, %s199
      %s202 = sphi 0, %s201
      %s216 = sphi 0, %s202
      %s224 = sphi 0, %s226
      %s227 = sphi 0, %s224
      %s228 = sphi 0, %s227
      %s244 = sphi 0, %s228
    $region4: #{tpu_custom_call.1} parent=1 // loop_header_branch
      %25 = sbr.rel (%p23) target = $region8
    $region5: #{tpu_custom_call.1} parent=1 // loop_body
      %s27 = ssub.s32 %s22, 1
      %s28 = ssub.s32 %s22, 2
      %s35 = sadd.s32 1, %s30
      %p36 = scmp.ge.s32.totalorder %s35, 2
      %s37 = scalar_select %p36, 0, %s35
      %s38 = sadd.s32 1, %s29
      %s39 = scalar_select %p36, %s38, %s29
      %p40 = scmp.ge.s32.totalorder %s39, 2
      %s41 = scalar_select %p40, 0, %s39
      %s42 = ssub.s32 %s29, %s41
      %p43 = scmp.eq.s32.totalorder %s42, 0
      %s45 = sadd.s32 %s44, 1
      %s46 = scalar_select %p43, %s44, %s45
      %p49 = pneg %p43
      %p50 = scmp.eq.s32.totalorder %s22, 3
      %p51 = por %p49, %p50
      %p52 = scmp.ne.s32.totalorder %s44, %s47
      %p53 = scmp.eq.s32.totalorder %s22, 0
      %p54 = por %p52, %p53
      %p55 = scmp.ne.s32.totalorder %s44, %s47
      %p56 = scmp.eq.s32.totalorder %s27, 3
      %p57 = por %p55, %p56
      %p58 = scmp.ne.s32.totalorder %s47, %s48
      %p59 = scmp.eq.s32.totalorder %s27, 0
      %p60 = por %p58, %p59
      %p61 = scmp.ne.s32.totalorder %s47, %s48
      %p62 = scmp.eq.s32.totalorder %s28, 3
      %p63 = por %p61, %p62
      %p65 = scmp.ne.s32.totalorder %s48, %s64
      %p66 = scmp.eq.s32.totalorder %s28, 0
      %p67 = por %p65, %p66
      %s68 = ssub.s32 %s29, %s41
      %p69 = scmp.eq.s32.totalorder %s68, 0
      %s71 = sadd.s32 %s70, 1
      %s72 = scalar_select %p69, %s70, %s71
      %p75 = pneg %p69
      %p76 = scmp.eq.s32.totalorder %s22, 3
      %p77 = por %p75, %p76
      %p78 = scmp.ne.s32.totalorder %s70, %s73
      %p79 = scmp.eq.s32.totalorder %s22, 0
      %p80 = por %p78, %p79
      %p81 = scmp.ne.s32.totalorder %s70, %s73
      %p82 = scmp.eq.s32.totalorder %s27, 3
      %p83 = por %p81, %p82
      %p84 = scmp.ne.s32.totalorder %s73, %s74
      %p85 = scmp.eq.s32.totalorder %s27, 0
      %p86 = por %p84, %p85
      %p87 = scmp.ne.s32.totalorder %s73, %s74
      %p88 = scmp.eq.s32.totalorder %s28, 3
      %p89 = por %p87, %p88
      %p91 = scmp.ne.s32.totalorder %s74, %s90
      %p92 = scmp.eq.s32.totalorder %s28, 0
      %p93 = por %p91, %p92
      %s95 = sadd.s32 %s94, 1
      %p98 = scmp.eq.s32.totalorder %s22, 3
      %p99 = scmp.ne.s32.totalorder %s94, %s96
      %p100 = scmp.eq.s32.totalorder %s22, 0
      %p101 = por %p99, %p100
      %p102 = scmp.ne.s32.totalorder %s94, %s96
      %p103 = scmp.eq.s32.totalorder %s27, 3
      %p104 = por %p102, %p103
      %p105 = scmp.ne.s32.totalorder %s96, %s97
      %p106 = scmp.eq.s32.totalorder %s27, 0
      %p107 = por %p105, %p106
      %p108 = scmp.ne.s32.totalorder %s96, %s97
      %p109 = scmp.eq.s32.totalorder %s28, 3
      %p110 = por %p108, %p109
      %p112 = scmp.ne.s32.totalorder %s97, %s111
      %p113 = scmp.eq.s32.totalorder %s28, 0
      %p114 = por %p112, %p113
      %s116 = sadd.s32 %s115, 1
      %p119 = scmp.eq.s32.totalorder %s22, 3
      %p120 = scmp.ne.s32.totalorder %s115, %s117
      %p121 = scmp.eq.s32.totalorder %s22, 0
      %p122 = por %p120, %p121
      %p123 = scmp.ne.s32.totalorder %s115, %s117
      %p124 = scmp.eq.s32.totalorder %s27, 3
      %p125 = por %p123, %p124
      %p126 = scmp.ne.s32.totalorder %s117, %s118
      %p127 = scmp.eq.s32.totalorder %s27, 0
      %p128 = por %p126, %p127
      %p129 = scmp.ne.s32.totalorder %s117, %s118
      %p130 = scmp.eq.s32.totalorder %s28, 3
      %p131 = por %p129, %p130
      %p133 = scmp.ne.s32.totalorder %s118, %s132
      %p134 = scmp.eq.s32.totalorder %s28, 0
      %p135 = por %p133, %p134
      %s137 = sadd.s32 %s136, 1
      %p140 = scmp.eq.s32.totalorder %s22, 3
      %p141 = scmp.ne.s32.totalorder %s136, %s138
      %p142 = scmp.eq.s32.totalorder %s22, 0
      %p143 = por %p141, %p142
      %p144 = scmp.ne.s32.totalorder %s136, %s138
      %p145 = scmp.eq.s32.totalorder %s27, 3
      %p146 = por %p144, %p145
      %p147 = scmp.ne.s32.totalorder %s138, %s139
      %p148 = scmp.eq.s32.totalorder %s27, 0
      %p149 = por %p147, %p148
      %p150 = scmp.ne.s32.totalorder %s138, %s139
      %p151 = scmp.eq.s32.totalorder %s28, 3
      %p152 = por %p150, %p151
      %p154 = scmp.ne.s32.totalorder %s139, %s153
      %p155 = scmp.eq.s32.totalorder %s28, 0
      %p156 = por %p154, %p155
      %s158 = sadd.s32 %s157, 1
      %p161 = scmp.eq.s32.totalorder %s22, 3
      %p162 = scmp.ne.s32.totalorder %s157, %s159
      %p163 = scmp.eq.s32.totalorder %s22, 0
      %p164 = por %p162, %p163
      %p165 = scmp.ne.s32.totalorder %s157, %s159
      %p166 = scmp.eq.s32.totalorder %s27, 3
      %p167 = por %p165, %p166
      %p168 = scmp.ne.s32.totalorder %s159, %s160
      %p169 = scmp.eq.s32.totalorder %s27, 0
      %p170 = por %p168, %p169
      %p171 = scmp.ne.s32.totalorder %s159, %s160
      %p172 = scmp.eq.s32.totalorder %s28, 3
      %p173 = por %p171, %p172
      %p175 = scmp.ne.s32.totalorder %s160, %s174
      %p176 = scmp.eq.s32.totalorder %s28, 0
      %p177 = por %p175, %p176
      %s179 = sadd.s32 %s178, 1
      %p182 = scmp.eq.s32.totalorder %s22, 3
      %p183 = scmp.ne.s32.totalorder %s178, %s180
      %p184 = scmp.eq.s32.totalorder %s22, 0
      %p185 = por %p183, %p184
      %p186 = scmp.ne.s32.totalorder %s178, %s180
      %p187 = scmp.eq.s32.totalorder %s27, 3
      %p188 = por %p186, %p187
      %p189 = scmp.ne.s32.totalorder %s180, %s181
      %p190 = scmp.eq.s32.totalorder %s27, 0
      %p191 = por %p189, %p190
      %p192 = scmp.ne.s32.totalorder %s180, %s181
      %p193 = scmp.eq.s32.totalorder %s28, 3
      %p194 = por %p192, %p193
      %p196 = scmp.ne.s32.totalorder %s181, %s195
      %p197 = scmp.eq.s32.totalorder %s28, 0
      %p198 = por %p196, %p197
      %s200 = sadd.s32 %s199, 1
      %p203 = scmp.eq.s32.totalorder %s22, 3
      %p204 = scmp.ne.s32.totalorder %s199, %s201
      %p205 = scmp.eq.s32.totalorder %s22, 0
      %p206 = por %p204, %p205
      %p207 = scmp.ne.s32.totalorder %s199, %s201
      %p208 = scmp.eq.s32.totalorder %s27, 3
      %p209 = por %p207, %p208
      %p210 = scmp.ne.s32.totalorder %s201, %s202
      %p211 = scmp.eq.s32.totalorder %s27, 0
      %p212 = por %p210, %p211
      %p213 = scmp.ne.s32.totalorder %s201, %s202
      %p214 = scmp.eq.s32.totalorder %s28, 3
      %p215 = por %p213, %p214
      %p217 = scmp.ne.s32.totalorder %s202, %s216
      %p218 = scmp.eq.s32.totalorder %s28, 0
      %p219 = por %p217, %p218
      %s220 = ssub.s32 %s29, %s41
      %s221 = ssub.s32 %s30, %s37
      %s222 = sor.u32 %s220, %s221
      %p223 = scmp.eq.s32.totalorder %s222, 0
      %s225 = sadd.s32 %s224, 1
      %s226 = scalar_select %p223, %s224, %s225
      %p229 = pneg %p223
      %p230 = scmp.eq.s32.totalorder %s22, 3
      %p231 = por %p229, %p230
      %p232 = scmp.ne.s32.totalorder %s224, %s227
      %p233 = scmp.eq.s32.totalorder %s22, 0
      %p234 = por %p232, %p233
      %p235 = scmp.ne.s32.totalorder %s224, %s227
      %p236 = scmp.eq.s32.totalorder %s27, 3
      %p237 = por %p235, %p236
      %p238 = scmp.ne.s32.totalorder %s227, %s228
      %p239 = scmp.eq.s32.totalorder %s27, 0
      %p240 = por %p238, %p239
      %p241 = scmp.ne.s32.totalorder %s227, %s228
      %p242 = scmp.eq.s32.totalorder %s28, 3
      %p243 = por %p241, %p242
      %p245 = scmp.ne.s32.totalorder %s228, %s244
      %p246 = scmp.eq.s32.totalorder %s28, 0
      %p247 = por %p245, %p246
      %p248 = scmp.le.s32.totalorder 1, %s22
      %p249 = scmp.lt.s32.totalorder %s22, 5
      %p250 = pnand %p248, %p249
      %p251 = pneg %p250
      // Predicated region
      $region9: #{tpu_custom_call.1} parent=5 // pred_check
        _
      $region10: #{tpu_custom_call.1} parent=5 // pred_check_branch
        %253 = sbr.rel (%p250) target = $region12
      $region11: #{tpu_custom_call.1} parent=5 // pred_region
        %s254 = ssub.s32 %s22, 1
        // Predicated region
        $region13: #{tpu_custom_call.1} parent=11 // pred_check
          %p255 = pneg %p107
        $region14: #{tpu_custom_call.1} parent=11 // pred_check_branch
          %257 = sbr.rel (%p255) target = $region16
        $region15: #{tpu_custom_call.1} parent=11 // pred_region
          %s259 = ssub.s32 896, 896
          %260 = vsyncadd [#allocation7], %s259
          %s261 = sshll.u32 [#allocation6], 4
          %s262 = int_to_ptr.vmem [resolvable:$true] %s261
          %267 = dma.hbm_to_vmem [thread:$0]  %s2, 896, %s262, [#allocation7], 128, 128, 8
        $region16: #{tpu_custom_call.1} parent=11 // pred_fallthru
          _
        // Predicated region
        $region17: #{tpu_custom_call.1} parent=11 // pred_check
          %p268 = pneg %p128
        $region18: #{tpu_custom_call.1} parent=11 // pred_check_branch
          %270 = sbr.rel (%p268) target = $region20
        $region19: #{tpu_custom_call.1} parent=11 // pred_region
          _
        $region20: #{tpu_custom_call.1} parent=11 // pred_fallthru
          _
        // Predicated region
        $region21: #{tpu_custom_call.1} parent=11 // pred_check
          %p271 = pneg %p149
        $region22: #{tpu_custom_call.1} parent=11 // pred_check_branch
          %273 = sbr.rel (%p271) target = $region24
        $region23: #{tpu_custom_call.1} parent=11 // pred_region
          %s275 = ssub.s32 4096, 4096
          %276 = vsyncadd [#allocation7], %s275
          %s277 = sshll.u32 [#allocation8], 4
          %s278 = int_to_ptr.vmem [resolvable:$true] %s277
          %283 = dma.hbm_to_vmem [thread:$0]  %s4, 4096, %s278, [#allocation7], 256, 256, 16
        $region24: #{tpu_custom_call.1} parent=11 // pred_fallthru
          _
        // Predicated region
        $region25: #{tpu_custom_call.1} parent=11 // pred_check
          %p284 = pneg %p170
        $region26: #{tpu_custom_call.1} parent=11 // pred_check_branch
          %286 = sbr.rel (%p284) target = $region28
        $region27: #{tpu_custom_call.1} parent=11 // pred_region
          _
        $region28: #{tpu_custom_call.1} parent=11 // pred_fallthru
          _
        // Predicated region
        $region29: #{tpu_custom_call.1} parent=11 // pred_check
          %p287 = pneg %p191
        $region30: #{tpu_custom_call.1} parent=11 // pred_check_branch
          %289 = sbr.rel (%p287) target = $region32
        $region31: #{tpu_custom_call.1} parent=11 // pred_region
          %s291 = ssub.s32 4096, 4096
          %292 = vsyncadd [#allocation10], %s291
          %s293 = sshll.u32 [#allocation9], 4
          %s294 = int_to_ptr.vmem [resolvable:$true] %s293
          %299 = dma.hbm_to_vmem [thread:$0]  %s6, 4096, %s294, [#allocation10], 64, 64, 4
        $region32: #{tpu_custom_call.1} parent=11 // pred_fallthru
          _
        // Predicated region
        $region33: #{tpu_custom_call.1} parent=11 // pred_check
          %p300 = pneg %p212
        $region34: #{tpu_custom_call.1} parent=11 // pred_check_branch
          %302 = sbr.rel (%p300) target = $region36
        $region35: #{tpu_custom_call.1} parent=11 // pred_region
          _
        $region36: #{tpu_custom_call.1} parent=11 // pred_fallthru
          _
      $region12: #{tpu_custom_call.1} parent=5 // pred_fallthru
        _
      %p303 = scmp.lt.s32.totalorder %s22, 4
      // Predicated region
      $region37: #{tpu_custom_call.1} parent=5 // pred_check
        %p304 = pneg %p303
      $region38: #{tpu_custom_call.1} parent=5 // pred_check_branch
        %306 = sbr.rel (%p304) target = $region40
      $region39: #{tpu_custom_call.1} parent=5 // pred_region
        // Predicated region
        $region41: #{tpu_custom_call.1} parent=39 // pred_check
          %p307 = pneg %p54
        $region42: #{tpu_custom_call.1} parent=39 // pred_check_branch
          %309 = sbr.rel (%p307) target = $region44
        $region43: #{tpu_custom_call.1} parent=39 // pred_region
          %s310 = sand.u32 %s44, 1
          %s311 = scalar_lea.sflag [#allocation4], %s310
          %s312 = sand.u32 %s44, 1
          %s313 = smul.addr %s312, 256
          %s314 = scalar_lea.vmem [#allocation3], %s313
          %s316 = ssub.s32 4096, 4096
          %317 = vsyncadd %s311, %s316
          %s318 = smul.addr %s29, 32
          %s319 = smul.addr %s318, 128
          %s320 = scalar_lea.hbm %s0, %s319
          %s321 = sshll.u32 %s314, 4
          %s322 = int_to_ptr.vmem [resolvable:$true] %s321
          %327 = dma.hbm_to_vmem [thread:$0]  %s320, 4096, %s322, %s311, 128, 128, 8
        $region44: #{tpu_custom_call.1} parent=39 // pred_fallthru
          _
        // Predicated region
        $region45: #{tpu_custom_call.1} parent=39 // pred_check
          %p328 = pneg %p80
        $region46: #{tpu_custom_call.1} parent=39 // pred_check_branch
          %330 = sbr.rel (%p328) target = $region48
        $region47: #{tpu_custom_call.1} parent=39 // pred_region
          %p331 = scmp.lt.s32.totalorder %s29, 1
          %s332 = scalar_select %p331, %s29, 1
          %s333 = smul.addr %s332, 4
          %s334 = scalar_lea.vmem %s1, %s333
        $region48: #{tpu_custom_call.1} parent=39 // pred_fallthru
          _
      $region40: #{tpu_custom_call.1} parent=5 // pred_fallthru
        _
      %p335 = scmp.le.s32.totalorder 1, %s22
      %p336 = scmp.lt.s32.totalorder %s22, 5
      %p337 = pnand %p335, %p336
      %p338 = pneg %p337
      // Predicated region
      $region49: #{tpu_custom_call.1} parent=5 // pred_check
        _
      $region50: #{tpu_custom_call.1} parent=5 // pred_check_branch
        %340 = sbr.rel (%p337) target = $region52
      $region51: #{tpu_custom_call.1} parent=5 // pred_region
        %s341 = ssub.s32 %s22, 1
        %s342 = sand.u32 %s47, 1
        %s343 = scalar_lea.sflag [#allocation4], %s342
        %s344 = sand.u32 %s47, 1
        %s345 = smul.addr %s344, 256
        %s346 = scalar_lea.vmem [#allocation3], %s345
        // Predicated region
        $region53: #{tpu_custom_call.1} parent=51 // pred_check
          %p347 = pneg %p60
        $region54: #{tpu_custom_call.1} parent=51 // pred_check_branch
          %349 = sbr.rel (%p347) target = $region56
        $region55: #{tpu_custom_call.1} parent=51 // pred_region
          %350 = dma.done %s343, 4096
        $region56: #{tpu_custom_call.1} parent=51 // pred_fallthru
          _
        // Predicated region
        $region57: #{tpu_custom_call.1} parent=51 // pred_check
          %p351 = pneg %p107
        $region58: #{tpu_custom_call.1} parent=51 // pred_check_branch
          %353 = sbr.rel (%p351) target = $region60
        $region59: #{tpu_custom_call.1} parent=51 // pred_region
          %354 = dma.done [#allocation7], 896
        $region60: #{tpu_custom_call.1} parent=51 // pred_fallthru
          _
        // Predicated region
        $region61: #{tpu_custom_call.1} parent=51 // pred_check
          %p355 = pneg %p149
        $region62: #{tpu_custom_call.1} parent=51 // pred_check_branch
          %357 = sbr.rel (%p355) target = $region64
        $region63: #{tpu_custom_call.1} parent=51 // pred_region
          %358 = dma.done [#allocation7], 4096
        $region64: #{tpu_custom_call.1} parent=51 // pred_fallthru
          _
        // Predicated region
        $region65: #{tpu_custom_call.1} parent=51 // pred_check
          %p359 = pneg %p191
        $region66: #{tpu_custom_call.1} parent=51 // pred_check_branch
          %361 = sbr.rel (%p359) target = $region68
        $region67: #{tpu_custom_call.1} parent=51 // pred_region
          %362 = dma.done [#allocation10], 4096
        $region68: #{tpu_custom_call.1} parent=51 // pred_fallthru
          _
        %s363 = sand.u32 %s47, 1
        %s364 = scalar_lea.sflag [#allocation4], %s363
        %s365 = sand.u32 %s47, 1
        %s366 = smul.addr %s365, 256
        %s367 = scalar_lea.vmem [#allocation3], %s366
        %p368 = pneg %p60
        %p369 = pneg %p57
        %p370 = scmp.lt.s32.totalorder %s31, 1
        %s371 = scalar_select %p370, %s31, 1
        %s372 = smul.addr %s371, 4
        %s373 = scalar_lea.vmem %s1, %s372
        %p374 = pneg %p86
        %p375 = pneg %p83
        %p376 = pneg %p107
        %p377 = pneg %p104
        %p378 = pneg %p128
        %p379 = pneg %p125
        %p380 = pneg %p149
        %p381 = pneg %p146
        %p382 = pneg %p170
        %p383 = pneg %p167
        %p384 = pneg %p191
        %p385 = pneg %p188
        %p386 = pneg %p212
        %p387 = pneg %p209
        %p388 = pneg %p240
        %p389 = pneg %p237
        %s390 = sand.u32 %s227, 1
        %s391 = scalar_lea.sflag [#allocation5], %s390
        %s392 = sand.u32 %s227, 1
        %s393 = smul.addr %s392, 128
        %s394 = scalar_lea.vmem [#allocation11], %s393
        %p395 = scmp.lt.s32.totalorder %s31, 1
        %s396 = scalar_select %p395, %s31, 1
        %s397 = smul.addr %s396, 4
        %s398 = scalar_lea.vmem %s1, %s397
        %s399 = smul.u32 16, %s32
        %p401 = scmp.eq.s32.totalorder %s32, 0
        // Predicated region
        $region69: #{tpu_custom_call.1} parent=51 // pred_check
          %p402 = pneg %p401
        $region70: #{tpu_custom_call.1} parent=51 // pred_check_branch
          %404 = sbr.rel (%p402) target = $region72
        $region71: #{tpu_custom_call.1} parent=51 // pred_region
          %405 = vst [vmem:[#allocation2] sm:$0xff] 0.0
          %406 = vst [vmem:[#allocation2 + $0x8] sm:$0xff] 0.0
          %407 = vst [vmem:[#allocation2 + $0x10] sm:$0xff] 0.0
          %408 = vst [vmem:[#allocation2 + $0x18] sm:$0xff] 0.0
          %409 = vst [vmem:[#allocation2 + $0x20] sm:$0x7] 0.0
          %410 = vst [vmem:[#allocation2 + $0x28] sm:$0xff] 0.0
          %411 = vst [vmem:[#allocation2 + $0x30] sm:$0xff] 0.0
          %412 = vst [vmem:[#allocation2 + $0x38] sm:$0xff] 0.0
          %413 = vst [vmem:[#allocation2 + $0x40] sm:$0xff] 0.0
          %414 = vst [vmem:[#allocation2 + $0x48] sm:$0x7] 0.0
          %415 = vst [vmem:[#allocation2 + $0x50] sm:$0xff] 0.0
          %416 = vst [vmem:[#allocation2 + $0x58] sm:$0xff] 0.0
          %417 = vst [vmem:[#allocation2 + $0x60] sm:$0xff] 0.0
          %418 = vst [vmem:[#allocation2 + $0x68] sm:$0xff] 0.0
          %419 = vst [vmem:[#allocation2 + $0x70] sm:$0x7] 0.0
          %s420 = scalar_lea.vmem [#allocation2], 760
          %421 = vst [vmem:[%s420] sm:$0xff] 0.0
          %422 = vst [vmem:[%s420 + $0x8] sm:$0xff] 0.0
          %423 = vst [vmem:[%s420 + $0x10] sm:$0xff] 0.0
          %424 = vst [vmem:[%s420 + $0x18] sm:$0xff] 0.0
          %425 = vst [vmem:[%s420 + $0x20] sm:$0x7] 0.0
          %426 = vst [vmem:[%s420 + $0x28] sm:$0xff] 0.0
          %427 = vst [vmem:[%s420 + $0x30] sm:$0xff] 0.0
          %428 = vst [vmem:[%s420 + $0x38] sm:$0xff] 0.0
          %429 = vst [vmem:[%s420 + $0x40] sm:$0xff] 0.0
          %430 = vst [vmem:[%s420 + $0x48] sm:$0x7] 0.0
          %431 = vst [vmem:[%s420 + $0x50] sm:$0xff] 0.0
          %432 = vst [vmem:[%s420 + $0x58] sm:$0xff] 0.0
          %433 = vst [vmem:[%s420 + $0x60] sm:$0xff] 0.0
          %434 = vst [vmem:[%s420 + $0x68] sm:$0xff] 0.0
          %435 = vst [vmem:[%s420 + $0x70] sm:$0x7] 0.0
          %s436 = scalar_lea.vmem [#allocation2], 120
          %437 = vst [vmem:[%s436] sm:$0xff] 0.0
          %438 = vst [vmem:[%s436 + $0x8] sm:$0xff] 0.0
          %439 = vst [vmem:[%s436 + $0x28] sm:$0xff] 0.0
          %440 = vst [vmem:[%s436 + $0x30] sm:$0xff] 0.0
          %441 = vst [vmem:[%s436 + $0x50] sm:$0xff] 0.0
          %442 = vst [vmem:[%s436 + $0x58] sm:$0xff] 0.0
          %443 = vst [vmem:[%s436 + $0x78] sm:$0xff] 0.0
          %444 = vst [vmem:[%s436 + $0x80] sm:$0xff] 0.0
          %445 = vst [vmem:[%s436 + $0xa0] sm:$0xff] 0.0
          %446 = vst [vmem:[%s436 + $0xa8] sm:$0xff] 0.0
          %447 = vst [vmem:[%s436 + $0xc8] sm:$0xff] 0.0
          %448 = vst [vmem:[%s436 + $0xd0] sm:$0xff] 0.0
          %449 = vst [vmem:[%s436 + $0xf0] sm:$0xff] 0.0
          %450 = vst [vmem:[%s436 + $0xf8] sm:$0xff] 0.0
          %451 = vst [vmem:[%s436 + $0x118] sm:$0xff] 0.0
          %452 = vst [vmem:[%s436 + $0x120] sm:$0xff] 0.0
          %453 = vst [vmem:[%s436 + $0x140] sm:$0xff] 0.0
          %454 = vst [vmem:[%s436 + $0x148] sm:$0xff] 0.0
          %455 = vst [vmem:[%s436 + $0x168] sm:$0xff] 0.0
          %456 = vst [vmem:[%s436 + $0x170] sm:$0xff] 0.0
          %457 = vst [vmem:[%s436 + $0x190] sm:$0xff] 0.0
          %458 = vst [vmem:[%s436 + $0x198] sm:$0xff] 0.0
          %459 = vst [vmem:[%s436 + $0x1b8] sm:$0xff] 0.0
          %460 = vst [vmem:[%s436 + $0x1c0] sm:$0xff] 0.0
          %461 = vst [vmem:[%s436 + $0x1e0] sm:$0xff] 0.0
          %462 = vst [vmem:[%s436 + $0x1e8] sm:$0xff] 0.0
          %463 = vst [vmem:[%s436 + $0x208] sm:$0xff] 0.0
          %464 = vst [vmem:[%s436 + $0x210] sm:$0xff] 0.0
          %465 = vst [vmem:[%s436 + $0x230] sm:$0xff] 0.0
          %466 = vst [vmem:[%s436 + $0x238] sm:$0xff] 0.0
          %467 = vst [vmem:[%s436 + $0x258] sm:$0xff] 0.0
          %468 = vst [vmem:[%s436 + $0x260] sm:$0xff] 0.0
          %469 = vst [vmem:[%s436 + $0x20] sm:$0x7] 0.0
          %470 = vst [vmem:[%s436 + $0x48] sm:$0x7] 0.0
          %471 = vst [vmem:[%s436 + $0x70] sm:$0x7] 0.0
          %472 = vst [vmem:[%s436 + $0x98] sm:$0x7] 0.0
          %473 = vst [vmem:[%s436 + $0xc0] sm:$0x7] 0.0
          %474 = vst [vmem:[%s436 + $0xe8] sm:$0x7] 0.0
          %475 = vst [vmem:[%s436 + $0x110] sm:$0x7] 0.0
          %476 = vst [vmem:[%s436 + $0x138] sm:$0x7] 0.0
          %477 = vst [vmem:[%s436 + $0x160] sm:$0x7] 0.0
          %478 = vst [vmem:[%s436 + $0x188] sm:$0x7] 0.0
          %479 = vst [vmem:[%s436 + $0x1b0] sm:$0x7] 0.0
          %480 = vst [vmem:[%s436 + $0x1d8] sm:$0x7] 0.0
          %481 = vst [vmem:[%s436 + $0x200] sm:$0x7] 0.0
          %482 = vst [vmem:[%s436 + $0x228] sm:$0x7] 0.0
          %483 = vst [vmem:[%s436 + $0x250] sm:$0x7] 0.0
          %484 = vst [vmem:[%s436 + $0x278] sm:$0x7] 0.0
          %v485 = vld [vmem:[%s346] sm:$0xff]
          %v486 = vld [vmem:[%s346 + $0x8] sm:$0xff]
          %v487 = vld [vmem:[%s346 + $0x10] sm:$0xff]
          %v488 = vld [vmem:[%s346 + $0x18] sm:$0xff]
          %v489 = vld [vmem:[%s346 + $0x20] sm:$0xff]
          %v490 = vld [vmem:[%s346 + $0x28] sm:$0xff]
          %v491 = vld [vmem:[%s346 + $0x30] sm:$0xff]
          %v492 = vld [vmem:[%s346 + $0x38] sm:$0xff]
          %v493 = vld [vmem:[%s346 + $0x40] sm:$0xff]
          %v494 = vld [vmem:[%s346 + $0x48] sm:$0xff]
          %v495 = vld [vmem:[%s346 + $0x50] sm:$0xff]
          %v496 = vld [vmem:[%s346 + $0x58] sm:$0xff]
          %v497 = vld [vmem:[%s346 + $0x60] sm:$0xff]
          %v498 = vld [vmem:[%s346 + $0x68] sm:$0xff]
          %v499 = vld [vmem:[%s346 + $0x70] sm:$0xff]
          %v500 = vld [vmem:[%s346 + $0x78] sm:$0xff]
          %v501 = vld [vmem:[%s346 + $0x80] sm:$0xff]
          %v502 = vld [vmem:[%s346 + $0x88] sm:$0xff]
          %v503 = vld [vmem:[%s346 + $0x90] sm:$0xff]
          %v504 = vld [vmem:[%s346 + $0x98] sm:$0xff]
          %v505 = vld [vmem:[%s346 + $0xa0] sm:$0xff]
          %v506 = vld [vmem:[%s346 + $0xa8] sm:$0xff]
          %v507 = vld [vmem:[%s346 + $0xb0] sm:$0xff]
          %v508 = vld [vmem:[%s346 + $0xb8] sm:$0xff]
          %v509 = vld [vmem:[%s346 + $0xc0] sm:$0xff]
          %v510 = vld [vmem:[%s346 + $0xc8] sm:$0xff]
          %v511 = vld [vmem:[%s346 + $0xd0] sm:$0xff]
          %v512 = vld [vmem:[%s346 + $0xd8] sm:$0xff]
          %v513 = vld [vmem:[%s346 + $0xe0] sm:$0xff]
          %v514 = vld [vmem:[%s346 + $0xe8] sm:$0xff]
          %v515 = vld [vmem:[%s346 + $0xf0] sm:$0xff]
          %v516 = vld [vmem:[%s346 + $0xf8] sm:$0xff]
          %517 = vst [vmem:[%s436 + $0x10] sm:$0xff] %v485
          %518 = vst [vmem:[%s436 + $0x18] sm:$0xff] %v486
          %519 = vst [vmem:[%s436 + $0x38] sm:$0xff] %v487
          %520 = vst [vmem:[%s436 + $0x40] sm:$0xff] %v488
          %521 = vst [vmem:[%s436 + $0x60] sm:$0xff] %v489
          %522 = vst [vmem:[%s436 + $0x68] sm:$0xff] %v490
          %523 = vst [vmem:[%s436 + $0x88] sm:$0xff] %v491
          %524 = vst [vmem:[%s436 + $0x90] sm:$0xff] %v492
          %525 = vst [vmem:[%s436 + $0xb0] sm:$0xff] %v493
          %526 = vst [vmem:[%s436 + $0xb8] sm:$0xff] %v494
          %527 = vst [vmem:[%s436 + $0xd8] sm:$0xff] %v495
          %528 = vst [vmem:[%s436 + $0xe0] sm:$0xff] %v496
          %529 = vst [vmem:[%s436 + $0x100] sm:$0xff] %v497
          %530 = vst [vmem:[%s436 + $0x108] sm:$0xff] %v498
          %531 = vst [vmem:[%s436 + $0x128] sm:$0xff] %v499
          %532 = vst [vmem:[%s436 + $0x130] sm:$0xff] %v500
          %533 = vst [vmem:[%s436 + $0x150] sm:$0xff] %v501
          %534 = vst [vmem:[%s436 + $0x158] sm:$0xff] %v502
          %535 = vst [vmem:[%s436 + $0x178] sm:$0xff] %v503
          %536 = vst [vmem:[%s436 + $0x180] sm:$0xff] %v504
          %537 = vst [vmem:[%s436 + $0x1a0] sm:$0xff] %v505
          %538 = vst [vmem:[%s436 + $0x1a8] sm:$0xff] %v506
          %539 = vst [vmem:[%s436 + $0x1c8] sm:$0xff] %v507
          %540 = vst [vmem:[%s436 + $0x1d0] sm:$0xff] %v508
          %541 = vst [vmem:[%s436 + $0x1f0] sm:$0xff] %v509
          %542 = vst [vmem:[%s436 + $0x1f8] sm:$0xff] %v510
          %543 = vst [vmem:[%s436 + $0x218] sm:$0xff] %v511
          %544 = vst [vmem:[%s436 + $0x220] sm:$0xff] %v512
          %545 = vst [vmem:[%s436 + $0x240] sm:$0xff] %v513
          %546 = vst [vmem:[%s436 + $0x248] sm:$0xff] %v514
          %547 = vst [vmem:[%s436 + $0x268] sm:$0xff] %v515
          %548 = vst [vmem:[%s436 + $0x270] sm:$0xff] %v516
        $region72: #{tpu_custom_call.1} parent=51 // pred_fallthru
          _
        %s549 = smul.u32 %s32, 8
        %s550 = smul.u32 %s549, 40
        %s551 = scalar_lea.vmem [#allocation2], %s550
        %v552 = vld [vmem:[%s551 + $0xd] sm:$0xff]
        %v553 = vld [vmem:[%s551 + $0x15] sm:$0xff]
        %v554 = vld [vmem:[%s551 + $0x35] sm:$0xff]
        %v555 = vld [vmem:[%s551 + $0x3d] sm:$0xff]
        %v556 = vld [vmem:[%s551 + $0x5d] sm:$0xff]
        %v557 = vld [vmem:[%s551 + $0x65] sm:$0xff]
        %v558 = vld [vmem:[%s551 + $0x85] sm:$0xff]
        %v559 = vld [vmem:[%s551 + $0x8d] sm:$0xff]
        %v560 = vld [vmem:[%s551 + $0xad] sm:$0xff]
        %v561 = vld [vmem:[%s551 + $0xb5] sm:$0xff]
        %v562 = vld [vmem:[%s551 + $0xd5] sm:$0xff]
        %v563 = vld [vmem:[%s551 + $0xdd] sm:$0xff]
        %v564 = vld [vmem:[%s551 + $0xfd] sm:$0xff]
        %v565 = vld [vmem:[%s551 + $0x105] sm:$0xff]
        %v566 = vld [vmem:[%s551 + $0x125] sm:$0xff]
        %v567 = vld [vmem:[%s551 + $0x12d] sm:$0xff]
        %v568 = vld [vmem:[%s551 + $0x14d] sm:$0xff]
        %v569 = vld [vmem:[%s551 + $0x155] sm:$0xff]
        %v570 = vld [vmem:[%s551 + $0x175] sm:$0xff]
        %v571 = vld [vmem:[%s551 + $0x17d] sm:$0xff]
        %v572 = vld [vmem:[%s551 + $0x19d] sm:$0xff]
        %v573 = vld [vmem:[%s551 + $0x1a5] sm:$0xff]
        %v574 = vld [vmem:[%s551 + $0x1c5] sm:$0xff]
        %v575 = vld [vmem:[%s551 + $0x1cd] sm:$0xff]
        %v576 = vld [vmem:[%s551 + $0x1ed] sm:$0xff]
        %v577 = vld [vmem:[%s551 + $0x1f5] sm:$0xff]
        %v578 = vld [vmem:[%s551 + $0x215] sm:$0xff]
        %v579 = vld [vmem:[%s551 + $0x21d] sm:$0xff]
        %v580 = vld [vmem:[#allocation6] sm:$0x1]
        %v581 = vlaneseq
        %v582 = vshrl.u32 %v581, 7
        %v583 = vsub.s32 0, %v582
        %v584 = vrot.slane %v580, %v583
        %v585 = vmul.f32 %v552, %v584
        %v586 = vmul.f32 %v553, %v584
        %v587 = vmul.f32 %v554, %v584
        %v588 = vmul.f32 %v555, %v584
        %v589 = vmul.f32 %v556, %v584
        %v590 = vmul.f32 %v557, %v584
        %v591 = vmul.f32 %v558, %v584
        %v592 = vmul.f32 %v559, %v584
        %v593 = vmul.f32 %v560, %v584
        %v594 = vmul.f32 %v561, %v584
        %v595 = vmul.f32 %v562, %v584
        %v596 = vmul.f32 %v563, %v584
        %v597 = vmul.f32 %v564, %v584
        %v598 = vmul.f32 %v565, %v584
        %v599 = vmul.f32 %v566, %v584
        %v600 = vmul.f32 %v567, %v584
        %v601 = vadd.f32 %v585, 0.0
        %v602 = vadd.f32 %v586, 0.0
        %v603 = vadd.f32 %v587, 0.0
        %v604 = vadd.f32 %v588, 0.0
        %v605 = vadd.f32 %v589, 0.0
        %v606 = vadd.f32 %v590, 0.0
        %v607 = vadd.f32 %v591, 0.0
        %v608 = vadd.f32 %v592, 0.0
        %v609 = vadd.f32 %v593, 0.0
        %v610 = vadd.f32 %v594, 0.0
        %v611 = vadd.f32 %v595, 0.0
        %v612 = vadd.f32 %v596, 0.0
        %v613 = vadd.f32 %v597, 0.0
        %v614 = vadd.f32 %v598, 0.0
        %v615 = vadd.f32 %v599, 0.0
        %v616 = vadd.f32 %v600, 0.0
        %v617 = vld [vmem:[#allocation6 + $0x7] sm:$0x1]
        %v618 = vlaneseq
        %v619 = vshrl.u32 %v618, 7
        %v620 = vsub.s32 0, %v619
        %v621 = vrot.slane %v617, %v620
        %v622 = vmul.f32 %v554, %v621
        %v623 = vmul.f32 %v555, %v621
        %v624 = vmul.f32 %v556, %v621
        %v625 = vmul.f32 %v557, %v621
        %v626 = vmul.f32 %v558, %v621
        %v627 = vmul.f32 %v559, %v621
        %v628 = vmul.f32 %v560, %v621
        %v629 = vmul.f32 %v561, %v621
        %v630 = vmul.f32 %v562, %v621
        %v631 = vmul.f32 %v563, %v621
        %v632 = vmul.f32 %v564, %v621
        %v633 = vmul.f32 %v565, %v621
        %v634 = vmul.f32 %v566, %v621
        %v635 = vmul.f32 %v567, %v621
        %v636 = vmul.f32 %v568, %v621
        %v637 = vmul.f32 %v569, %v621
        %v638 = vadd.f32 %v601, %v622
        %v639 = vadd.f32 %v602, %v623
        %v640 = vadd.f32 %v603, %v624
        %v641 = vadd.f32 %v604, %v625
        %v642 = vadd.f32 %v605, %v626
        %v643 = vadd.f32 %v606, %v627
        %v644 = vadd.f32 %v607, %v628
        %v645 = vadd.f32 %v608, %v629
        %v646 = vadd.f32 %v609, %v630
        %v647 = vadd.f32 %v610, %v631
        %v648 = vadd.f32 %v611, %v632
        %v649 = vadd.f32 %v612, %v633
        %v650 = vadd.f32 %v613, %v634
        %v651 = vadd.f32 %v614, %v635
        %v652 = vadd.f32 %v615, %v636
        %v653 = vadd.f32 %v616, %v637
        %v654 = vld [vmem:[#allocation6 + $0xe] sm:$0x1]
        %v655 = vlaneseq
        %v656 = vshrl.u32 %v655, 7
        %v657 = vsub.s32 0, %v656
        %v658 = vrot.slane %v654, %v657
        %v659 = vmul.f32 %v556, %v658
        %v660 = vmul.f32 %v557, %v658
        %v661 = vmul.f32 %v558, %v658
        %v662 = vmul.f32 %v559, %v658
        %v663 = vmul.f32 %v560, %v658
        %v664 = vmul.f32 %v561, %v658
        %v665 = vmul.f32 %v562, %v658
        %v666 = vmul.f32 %v563, %v658
        %v667 = vmul.f32 %v564, %v658
        %v668 = vmul.f32 %v565, %v658
        %v669 = vmul.f32 %v566, %v658
        %v670 = vmul.f32 %v567, %v658
        %v671 = vmul.f32 %v568, %v658
        %v672 = vmul.f32 %v569, %v658
        %v673 = vmul.f32 %v570, %v658
        %v674 = vmul.f32 %v571, %v658
        %v675 = vadd.f32 %v638, %v659
        %v676 = vadd.f32 %v639, %v660
        %v677 = vadd.f32 %v640, %v661
        %v678 = vadd.f32 %v641, %v662
        %v679 = vadd.f32 %v642, %v663
        %v680 = vadd.f32 %v643, %v664
        %v681 = vadd.f32 %v644, %v665
        %v682 = vadd.f32 %v645, %v666
        %v683 = vadd.f32 %v646, %v667
        %v684 = vadd.f32 %v647, %v668
        %v685 = vadd.f32 %v648, %v669
        %v686 = vadd.f32 %v649, %v670
        %v687 = vadd.f32 %v650, %v671
        %v688 = vadd.f32 %v651, %v672
        %v689 = vadd.f32 %v652, %v673
        %v690 = vadd.f32 %v653, %v674
        %v691 = vld [vmem:[#allocation6 + $0x15] sm:$0x1]
        %v692 = vlaneseq
        %v693 = vshrl.u32 %v692, 7
        %v694 = vsub.s32 0, %v693
        %v695 = vrot.slane %v691, %v694
        %v696 = vmul.f32 %v558, %v695
        %v697 = vmul.f32 %v559, %v695
        %v698 = vmul.f32 %v560, %v695
        %v699 = vmul.f32 %v561, %v695
        %v700 = vmul.f32 %v562, %v695
        %v701 = vmul.f32 %v563, %v695
        %v702 = vmul.f32 %v564, %v695
        %v703 = vmul.f32 %v565, %v695
        %v704 = vmul.f32 %v566, %v695
        %v705 = vmul.f32 %v567, %v695
        %v706 = vmul.f32 %v568, %v695
        %v707 = vmul.f32 %v569, %v695
        %v708 = vmul.f32 %v570, %v695
        %v709 = vmul.f32 %v571, %v695
        %v710 = vmul.f32 %v572, %v695
        %v711 = vmul.f32 %v573, %v695
        %v712 = vadd.f32 %v675, %v696
        %v713 = vadd.f32 %v676, %v697
        %v714 = vadd.f32 %v677, %v698
        %v715 = vadd.f32 %v678, %v699
        %v716 = vadd.f32 %v679, %v700
        %v717 = vadd.f32 %v680, %v701
        %v718 = vadd.f32 %v681, %v702
        %v719 = vadd.f32 %v682, %v703
        %v720 = vadd.f32 %v683, %v704
        %v721 = vadd.f32 %v684, %v705
        %v722 = vadd.f32 %v685, %v706
        %v723 = vadd.f32 %v686, %v707
        %v724 = vadd.f32 %v687, %v708
        %v725 = vadd.f32 %v688, %v709
        %v726 = vadd.f32 %v689, %v710
        %v727 = vadd.f32 %v690, %v711
        %v728 = vld [vmem:[#allocation6 + $0x1c] sm:$0x1]
        %v729 = vlaneseq
        %v730 = vshrl.u32 %v729, 7
        %v731 = vsub.s32 0, %v730
        %v732 = vrot.slane %v728, %v731
        %v733 = vmul.f32 %v560, %v732
        %v734 = vmul.f32 %v561, %v732
        %v735 = vmul.f32 %v562, %v732
        %v736 = vmul.f32 %v563, %v732
        %v737 = vmul.f32 %v564, %v732
        %v738 = vmul.f32 %v565, %v732
        %v739 = vmul.f32 %v566, %v732
        %v740 = vmul.f32 %v567, %v732
        %v741 = vmul.f32 %v568, %v732
        %v742 = vmul.f32 %v569, %v732
        %v743 = vmul.f32 %v570, %v732
        %v744 = vmul.f32 %v571, %v732
        %v745 = vmul.f32 %v572, %v732
        %v746 = vmul.f32 %v573, %v732
        %v747 = vmul.f32 %v574, %v732
        %v748 = vmul.f32 %v575, %v732
        %v749 = vadd.f32 %v712, %v733
        %v750 = vadd.f32 %v713, %v734
        %v751 = vadd.f32 %v714, %v735
        %v752 = vadd.f32 %v715, %v736
        %v753 = vadd.f32 %v716, %v737
        %v754 = vadd.f32 %v717, %v738
        %v755 = vadd.f32 %v718, %v739
        %v756 = vadd.f32 %v719, %v740
        %v757 = vadd.f32 %v720, %v741
        %v758 = vadd.f32 %v721, %v742
        %v759 = vadd.f32 %v722, %v743
        %v760 = vadd.f32 %v723, %v744
        %v761 = vadd.f32 %v724, %v745
        %v762 = vadd.f32 %v725, %v746
        %v763 = vadd.f32 %v726, %v747
        %v764 = vadd.f32 %v727, %v748
        %v765 = vld [vmem:[#allocation6 + $0x23] sm:$0x1]
        %v766 = vlaneseq
        %v767 = vshrl.u32 %v766, 7
        %v768 = vsub.s32 0, %v767
        %v769 = vrot.slane %v765, %v768
        %v770 = vmul.f32 %v562, %v769
        %v771 = vmul.f32 %v563, %v769
        %v772 = vmul.f32 %v564, %v769
        %v773 = vmul.f32 %v565, %v769
        %v774 = vmul.f32 %v566, %v769
        %v775 = vmul.f32 %v567, %v769
        %v776 = vmul.f32 %v568, %v769
        %v777 = vmul.f32 %v569, %v769
        %v778 = vmul.f32 %v570, %v769
        %v779 = vmul.f32 %v571, %v769
        %v780 = vmul.f32 %v572, %v769
        %v781 = vmul.f32 %v573, %v769
        %v782 = vmul.f32 %v574, %v769
        %v783 = vmul.f32 %v575, %v769
        %v784 = vmul.f32 %v576, %v769
        %v785 = vmul.f32 %v577, %v769
        %v786 = vadd.f32 %v749, %v770
        %v787 = vadd.f32 %v750, %v771
        %v788 = vadd.f32 %v751, %v772
        %v789 = vadd.f32 %v752, %v773
        %v790 = vadd.f32 %v753, %v774
        %v791 = vadd.f32 %v754, %v775
        %v792 = vadd.f32 %v755, %v776
        %v793 = vadd.f32 %v756, %v777
        %v794 = vadd.f32 %v757, %v778
        %v795 = vadd.f32 %v758, %v779
        %v796 = vadd.f32 %v759, %v780
        %v797 = vadd.f32 %v760, %v781
        %v798 = vadd.f32 %v761, %v782
        %v799 = vadd.f32 %v762, %v783
        %v800 = vadd.f32 %v763, %v784
        %v801 = vadd.f32 %v764, %v785
        %v802 = vld [vmem:[#allocation6 + $0x2a] sm:$0x1]
        %v803 = vlaneseq
        %v804 = vshrl.u32 %v803, 7
        %v805 = vsub.s32 0, %v804
        %v806 = vrot.slane %v802, %v805
        %v807 = vmul.f32 %v564, %v806
        %v808 = vmul.f32 %v565, %v806
        %v809 = vmul.f32 %v566, %v806
        %v810 = vmul.f32 %v567, %v806
        %v811 = vmul.f32 %v568, %v806
        %v812 = vmul.f32 %v569, %v806
        %v813 = vmul.f32 %v570, %v806
        %v814 = vmul.f32 %v571, %v806
        %v815 = vmul.f32 %v572, %v806
        %v816 = vmul.f32 %v573, %v806
        %v817 = vmul.f32 %v574, %v806
        %v818 = vmul.f32 %v575, %v806
        %v819 = vmul.f32 %v576, %v806
        %v820 = vmul.f32 %v577, %v806
        %v821 = vmul.f32 %v578, %v806
        %v822 = vmul.f32 %v579, %v806
        %v823 = vadd.f32 %v786, %v807
        %v824 = vadd.f32 %v787, %v808
        %v825 = vadd.f32 %v788, %v809
        %v826 = vadd.f32 %v789, %v810
        %v827 = vadd.f32 %v790, %v811
        %v828 = vadd.f32 %v791, %v812
        %v829 = vadd.f32 %v792, %v813
        %v830 = vadd.f32 %v793, %v814
        %v831 = vadd.f32 %v794, %v815
        %v832 = vadd.f32 %v795, %v816
        %v833 = vadd.f32 %v796, %v817
        %v834 = vadd.f32 %v797, %v818
        %v835 = vadd.f32 %v798, %v819
        %v836 = vadd.f32 %v799, %v820
        %v837 = vadd.f32 %v800, %v821
        %v838 = vadd.f32 %v801, %v822
        %v839 = vld [vmem:[%s551 + $0xe] sm:$0xff]
        %v840 = vld [vmem:[%s551 + $0x16] sm:$0xff]
        %v841 = vld [vmem:[%s551 + $0x36] sm:$0xff]
        %v842 = vld [vmem:[%s551 + $0x3e] sm:$0xff]
        %v843 = vld [vmem:[%s551 + $0x5e] sm:$0xff]
        %v844 = vld [vmem:[%s551 + $0x66] sm:$0xff]
        %v845 = vld [vmem:[%s551 + $0x86] sm:$0xff]
        %v846 = vld [vmem:[%s551 + $0x8e] sm:$0xff]
        %v847 = vld [vmem:[%s551 + $0xae] sm:$0xff]
        %v848 = vld [vmem:[%s551 + $0xb6] sm:$0xff]
        %v849 = vld [vmem:[%s551 + $0xd6] sm:$0xff]
        %v850 = vld [vmem:[%s551 + $0xde] sm:$0xff]
        %v851 = vld [vmem:[%s551 + $0xfe] sm:$0xff]
        %v852 = vld [vmem:[%s551 + $0x106] sm:$0xff]
        %v853 = vld [vmem:[%s551 + $0x126] sm:$0xff]
        %v854 = vld [vmem:[%s551 + $0x12e] sm:$0xff]
        %v855 = vld [vmem:[%s551 + $0x14e] sm:$0xff]
        %v856 = vld [vmem:[%s551 + $0x156] sm:$0xff]
        %v857 = vld [vmem:[%s551 + $0x176] sm:$0xff]
        %v858 = vld [vmem:[%s551 + $0x17e] sm:$0xff]
        %v859 = vld [vmem:[%s551 + $0x19e] sm:$0xff]
        %v860 = vld [vmem:[%s551 + $0x1a6] sm:$0xff]
        %v861 = vld [vmem:[%s551 + $0x1c6] sm:$0xff]
        %v862 = vld [vmem:[%s551 + $0x1ce] sm:$0xff]
        %v863 = vld [vmem:[%s551 + $0x1ee] sm:$0xff]
        %v864 = vld [vmem:[%s551 + $0x1f6] sm:$0xff]
        %v865 = vld [vmem:[%s551 + $0x216] sm:$0xff]
        %v866 = vld [vmem:[%s551 + $0x21e] sm:$0xff]
        %v867 = vld [vmem:[#allocation6 + $0x1] sm:$0x1]
        %v868 = vlaneseq
        %v869 = vshrl.u32 %v868, 7
        %v870 = vsub.s32 0, %v869
        %v871 = vrot.slane %v867, %v870
        %v872 = vmul.f32 %v839, %v871
        %v873 = vmul.f32 %v840, %v871
        %v874 = vmul.f32 %v841, %v871
        %v875 = vmul.f32 %v842, %v871
        %v876 = vmul.f32 %v843, %v871
        %v877 = vmul.f32 %v844, %v871
        %v878 = vmul.f32 %v845, %v871
        %v879 = vmul.f32 %v846, %v871
        %v880 = vmul.f32 %v847, %v871
        %v881 = vmul.f32 %v848, %v871
        %v882 = vmul.f32 %v849, %v871
        %v883 = vmul.f32 %v850, %v871
        %v884 = vmul.f32 %v851, %v871
        %v885 = vmul.f32 %v852, %v871
        %v886 = vmul.f32 %v853, %v871
        %v887 = vmul.f32 %v854, %v871
        %v888 = vadd.f32 %v823, %v872
        %v889 = vadd.f32 %v824, %v873
        %v890 = vadd.f32 %v825, %v874
        %v891 = vadd.f32 %v826, %v875
        %v892 = vadd.f32 %v827, %v876
        %v893 = vadd.f32 %v828, %v877
        %v894 = vadd.f32 %v829, %v878
        %v895 = vadd.f32 %v830, %v879
        %v896 = vadd.f32 %v831, %v880
        %v897 = vadd.f32 %v832, %v881
        %v898 = vadd.f32 %v833, %v882
        %v899 = vadd.f32 %v834, %v883
        %v900 = vadd.f32 %v835, %v884
        %v901 = vadd.f32 %v836, %v885
        %v902 = vadd.f32 %v837, %v886
        %v903 = vadd.f32 %v838, %v887
        %v904 = vld [vmem:[#allocation6 + $0x8] sm:$0x1]
        %v905 = vlaneseq
        %v906 = vshrl.u32 %v905, 7
        %v907 = vsub.s32 0, %v906
        %v908 = vrot.slane %v904, %v907
        %v909 = vmul.f32 %v841, %v908
        %v910 = vmul.f32 %v842, %v908
        %v911 = vmul.f32 %v843, %v908
        %v912 = vmul.f32 %v844, %v908
        %v913 = vmul.f32 %v845, %v908
        %v914 = vmul.f32 %v846, %v908
        %v915 = vmul.f32 %v847, %v908
        %v916 = vmul.f32 %v848, %v908
        %v917 = vmul.f32 %v849, %v908
        %v918 = vmul.f32 %v850, %v908
        %v919 = vmul.f32 %v851, %v908
        %v920 = vmul.f32 %v852, %v908
        %v921 = vmul.f32 %v853, %v908
        %v922 = vmul.f32 %v854, %v908
        %v923 = vmul.f32 %v855, %v908
        %v924 = vmul.f32 %v856, %v908
        %v925 = vadd.f32 %v888, %v909
        %v926 = vadd.f32 %v889, %v910
        %v927 = vadd.f32 %v890, %v911
        %v928 = vadd.f32 %v891, %v912
        %v929 = vadd.f32 %v892, %v913
        %v930 = vadd.f32 %v893, %v914
        %v931 = vadd.f32 %v894, %v915
        %v932 = vadd.f32 %v895, %v916
        %v933 = vadd.f32 %v896, %v917
        %v934 = vadd.f32 %v897, %v918
        %v935 = vadd.f32 %v898, %v919
        %v936 = vadd.f32 %v899, %v920
        %v937 = vadd.f32 %v900, %v921
        %v938 = vadd.f32 %v901, %v922
        %v939 = vadd.f32 %v902, %v923
        %v940 = vadd.f32 %v903, %v924
        %v941 = vld [vmem:[#allocation6 + $0xf] sm:$0x1]
        %v942 = vlaneseq
        %v943 = vshrl.u32 %v942, 7
        %v944 = vsub.s32 0, %v943
        %v945 = vrot.slane %v941, %v944
        %v946 = vmul.f32 %v843, %v945
        %v947 = vmul.f32 %v844, %v945
        %v948 = vmul.f32 %v845, %v945
        %v949 = vmul.f32 %v846, %v945
        %v950 = vmul.f32 %v847, %v945
        %v951 = vmul.f32 %v848, %v945
        %v952 = vmul.f32 %v849, %v945
        %v953 = vmul.f32 %v850, %v945
        %v954 = vmul.f32 %v851, %v945
        %v955 = vmul.f32 %v852, %v945
        %v956 = vmul.f32 %v853, %v945
        %v957 = vmul.f32 %v854, %v945
        %v958 = vmul.f32 %v855, %v945
        %v959 = vmul.f32 %v856, %v945
        %v960 = vmul.f32 %v857, %v945
        %v961 = vmul.f32 %v858, %v945
        %v962 = vadd.f32 %v925, %v946
        %v963 = vadd.f32 %v926, %v947
        %v964 = vadd.f32 %v927, %v948
        %v965 = vadd.f32 %v928, %v949
        %v966 = vadd.f32 %v929, %v950
        %v967 = vadd.f32 %v930, %v951
        %v968 = vadd.f32 %v931, %v952
        %v969 = vadd.f32 %v932, %v953
        %v970 = vadd.f32 %v933, %v954
        %v971 = vadd.f32 %v934, %v955
        %v972 = vadd.f32 %v935, %v956
        %v973 = vadd.f32 %v936, %v957
        %v974 = vadd.f32 %v937, %v958
        %v975 = vadd.f32 %v938, %v959
        %v976 = vadd.f32 %v939, %v960
        %v977 = vadd.f32 %v940, %v961
        %v978 = vld [vmem:[#allocation6 + $0x16] sm:$0x1]
        %v979 = vlaneseq
        %v980 = vshrl.u32 %v979, 7
        %v981 = vsub.s32 0, %v980
        %v982 = vrot.slane %v978, %v981
        %v983 = vmul.f32 %v845, %v982
        %v984 = vmul.f32 %v846, %v982
        %v985 = vmul.f32 %v847, %v982
        %v986 = vmul.f32 %v848, %v982
        %v987 = vmul.f32 %v849, %v982
        %v988 = vmul.f32 %v850, %v982
        %v989 = vmul.f32 %v851, %v982
        %v990 = vmul.f32 %v852, %v982
        %v991 = vmul.f32 %v853, %v982
        %v992 = vmul.f32 %v854, %v982
        %v993 = vmul.f32 %v855, %v982
        %v994 = vmul.f32 %v856, %v982
        %v995 = vmul.f32 %v857, %v982
        %v996 = vmul.f32 %v858, %v982
        %v997 = vmul.f32 %v859, %v982
        %v998 = vmul.f32 %v860, %v982
        %v999 = vadd.f32 %v962, %v983
        %v1000 = vadd.f32 %v963, %v984
        %v1001 = vadd.f32 %v964, %v985
        %v1002 = vadd.f32 %v965, %v986
        %v1003 = vadd.f32 %v966, %v987
        %v1004 = vadd.f32 %v967, %v988
        %v1005 = vadd.f32 %v968, %v989
        %v1006 = vadd.f32 %v969, %v990
        %v1007 = vadd.f32 %v970, %v991
        %v1008 = vadd.f32 %v971, %v992
        %v1009 = vadd.f32 %v972, %v993
        %v1010 = vadd.f32 %v973, %v994
        %v1011 = vadd.f32 %v974, %v995
        %v1012 = vadd.f32 %v975, %v996
        %v1013 = vadd.f32 %v976, %v997
        %v1014 = vadd.f32 %v977, %v998
        %v1015 = vld [vmem:[#allocation6 + $0x1d] sm:$0x1]
        %v1016 = vlaneseq
        %v1017 = vshrl.u32 %v1016, 7
        %v1018 = vsub.s32 0, %v1017
        %v1019 = vrot.slane %v1015, %v1018
        %v1020 = vmul.f32 %v847, %v1019
        %v1021 = vmul.f32 %v848, %v1019
        %v1022 = vmul.f32 %v849, %v1019
        %v1023 = vmul.f32 %v850, %v1019
        %v1024 = vmul.f32 %v851, %v1019
        %v1025 = vmul.f32 %v852, %v1019
        %v1026 = vmul.f32 %v853, %v1019
        %v1027 = vmul.f32 %v854, %v1019
        %v1028 = vmul.f32 %v855, %v1019
        %v1029 = vmul.f32 %v856, %v1019
        %v1030 = vmul.f32 %v857, %v1019
        %v1031 = vmul.f32 %v858, %v1019
        %v1032 = vmul.f32 %v859, %v1019
        %v1033 = vmul.f32 %v860, %v1019
        %v1034 = vmul.f32 %v861, %v1019
        %v1035 = vmul.f32 %v862, %v1019
        %v1036 = vadd.f32 %v999, %v1020
        %v1037 = vadd.f32 %v1000, %v1021
        %v1038 = vadd.f32 %v1001, %v1022
        %v1039 = vadd.f32 %v1002, %v1023
        %v1040 = vadd.f32 %v1003, %v1024
        %v1041 = vadd.f32 %v1004, %v1025
        %v1042 = vadd.f32 %v1005, %v1026
        %v1043 = vadd.f32 %v1006, %v1027
        %v1044 = vadd.f32 %v1007, %v1028
        %v1045 = vadd.f32 %v1008, %v1029
        %v1046 = vadd.f32 %v1009, %v1030
        %v1047 = vadd.f32 %v1010, %v1031
        %v1048 = vadd.f32 %v1011, %v1032
        %v1049 = vadd.f32 %v1012, %v1033
        %v1050 = vadd.f32 %v1013, %v1034
        %v1051 = vadd.f32 %v1014, %v1035
        %v1052 = vld [vmem:[#allocation6 + $0x24] sm:$0x1]
        %v1053 = vlaneseq
        %v1054 = vshrl.u32 %v1053, 7
        %v1055 = vsub.s32 0, %v1054
        %v1056 = vrot.slane %v1052, %v1055
        %v1057 = vmul.f32 %v849, %v1056
        %v1058 = vmul.f32 %v850, %v1056
        %v1059 = vmul.f32 %v851, %v1056
        %v1060 = vmul.f32 %v852, %v1056
        %v1061 = vmul.f32 %v853, %v1056
        %v1062 = vmul.f32 %v854, %v1056
        %v1063 = vmul.f32 %v855, %v1056
        %v1064 = vmul.f32 %v856, %v1056
        %v1065 = vmul.f32 %v857, %v1056
        %v1066 = vmul.f32 %v858, %v1056
        %v1067 = vmul.f32 %v859, %v1056
        %v1068 = vmul.f32 %v860, %v1056
        %v1069 = vmul.f32 %v861, %v1056
        %v1070 = vmul.f32 %v862, %v1056
        %v1071 = vmul.f32 %v863, %v1056
        %v1072 = vmul.f32 %v864, %v1056
        %v1073 = vadd.f32 %v1036, %v1057
        %v1074 = vadd.f32 %v1037, %v1058
        %v1075 = vadd.f32 %v1038, %v1059
        %v1076 = vadd.f32 %v1039, %v1060
        %v1077 = vadd.f32 %v1040, %v1061
        %v1078 = vadd.f32 %v1041, %v1062
        %v1079 = vadd.f32 %v1042, %v1063
        %v1080 = vadd.f32 %v1043, %v1064
        %v1081 = vadd.f32 %v1044, %v1065
        %v1082 = vadd.f32 %v1045, %v1066
        %v1083 = vadd.f32 %v1046, %v1067
        %v1084 = vadd.f32 %v1047, %v1068
        %v1085 = vadd.f32 %v1048, %v1069
        %v1086 = vadd.f32 %v1049, %v1070
        %v1087 = vadd.f32 %v1050, %v1071
        %v1088 = vadd.f32 %v1051, %v1072
        %v1089 = vld [vmem:[#allocation6 + $0x2b] sm:$0x1]
        %v1090 = vlaneseq
        %v1091 = vshrl.u32 %v1090, 7
        %v1092 = vsub.s32 0, %v1091
        %v1093 = vrot.slane %v1089, %v1092
        %v1094 = vmul.f32 %v851, %v1093
        %v1095 = vmul.f32 %v852, %v1093
        %v1096 = vmul.f32 %v853, %v1093
        %v1097 = vmul.f32 %v854, %v1093
        %v1098 = vmul.f32 %v855, %v1093
        %v1099 = vmul.f32 %v856, %v1093
        %v1100 = vmul.f32 %v857, %v1093
        %v1101 = vmul.f32 %v858, %v1093
        %v1102 = vmul.f32 %v859, %v1093
        %v1103 = vmul.f32 %v860, %v1093
        %v1104 = vmul.f32 %v861, %v1093
        %v1105 = vmul.f32 %v862, %v1093
        %v1106 = vmul.f32 %v863, %v1093
        %v1107 = vmul.f32 %v864, %v1093
        %v1108 = vmul.f32 %v865, %v1093
        %v1109 = vmul.f32 %v866, %v1093
        %v1110 = vadd.f32 %v1073, %v1094
        %v1111 = vadd.f32 %v1074, %v1095
        %v1112 = vadd.f32 %v1075, %v1096
        %v1113 = vadd.f32 %v1076, %v1097
        %v1114 = vadd.f32 %v1077, %v1098
        %v1115 = vadd.f32 %v1078, %v1099
        %v1116 = vadd.f32 %v1079, %v1100
        %v1117 = vadd.f32 %v1080, %v1101
        %v1118 = vadd.f32 %v1081, %v1102
        %v1119 = vadd.f32 %v1082, %v1103
        %v1120 = vadd.f32 %v1083, %v1104
        %v1121 = vadd.f32 %v1084, %v1105
        %v1122 = vadd.f32 %v1085, %v1106
        %v1123 = vadd.f32 %v1086, %v1107
        %v1124 = vadd.f32 %v1087, %v1108
        %v1125 = vadd.f32 %v1088, %v1109
        %v1126 = vld [vmem:[%s551 + $0xf] sm:$0xff]
        %v1127 = vld [vmem:[%s551 + $0x17] sm:$0xff]
        %v1128 = vld [vmem:[%s551 + $0x37] sm:$0xff]
        %v1129 = vld [vmem:[%s551 + $0x3f] sm:$0xff]
        %v1130 = vld [vmem:[%s551 + $0x5f] sm:$0xff]
        %v1131 = vld [vmem:[%s551 + $0x67] sm:$0xff]
        %v1132 = vld [vmem:[%s551 + $0x87] sm:$0xff]
        %v1133 = vld [vmem:[%s551 + $0x8f] sm:$0xff]
        %v1134 = vld [vmem:[%s551 + $0xaf] sm:$0xff]
        %v1135 = vld [vmem:[%s551 + $0xb7] sm:$0xff]
        %v1136 = vld [vmem:[%s551 + $0xd7] sm:$0xff]
        %v1137 = vld [vmem:[%s551 + $0xdf] sm:$0xff]
        %v1138 = vld [vmem:[%s551 + $0xff] sm:$0xff]
        %v1139 = vld [vmem:[%s551 + $0x107] sm:$0xff]
        %v1140 = vld [vmem:[%s551 + $0x127] sm:$0xff]
        %v1141 = vld [vmem:[%s551 + $0x12f] sm:$0xff]
        %v1142 = vld [vmem:[%s551 + $0x14f] sm:$0xff]
        %v1143 = vld [vmem:[%s551 + $0x157] sm:$0xff]
        %v1144 = vld [vmem:[%s551 + $0x177] sm:$0xff]
        %v1145 = vld [vmem:[%s551 + $0x17f] sm:$0xff]
        %v1146 = vld [vmem:[%s551 + $0x19f] sm:$0xff]
        %v1147 = vld [vmem:[%s551 + $0x1a7] sm:$0xff]
        %v1148 = vld [vmem:[%s551 + $0x1c7] sm:$0xff]
        %v1149 = vld [vmem:[%s551 + $0x1cf] sm:$0xff]
        %v1150 = vld [vmem:[%s551 + $0x1ef] sm:$0xff]
        %v1151 = vld [vmem:[%s551 + $0x1f7] sm:$0xff]
        %v1152 = vld [vmem:[%s551 + $0x217] sm:$0xff]
        %v1153 = vld [vmem:[%s551 + $0x21f] sm:$0xff]
        %v1154 = vld [vmem:[#allocation6 + $0x2] sm:$0x1]
        %v1155 = vlaneseq
        %v1156 = vshrl.u32 %v1155, 7
        %v1157 = vsub.s32 0, %v1156
        %v1158 = vrot.slane %v1154, %v1157
        %v1159 = vmul.f32 %v1126, %v1158
        %v1160 = vmul.f32 %v1127, %v1158
        %v1161 = vmul.f32 %v1128, %v1158
        %v1162 = vmul.f32 %v1129, %v1158
        %v1163 = vmul.f32 %v1130, %v1158
        %v1164 = vmul.f32 %v1131, %v1158
        %v1165 = vmul.f32 %v1132, %v1158
        %v1166 = vmul.f32 %v1133, %v1158
        %v1167 = vmul.f32 %v1134, %v1158
        %v1168 = vmul.f32 %v1135, %v1158
        %v1169 = vmul.f32 %v1136, %v1158
        %v1170 = vmul.f32 %v1137, %v1158
        %v1171 = vmul.f32 %v1138, %v1158
        %v1172 = vmul.f32 %v1139, %v1158
        %v1173 = vmul.f32 %v1140, %v1158
        %v1174 = vmul.f32 %v1141, %v1158
        %v1175 = vadd.f32 %v1110, %v1159
        %v1176 = vadd.f32 %v1111, %v1160
        %v1177 = vadd.f32 %v1112, %v1161
        %v1178 = vadd.f32 %v1113, %v1162
        %v1179 = vadd.f32 %v1114, %v1163
        %v1180 = vadd.f32 %v1115, %v1164
        %v1181 = vadd.f32 %v1116, %v1165
        %v1182 = vadd.f32 %v1117, %v1166
        %v1183 = vadd.f32 %v1118, %v1167
        %v1184 = vadd.f32 %v1119, %v1168
        %v1185 = vadd.f32 %v1120, %v1169
        %v1186 = vadd.f32 %v1121, %v1170
        %v1187 = vadd.f32 %v1122, %v1171
        %v1188 = vadd.f32 %v1123, %v1172
        %v1189 = vadd.f32 %v1124, %v1173
        %v1190 = vadd.f32 %v1125, %v1174
        %v1191 = vld [vmem:[#allocation6 + $0x9] sm:$0x1]
        %v1192 = vlaneseq
        %v1193 = vshrl.u32 %v1192, 7
        %v1194 = vsub.s32 0, %v1193
        %v1195 = vrot.slane %v1191, %v1194
        %v1196 = vmul.f32 %v1128, %v1195
        %v1197 = vmul.f32 %v1129, %v1195
        %v1198 = vmul.f32 %v1130, %v1195
        %v1199 = vmul.f32 %v1131, %v1195
        %v1200 = vmul.f32 %v1132, %v1195
        %v1201 = vmul.f32 %v1133, %v1195
        %v1202 = vmul.f32 %v1134, %v1195
        %v1203 = vmul.f32 %v1135, %v1195
        %v1204 = vmul.f32 %v1136, %v1195
        %v1205 = vmul.f32 %v1137, %v1195
        %v1206 = vmul.f32 %v1138, %v1195
        %v1207 = vmul.f32 %v1139, %v1195
        %v1208 = vmul.f32 %v1140, %v1195
        %v1209 = vmul.f32 %v1141, %v1195
        %v1210 = vmul.f32 %v1142, %v1195
        %v1211 = vmul.f32 %v1143, %v1195
        %v1212 = vadd.f32 %v1175, %v1196
        %v1213 = vadd.f32 %v1176, %v1197
        %v1214 = vadd.f32 %v1177, %v1198
        %v1215 = vadd.f32 %v1178, %v1199
        %v1216 = vadd.f32 %v1179, %v1200
        %v1217 = vadd.f32 %v1180, %v1201
        %v1218 = vadd.f32 %v1181, %v1202
        %v1219 = vadd.f32 %v1182, %v1203
        %v1220 = vadd.f32 %v1183, %v1204
        %v1221 = vadd.f32 %v1184, %v1205
        %v1222 = vadd.f32 %v1185, %v1206
        %v1223 = vadd.f32 %v1186, %v1207
        %v1224 = vadd.f32 %v1187, %v1208
        %v1225 = vadd.f32 %v1188, %v1209
        %v1226 = vadd.f32 %v1189, %v1210
        %v1227 = vadd.f32 %v1190, %v1211
        %v1228 = vld [vmem:[#allocation6 + $0x10] sm:$0x1]
        %v1229 = vlaneseq
        %v1230 = vshrl.u32 %v1229, 7
        %v1231 = vsub.s32 0, %v1230
        %v1232 = vrot.slane %v1228, %v1231
        %v1233 = vmul.f32 %v1130, %v1232
        %v1234 = vmul.f32 %v1131, %v1232
        %v1235 = vmul.f32 %v1132, %v1232
        %v1236 = vmul.f32 %v1133, %v1232
        %v1237 = vmul.f32 %v1134, %v1232
        %v1238 = vmul.f32 %v1135, %v1232
        %v1239 = vmul.f32 %v1136, %v1232
        %v1240 = vmul.f32 %v1137, %v1232
        %v1241 = vmul.f32 %v1138, %v1232
        %v1242 = vmul.f32 %v1139, %v1232
        %v1243 = vmul.f32 %v1140, %v1232
        %v1244 = vmul.f32 %v1141, %v1232
        %v1245 = vmul.f32 %v1142, %v1232
        %v1246 = vmul.f32 %v1143, %v1232
        %v1247 = vmul.f32 %v1144, %v1232
        %v1248 = vmul.f32 %v1145, %v1232
        %v1249 = vadd.f32 %v1212, %v1233
        %v1250 = vadd.f32 %v1213, %v1234
        %v1251 = vadd.f32 %v1214, %v1235
        %v1252 = vadd.f32 %v1215, %v1236
        %v1253 = vadd.f32 %v1216, %v1237
        %v1254 = vadd.f32 %v1217, %v1238
        %v1255 = vadd.f32 %v1218, %v1239
        %v1256 = vadd.f32 %v1219, %v1240
        %v1257 = vadd.f32 %v1220, %v1241
        %v1258 = vadd.f32 %v1221, %v1242
        %v1259 = vadd.f32 %v1222, %v1243
        %v1260 = vadd.f32 %v1223, %v1244
        %v1261 = vadd.f32 %v1224, %v1245
        %v1262 = vadd.f32 %v1225, %v1246
        %v1263 = vadd.f32 %v1226, %v1247
        %v1264 = vadd.f32 %v1227, %v1248
        %v1265 = vld [vmem:[#allocation6 + $0x17] sm:$0x1]
        %v1266 = vlaneseq
        %v1267 = vshrl.u32 %v1266, 7
        %v1268 = vsub.s32 0, %v1267
        %v1269 = vrot.slane %v1265, %v1268
        %v1270 = vmul.f32 %v1132, %v1269
        %v1271 = vmul.f32 %v1133, %v1269
        %v1272 = vmul.f32 %v1134, %v1269
        %v1273 = vmul.f32 %v1135, %v1269
        %v1274 = vmul.f32 %v1136, %v1269
        %v1275 = vmul.f32 %v1137, %v1269
        %v1276 = vmul.f32 %v1138, %v1269
        %v1277 = vmul.f32 %v1139, %v1269
        %v1278 = vmul.f32 %v1140, %v1269
        %v1279 = vmul.f32 %v1141, %v1269
        %v1280 = vmul.f32 %v1142, %v1269
        %v1281 = vmul.f32 %v1143, %v1269
        %v1282 = vmul.f32 %v1144, %v1269
        %v1283 = vmul.f32 %v1145, %v1269
        %v1284 = vmul.f32 %v1146, %v1269
        %v1285 = vmul.f32 %v1147, %v1269
        %v1286 = vadd.f32 %v1249, %v1270
        %v1287 = vadd.f32 %v1250, %v1271
        %v1288 = vadd.f32 %v1251, %v1272
        %v1289 = vadd.f32 %v1252, %v1273
        %v1290 = vadd.f32 %v1253, %v1274
        %v1291 = vadd.f32 %v1254, %v1275
        %v1292 = vadd.f32 %v1255, %v1276
        %v1293 = vadd.f32 %v1256, %v1277
        %v1294 = vadd.f32 %v1257, %v1278
        %v1295 = vadd.f32 %v1258, %v1279
        %v1296 = vadd.f32 %v1259, %v1280
        %v1297 = vadd.f32 %v1260, %v1281
        %v1298 = vadd.f32 %v1261, %v1282
        %v1299 = vadd.f32 %v1262, %v1283
        %v1300 = vadd.f32 %v1263, %v1284
        %v1301 = vadd.f32 %v1264, %v1285
        %v1302 = vld [vmem:[#allocation6 + $0x1e] sm:$0x1]
        %v1303 = vlaneseq
        %v1304 = vshrl.u32 %v1303, 7
        %v1305 = vsub.s32 0, %v1304
        %v1306 = vrot.slane %v1302, %v1305
        %v1307 = vmul.f32 %v1134, %v1306
        %v1308 = vmul.f32 %v1135, %v1306
        %v1309 = vmul.f32 %v1136, %v1306
        %v1310 = vmul.f32 %v1137, %v1306
        %v1311 = vmul.f32 %v1138, %v1306
        %v1312 = vmul.f32 %v1139, %v1306
        %v1313 = vmul.f32 %v1140, %v1306
        %v1314 = vmul.f32 %v1141, %v1306
        %v1315 = vmul.f32 %v1142, %v1306
        %v1316 = vmul.f32 %v1143, %v1306
        %v1317 = vmul.f32 %v1144, %v1306
        %v1318 = vmul.f32 %v1145, %v1306
        %v1319 = vmul.f32 %v1146, %v1306
        %v1320 = vmul.f32 %v1147, %v1306
        %v1321 = vmul.f32 %v1148, %v1306
        %v1322 = vmul.f32 %v1149, %v1306
        %v1323 = vadd.f32 %v1286, %v1307
        %v1324 = vadd.f32 %v1287, %v1308
        %v1325 = vadd.f32 %v1288, %v1309
        %v1326 = vadd.f32 %v1289, %v1310
        %v1327 = vadd.f32 %v1290, %v1311
        %v1328 = vadd.f32 %v1291, %v1312
        %v1329 = vadd.f32 %v1292, %v1313
        %v1330 = vadd.f32 %v1293, %v1314
        %v1331 = vadd.f32 %v1294, %v1315
        %v1332 = vadd.f32 %v1295, %v1316
        %v1333 = vadd.f32 %v1296, %v1317
        %v1334 = vadd.f32 %v1297, %v1318
        %v1335 = vadd.f32 %v1298, %v1319
        %v1336 = vadd.f32 %v1299, %v1320
        %v1337 = vadd.f32 %v1300, %v1321
        %v1338 = vadd.f32 %v1301, %v1322
        %v1339 = vld [vmem:[#allocation6 + $0x25] sm:$0x1]
        %v1340 = vlaneseq
        %v1341 = vshrl.u32 %v1340, 7
        %v1342 = vsub.s32 0, %v1341
        %v1343 = vrot.slane %v1339, %v1342
        %v1344 = vmul.f32 %v1136, %v1343
        %v1345 = vmul.f32 %v1137, %v1343
        %v1346 = vmul.f32 %v1138, %v1343
        %v1347 = vmul.f32 %v1139, %v1343
        %v1348 = vmul.f32 %v1140, %v1343
        %v1349 = vmul.f32 %v1141, %v1343
        %v1350 = vmul.f32 %v1142, %v1343
        %v1351 = vmul.f32 %v1143, %v1343
        %v1352 = vmul.f32 %v1144, %v1343
        %v1353 = vmul.f32 %v1145, %v1343
        %v1354 = vmul.f32 %v1146, %v1343
        %v1355 = vmul.f32 %v1147, %v1343
        %v1356 = vmul.f32 %v1148, %v1343
        %v1357 = vmul.f32 %v1149, %v1343
        %v1358 = vmul.f32 %v1150, %v1343
        %v1359 = vmul.f32 %v1151, %v1343
        %v1360 = vadd.f32 %v1323, %v1344
        %v1361 = vadd.f32 %v1324, %v1345
        %v1362 = vadd.f32 %v1325, %v1346
        %v1363 = vadd.f32 %v1326, %v1347
        %v1364 = vadd.f32 %v1327, %v1348
        %v1365 = vadd.f32 %v1328, %v1349
        %v1366 = vadd.f32 %v1329, %v1350
        %v1367 = vadd.f32 %v1330, %v1351
        %v1368 = vadd.f32 %v1331, %v1352
        %v1369 = vadd.f32 %v1332, %v1353
        %v1370 = vadd.f32 %v1333, %v1354
        %v1371 = vadd.f32 %v1334, %v1355
        %v1372 = vadd.f32 %v1335, %v1356
        %v1373 = vadd.f32 %v1336, %v1357
        %v1374 = vadd.f32 %v1337, %v1358
        %v1375 = vadd.f32 %v1338, %v1359
        %v1376 = vld [vmem:[#allocation6 + $0x2c] sm:$0x1]
        %v1377 = vlaneseq
        %v1378 = vshrl.u32 %v1377, 7
        %v1379 = vsub.s32 0, %v1378
        %v1380 = vrot.slane %v1376, %v1379
        %v1381 = vmul.f32 %v1138, %v1380
        %v1382 = vmul.f32 %v1139, %v1380
        %v1383 = vmul.f32 %v1140, %v1380
        %v1384 = vmul.f32 %v1141, %v1380
        %v1385 = vmul.f32 %v1142, %v1380
        %v1386 = vmul.f32 %v1143, %v1380
        %v1387 = vmul.f32 %v1144, %v1380
        %v1388 = vmul.f32 %v1145, %v1380
        %v1389 = vmul.f32 %v1146, %v1380
        %v1390 = vmul.f32 %v1147, %v1380
        %v1391 = vmul.f32 %v1148, %v1380
        %v1392 = vmul.f32 %v1149, %v1380
        %v1393 = vmul.f32 %v1150, %v1380
        %v1394 = vmul.f32 %v1151, %v1380
        %v1395 = vmul.f32 %v1152, %v1380
        %v1396 = vmul.f32 %v1153, %v1380
        %v1397 = vadd.f32 %v1360, %v1381
        %v1398 = vadd.f32 %v1361, %v1382
        %v1399 = vadd.f32 %v1362, %v1383
        %v1400 = vadd.f32 %v1363, %v1384
        %v1401 = vadd.f32 %v1364, %v1385
        %v1402 = vadd.f32 %v1365, %v1386
        %v1403 = vadd.f32 %v1366, %v1387
        %v1404 = vadd.f32 %v1367, %v1388
        %v1405 = vadd.f32 %v1368, %v1389
        %v1406 = vadd.f32 %v1369, %v1390
        %v1407 = vadd.f32 %v1370, %v1391
        %v1408 = vadd.f32 %v1371, %v1392
        %v1409 = vadd.f32 %v1372, %v1393
        %v1410 = vadd.f32 %v1373, %v1394
        %v1411 = vadd.f32 %v1374, %v1395
        %v1412 = vadd.f32 %v1375, %v1396
        %v1413 = vld [vmem:[%s551 + $0x10] sm:$0xff]
        %v1414 = vld [vmem:[%s551 + $0x18] sm:$0xff]
        %v1415 = vld [vmem:[%s551 + $0x38] sm:$0xff]
        %v1416 = vld [vmem:[%s551 + $0x40] sm:$0xff]
        %v1417 = vld [vmem:[%s551 + $0x60] sm:$0xff]
        %v1418 = vld [vmem:[%s551 + $0x68] sm:$0xff]
        %v1419 = vld [vmem:[%s551 + $0x88] sm:$0xff]
        %v1420 = vld [vmem:[%s551 + $0x90] sm:$0xff]
        %v1421 = vld [vmem:[%s551 + $0xb0] sm:$0xff]
        %v1422 = vld [vmem:[%s551 + $0xb8] sm:$0xff]
        %v1423 = vld [vmem:[%s551 + $0xd8] sm:$0xff]
        %v1424 = vld [vmem:[%s551 + $0xe0] sm:$0xff]
        %v1425 = vld [vmem:[%s551 + $0x100] sm:$0xff]
        %v1426 = vld [vmem:[%s551 + $0x108] sm:$0xff]
        %v1427 = vld [vmem:[%s551 + $0x128] sm:$0xff]
        %v1428 = vld [vmem:[%s551 + $0x130] sm:$0xff]
        %v1429 = vld [vmem:[%s551 + $0x150] sm:$0xff]
        %v1430 = vld [vmem:[%s551 + $0x158] sm:$0xff]
        %v1431 = vld [vmem:[%s551 + $0x178] sm:$0xff]
        %v1432 = vld [vmem:[%s551 + $0x180] sm:$0xff]
        %v1433 = vld [vmem:[%s551 + $0x1a0] sm:$0xff]
        %v1434 = vld [vmem:[%s551 + $0x1a8] sm:$0xff]
        %v1435 = vld [vmem:[%s551 + $0x1c8] sm:$0xff]
        %v1436 = vld [vmem:[%s551 + $0x1d0] sm:$0xff]
        %v1437 = vld [vmem:[%s551 + $0x1f0] sm:$0xff]
        %v1438 = vld [vmem:[%s551 + $0x1f8] sm:$0xff]
        %v1439 = vld [vmem:[%s551 + $0x218] sm:$0xff]
        %v1440 = vld [vmem:[%s551 + $0x220] sm:$0xff]
        %v1441 = vld [vmem:[#allocation6 + $0x3] sm:$0x1]
        %v1442 = vlaneseq
        %v1443 = vshrl.u32 %v1442, 7
        %v1444 = vsub.s32 0, %v1443
        %v1445 = vrot.slane %v1441, %v1444
        %v1446 = vmul.f32 %v1413, %v1445
        %v1447 = vmul.f32 %v1414, %v1445
        %v1448 = vmul.f32 %v1415, %v1445
        %v1449 = vmul.f32 %v1416, %v1445
        %v1450 = vmul.f32 %v1417, %v1445
        %v1451 = vmul.f32 %v1418, %v1445
        %v1452 = vmul.f32 %v1419, %v1445
        %v1453 = vmul.f32 %v1420, %v1445
        %v1454 = vmul.f32 %v1421, %v1445
        %v1455 = vmul.f32 %v1422, %v1445
        %v1456 = vmul.f32 %v1423, %v1445
        %v1457 = vmul.f32 %v1424, %v1445
        %v1458 = vmul.f32 %v1425, %v1445
        %v1459 = vmul.f32 %v1426, %v1445
        %v1460 = vmul.f32 %v1427, %v1445
        %v1461 = vmul.f32 %v1428, %v1445
        %v1462 = vadd.f32 %v1397, %v1446
        %v1463 = vadd.f32 %v1398, %v1447
        %v1464 = vadd.f32 %v1399, %v1448
        %v1465 = vadd.f32 %v1400, %v1449
        %v1466 = vadd.f32 %v1401, %v1450
        %v1467 = vadd.f32 %v1402, %v1451
        %v1468 = vadd.f32 %v1403, %v1452
        %v1469 = vadd.f32 %v1404, %v1453
        %v1470 = vadd.f32 %v1405, %v1454
        %v1471 = vadd.f32 %v1406, %v1455
        %v1472 = vadd.f32 %v1407, %v1456
        %v1473 = vadd.f32 %v1408, %v1457
        %v1474 = vadd.f32 %v1409, %v1458
        %v1475 = vadd.f32 %v1410, %v1459
        %v1476 = vadd.f32 %v1411, %v1460
        %v1477 = vadd.f32 %v1412, %v1461
        %v1478 = vld [vmem:[#allocation6 + $0xa] sm:$0x1]
        %v1479 = vlaneseq
        %v1480 = vshrl.u32 %v1479, 7
        %v1481 = vsub.s32 0, %v1480
        %v1482 = vrot.slane %v1478, %v1481
        %v1483 = vmul.f32 %v1415, %v1482
        %v1484 = vmul.f32 %v1416, %v1482
        %v1485 = vmul.f32 %v1417, %v1482
        %v1486 = vmul.f32 %v1418, %v1482
        %v1487 = vmul.f32 %v1419, %v1482
        %v1488 = vmul.f32 %v1420, %v1482
        %v1489 = vmul.f32 %v1421, %v1482
        %v1490 = vmul.f32 %v1422, %v1482
        %v1491 = vmul.f32 %v1423, %v1482
        %v1492 = vmul.f32 %v1424, %v1482
        %v1493 = vmul.f32 %v1425, %v1482
        %v1494 = vmul.f32 %v1426, %v1482
        %v1495 = vmul.f32 %v1427, %v1482
        %v1496 = vmul.f32 %v1428, %v1482
        %v1497 = vmul.f32 %v1429, %v1482
        %v1498 = vmul.f32 %v1430, %v1482
        %v1499 = vadd.f32 %v1462, %v1483
        %v1500 = vadd.f32 %v1463, %v1484
        %v1501 = vadd.f32 %v1464, %v1485
        %v1502 = vadd.f32 %v1465, %v1486
        %v1503 = vadd.f32 %v1466, %v1487
        %v1504 = vadd.f32 %v1467, %v1488
        %v1505 = vadd.f32 %v1468, %v1489
        %v1506 = vadd.f32 %v1469, %v1490
        %v1507 = vadd.f32 %v1470, %v1491
        %v1508 = vadd.f32 %v1471, %v1492
        %v1509 = vadd.f32 %v1472, %v1493
        %v1510 = vadd.f32 %v1473, %v1494
        %v1511 = vadd.f32 %v1474, %v1495
        %v1512 = vadd.f32 %v1475, %v1496
        %v1513 = vadd.f32 %v1476, %v1497
        %v1514 = vadd.f32 %v1477, %v1498
        %v1515 = vld [vmem:[#allocation6 + $0x11] sm:$0x1]
        %v1516 = vlaneseq
        %v1517 = vshrl.u32 %v1516, 7
        %v1518 = vsub.s32 0, %v1517
        %v1519 = vrot.slane %v1515, %v1518
        %v1520 = vmul.f32 %v1417, %v1519
        %v1521 = vmul.f32 %v1418, %v1519
        %v1522 = vmul.f32 %v1419, %v1519
        %v1523 = vmul.f32 %v1420, %v1519
        %v1524 = vmul.f32 %v1421, %v1519
        %v1525 = vmul.f32 %v1422, %v1519
        %v1526 = vmul.f32 %v1423, %v1519
        %v1527 = vmul.f32 %v1424, %v1519
        %v1528 = vmul.f32 %v1425, %v1519
        %v1529 = vmul.f32 %v1426, %v1519
        %v1530 = vmul.f32 %v1427, %v1519
        %v1531 = vmul.f32 %v1428, %v1519
        %v1532 = vmul.f32 %v1429, %v1519
        %v1533 = vmul.f32 %v1430, %v1519
        %v1534 = vmul.f32 %v1431, %v1519
        %v1535 = vmul.f32 %v1432, %v1519
        %v1536 = vadd.f32 %v1499, %v1520
        %v1537 = vadd.f32 %v1500, %v1521
        %v1538 = vadd.f32 %v1501, %v1522
        %v1539 = vadd.f32 %v1502, %v1523
        %v1540 = vadd.f32 %v1503, %v1524
        %v1541 = vadd.f32 %v1504, %v1525
        %v1542 = vadd.f32 %v1505, %v1526
        %v1543 = vadd.f32 %v1506, %v1527
        %v1544 = vadd.f32 %v1507, %v1528
        %v1545 = vadd.f32 %v1508, %v1529
        %v1546 = vadd.f32 %v1509, %v1530
        %v1547 = vadd.f32 %v1510, %v1531
        %v1548 = vadd.f32 %v1511, %v1532
        %v1549 = vadd.f32 %v1512, %v1533
        %v1550 = vadd.f32 %v1513, %v1534
        %v1551 = vadd.f32 %v1514, %v1535
        %v1552 = vld [vmem:[#allocation6 + $0x18] sm:$0x1]
        %v1553 = vlaneseq
        %v1554 = vshrl.u32 %v1553, 7
        %v1555 = vsub.s32 0, %v1554
        %v1556 = vrot.slane %v1552, %v1555
        %v1557 = vmul.f32 %v1419, %v1556
        %v1558 = vmul.f32 %v1420, %v1556
        %v1559 = vmul.f32 %v1421, %v1556
        %v1560 = vmul.f32 %v1422, %v1556
        %v1561 = vmul.f32 %v1423, %v1556
        %v1562 = vmul.f32 %v1424, %v1556
        %v1563 = vmul.f32 %v1425, %v1556
        %v1564 = vmul.f32 %v1426, %v1556
        %v1565 = vmul.f32 %v1427, %v1556
        %v1566 = vmul.f32 %v1428, %v1556
        %v1567 = vmul.f32 %v1429, %v1556
        %v1568 = vmul.f32 %v1430, %v1556
        %v1569 = vmul.f32 %v1431, %v1556
        %v1570 = vmul.f32 %v1432, %v1556
        %v1571 = vmul.f32 %v1433, %v1556
        %v1572 = vmul.f32 %v1434, %v1556
        %v1573 = vadd.f32 %v1536, %v1557
        %v1574 = vadd.f32 %v1537, %v1558
        %v1575 = vadd.f32 %v1538, %v1559
        %v1576 = vadd.f32 %v1539, %v1560
        %v1577 = vadd.f32 %v1540, %v1561
        %v1578 = vadd.f32 %v1541, %v1562
        %v1579 = vadd.f32 %v1542, %v1563
        %v1580 = vadd.f32 %v1543, %v1564
        %v1581 = vadd.f32 %v1544, %v1565
        %v1582 = vadd.f32 %v1545, %v1566
        %v1583 = vadd.f32 %v1546, %v1567
        %v1584 = vadd.f32 %v1547, %v1568
        %v1585 = vadd.f32 %v1548, %v1569
        %v1586 = vadd.f32 %v1549, %v1570
        %v1587 = vadd.f32 %v1550, %v1571
        %v1588 = vadd.f32 %v1551, %v1572
        %v1589 = vld [vmem:[#allocation6 + $0x1f] sm:$0x1]
        %v1590 = vlaneseq
        %v1591 = vshrl.u32 %v1590, 7
        %v1592 = vsub.s32 0, %v1591
        %v1593 = vrot.slane %v1589, %v1592
        %v1594 = vmul.f32 %v1421, %v1593
        %v1595 = vmul.f32 %v1422, %v1593
        %v1596 = vmul.f32 %v1423, %v1593
        %v1597 = vmul.f32 %v1424, %v1593
        %v1598 = vmul.f32 %v1425, %v1593
        %v1599 = vmul.f32 %v1426, %v1593
        %v1600 = vmul.f32 %v1427, %v1593
        %v1601 = vmul.f32 %v1428, %v1593
        %v1602 = vmul.f32 %v1429, %v1593
        %v1603 = vmul.f32 %v1430, %v1593
        %v1604 = vmul.f32 %v1431, %v1593
        %v1605 = vmul.f32 %v1432, %v1593
        %v1606 = vmul.f32 %v1433, %v1593
        %v1607 = vmul.f32 %v1434, %v1593
        %v1608 = vmul.f32 %v1435, %v1593
        %v1609 = vmul.f32 %v1436, %v1593
        %v1610 = vadd.f32 %v1573, %v1594
        %v1611 = vadd.f32 %v1574, %v1595
        %v1612 = vadd.f32 %v1575, %v1596
        %v1613 = vadd.f32 %v1576, %v1597
        %v1614 = vadd.f32 %v1577, %v1598
        %v1615 = vadd.f32 %v1578, %v1599
        %v1616 = vadd.f32 %v1579, %v1600
        %v1617 = vadd.f32 %v1580, %v1601
        %v1618 = vadd.f32 %v1581, %v1602
        %v1619 = vadd.f32 %v1582, %v1603
        %v1620 = vadd.f32 %v1583, %v1604
        %v1621 = vadd.f32 %v1584, %v1605
        %v1622 = vadd.f32 %v1585, %v1606
        %v1623 = vadd.f32 %v1586, %v1607
        %v1624 = vadd.f32 %v1587, %v1608
        %v1625 = vadd.f32 %v1588, %v1609
        %v1626 = vld [vmem:[#allocation6 + $0x26] sm:$0x1]
        %v1627 = vlaneseq
        %v1628 = vshrl.u32 %v1627, 7
        %v1629 = vsub.s32 0, %v1628
        %v1630 = vrot.slane %v1626, %v1629
        %v1631 = vmul.f32 %v1423, %v1630
        %v1632 = vmul.f32 %v1424, %v1630
        %v1633 = vmul.f32 %v1425, %v1630
        %v1634 = vmul.f32 %v1426, %v1630
        %v1635 = vmul.f32 %v1427, %v1630
        %v1636 = vmul.f32 %v1428, %v1630
        %v1637 = vmul.f32 %v1429, %v1630
        %v1638 = vmul.f32 %v1430, %v1630
        %v1639 = vmul.f32 %v1431, %v1630
        %v1640 = vmul.f32 %v1432, %v1630
        %v1641 = vmul.f32 %v1433, %v1630
        %v1642 = vmul.f32 %v1434, %v1630
        %v1643 = vmul.f32 %v1435, %v1630
        %v1644 = vmul.f32 %v1436, %v1630
        %v1645 = vmul.f32 %v1437, %v1630
        %v1646 = vmul.f32 %v1438, %v1630
        %v1647 = vadd.f32 %v1610, %v1631
        %v1648 = vadd.f32 %v1611, %v1632
        %v1649 = vadd.f32 %v1612, %v1633
        %v1650 = vadd.f32 %v1613, %v1634
        %v1651 = vadd.f32 %v1614, %v1635
        %v1652 = vadd.f32 %v1615, %v1636
        %v1653 = vadd.f32 %v1616, %v1637
        %v1654 = vadd.f32 %v1617, %v1638
        %v1655 = vadd.f32 %v1618, %v1639
        %v1656 = vadd.f32 %v1619, %v1640
        %v1657 = vadd.f32 %v1620, %v1641
        %v1658 = vadd.f32 %v1621, %v1642
        %v1659 = vadd.f32 %v1622, %v1643
        %v1660 = vadd.f32 %v1623, %v1644
        %v1661 = vadd.f32 %v1624, %v1645
        %v1662 = vadd.f32 %v1625, %v1646
        %v1663 = vld [vmem:[#allocation6 + $0x2d] sm:$0x1]
        %v1664 = vlaneseq
        %v1665 = vshrl.u32 %v1664, 7
        %v1666 = vsub.s32 0, %v1665
        %v1667 = vrot.slane %v1663, %v1666
        %v1668 = vmul.f32 %v1425, %v1667
        %v1669 = vmul.f32 %v1426, %v1667
        %v1670 = vmul.f32 %v1427, %v1667
        %v1671 = vmul.f32 %v1428, %v1667
        %v1672 = vmul.f32 %v1429, %v1667
        %v1673 = vmul.f32 %v1430, %v1667
        %v1674 = vmul.f32 %v1431, %v1667
        %v1675 = vmul.f32 %v1432, %v1667
        %v1676 = vmul.f32 %v1433, %v1667
        %v1677 = vmul.f32 %v1434, %v1667
        %v1678 = vmul.f32 %v1435, %v1667
        %v1679 = vmul.f32 %v1436, %v1667
        %v1680 = vmul.f32 %v1437, %v1667
        %v1681 = vmul.f32 %v1438, %v1667
        %v1682 = vmul.f32 %v1439, %v1667
        %v1683 = vmul.f32 %v1440, %v1667
        %v1684 = vadd.f32 %v1647, %v1668
        %v1685 = vadd.f32 %v1648, %v1669
        %v1686 = vadd.f32 %v1649, %v1670
        %v1687 = vadd.f32 %v1650, %v1671
        %v1688 = vadd.f32 %v1651, %v1672
        %v1689 = vadd.f32 %v1652, %v1673
        %v1690 = vadd.f32 %v1653, %v1674
        %v1691 = vadd.f32 %v1654, %v1675
        %v1692 = vadd.f32 %v1655, %v1676
        %v1693 = vadd.f32 %v1656, %v1677
        %v1694 = vadd.f32 %v1657, %v1678
        %v1695 = vadd.f32 %v1658, %v1679
        %v1696 = vadd.f32 %v1659, %v1680
        %v1697 = vadd.f32 %v1660, %v1681
        %v1698 = vadd.f32 %v1661, %v1682
        %v1699 = vadd.f32 %v1662, %v1683
        %v1700 = vld [vmem:[%s551 + $0x11] sm:$0xff]
        %v1701 = vld [vmem:[%s551 + $0x19] sm:$0xff]
        %v1702 = vld [vmem:[%s551 + $0x39] sm:$0xff]
        %v1703 = vld [vmem:[%s551 + $0x41] sm:$0xff]
        %v1704 = vld [vmem:[%s551 + $0x61] sm:$0xff]
        %v1705 = vld [vmem:[%s551 + $0x69] sm:$0xff]
        %v1706 = vld [vmem:[%s551 + $0x89] sm:$0xff]
        %v1707 = vld [vmem:[%s551 + $0x91] sm:$0xff]
        %v1708 = vld [vmem:[%s551 + $0xb1] sm:$0xff]
        %v1709 = vld [vmem:[%s551 + $0xb9] sm:$0xff]
        %v1710 = vld [vmem:[%s551 + $0xd9] sm:$0xff]
        %v1711 = vld [vmem:[%s551 + $0xe1] sm:$0xff]
        %v1712 = vld [vmem:[%s551 + $0x101] sm:$0xff]
        %v1713 = vld [vmem:[%s551 + $0x109] sm:$0xff]
        %v1714 = vld [vmem:[%s551 + $0x129] sm:$0xff]
        %v1715 = vld [vmem:[%s551 + $0x131] sm:$0xff]
        %v1716 = vld [vmem:[%s551 + $0x151] sm:$0xff]
        %v1717 = vld [vmem:[%s551 + $0x159] sm:$0xff]
        %v1718 = vld [vmem:[%s551 + $0x179] sm:$0xff]
        %v1719 = vld [vmem:[%s551 + $0x181] sm:$0xff]
        %v1720 = vld [vmem:[%s551 + $0x1a1] sm:$0xff]
        %v1721 = vld [vmem:[%s551 + $0x1a9] sm:$0xff]
        %v1722 = vld [vmem:[%s551 + $0x1c9] sm:$0xff]
        %v1723 = vld [vmem:[%s551 + $0x1d1] sm:$0xff]
        %v1724 = vld [vmem:[%s551 + $0x1f1] sm:$0xff]
        %v1725 = vld [vmem:[%s551 + $0x1f9] sm:$0xff]
        %v1726 = vld [vmem:[%s551 + $0x219] sm:$0xff]
        %v1727 = vld [vmem:[%s551 + $0x221] sm:$0xff]
        %v1728 = vld [vmem:[#allocation6 + $0x4] sm:$0x1]
        %v1729 = vlaneseq
        %v1730 = vshrl.u32 %v1729, 7
        %v1731 = vsub.s32 0, %v1730
        %v1732 = vrot.slane %v1728, %v1731
        %v1733 = vmul.f32 %v1700, %v1732
        %v1734 = vmul.f32 %v1701, %v1732
        %v1735 = vmul.f32 %v1702, %v1732
        %v1736 = vmul.f32 %v1703, %v1732
        %v1737 = vmul.f32 %v1704, %v1732
        %v1738 = vmul.f32 %v1705, %v1732
        %v1739 = vmul.f32 %v1706, %v1732
        %v1740 = vmul.f32 %v1707, %v1732
        %v1741 = vmul.f32 %v1708, %v1732
        %v1742 = vmul.f32 %v1709, %v1732
        %v1743 = vmul.f32 %v1710, %v1732
        %v1744 = vmul.f32 %v1711, %v1732
        %v1745 = vmul.f32 %v1712, %v1732
        %v1746 = vmul.f32 %v1713, %v1732
        %v1747 = vmul.f32 %v1714, %v1732
        %v1748 = vmul.f32 %v1715, %v1732
        %v1749 = vadd.f32 %v1684, %v1733
        %v1750 = vadd.f32 %v1685, %v1734
        %v1751 = vadd.f32 %v1686, %v1735
        %v1752 = vadd.f32 %v1687, %v1736
        %v1753 = vadd.f32 %v1688, %v1737
        %v1754 = vadd.f32 %v1689, %v1738
        %v1755 = vadd.f32 %v1690, %v1739
        %v1756 = vadd.f32 %v1691, %v1740
        %v1757 = vadd.f32 %v1692, %v1741
        %v1758 = vadd.f32 %v1693, %v1742
        %v1759 = vadd.f32 %v1694, %v1743
        %v1760 = vadd.f32 %v1695, %v1744
        %v1761 = vadd.f32 %v1696, %v1745
        %v1762 = vadd.f32 %v1697, %v1746
        %v1763 = vadd.f32 %v1698, %v1747
        %v1764 = vadd.f32 %v1699, %v1748
        %v1765 = vld [vmem:[#allocation6 + $0xb] sm:$0x1]
        %v1766 = vlaneseq
        %v1767 = vshrl.u32 %v1766, 7
        %v1768 = vsub.s32 0, %v1767
        %v1769 = vrot.slane %v1765, %v1768
        %v1770 = vmul.f32 %v1702, %v1769
        %v1771 = vmul.f32 %v1703, %v1769
        %v1772 = vmul.f32 %v1704, %v1769
        %v1773 = vmul.f32 %v1705, %v1769
        %v1774 = vmul.f32 %v1706, %v1769
        %v1775 = vmul.f32 %v1707, %v1769
        %v1776 = vmul.f32 %v1708, %v1769
        %v1777 = vmul.f32 %v1709, %v1769
        %v1778 = vmul.f32 %v1710, %v1769
        %v1779 = vmul.f32 %v1711, %v1769
        %v1780 = vmul.f32 %v1712, %v1769
        %v1781 = vmul.f32 %v1713, %v1769
        %v1782 = vmul.f32 %v1714, %v1769
        %v1783 = vmul.f32 %v1715, %v1769
        %v1784 = vmul.f32 %v1716, %v1769
        %v1785 = vmul.f32 %v1717, %v1769
        %v1786 = vadd.f32 %v1749, %v1770
        %v1787 = vadd.f32 %v1750, %v1771
        %v1788 = vadd.f32 %v1751, %v1772
        %v1789 = vadd.f32 %v1752, %v1773
        %v1790 = vadd.f32 %v1753, %v1774
        %v1791 = vadd.f32 %v1754, %v1775
        %v1792 = vadd.f32 %v1755, %v1776
        %v1793 = vadd.f32 %v1756, %v1777
        %v1794 = vadd.f32 %v1757, %v1778
        %v1795 = vadd.f32 %v1758, %v1779
        %v1796 = vadd.f32 %v1759, %v1780
        %v1797 = vadd.f32 %v1760, %v1781
        %v1798 = vadd.f32 %v1761, %v1782
        %v1799 = vadd.f32 %v1762, %v1783
        %v1800 = vadd.f32 %v1763, %v1784
        %v1801 = vadd.f32 %v1764, %v1785
        %v1802 = vld [vmem:[#allocation6 + $0x12] sm:$0x1]
        %v1803 = vlaneseq
        %v1804 = vshrl.u32 %v1803, 7
        %v1805 = vsub.s32 0, %v1804
        %v1806 = vrot.slane %v1802, %v1805
        %v1807 = vmul.f32 %v1704, %v1806
        %v1808 = vmul.f32 %v1705, %v1806
        %v1809 = vmul.f32 %v1706, %v1806
        %v1810 = vmul.f32 %v1707, %v1806
        %v1811 = vmul.f32 %v1708, %v1806
        %v1812 = vmul.f32 %v1709, %v1806
        %v1813 = vmul.f32 %v1710, %v1806
        %v1814 = vmul.f32 %v1711, %v1806
        %v1815 = vmul.f32 %v1712, %v1806
        %v1816 = vmul.f32 %v1713, %v1806
        %v1817 = vmul.f32 %v1714, %v1806
        %v1818 = vmul.f32 %v1715, %v1806
        %v1819 = vmul.f32 %v1716, %v1806
        %v1820 = vmul.f32 %v1717, %v1806
        %v1821 = vmul.f32 %v1718, %v1806
        %v1822 = vmul.f32 %v1719, %v1806
        %v1823 = vadd.f32 %v1786, %v1807
        %v1824 = vadd.f32 %v1787, %v1808
        %v1825 = vadd.f32 %v1788, %v1809
        %v1826 = vadd.f32 %v1789, %v1810
        %v1827 = vadd.f32 %v1790, %v1811
        %v1828 = vadd.f32 %v1791, %v1812
        %v1829 = vadd.f32 %v1792, %v1813
        %v1830 = vadd.f32 %v1793, %v1814
        %v1831 = vadd.f32 %v1794, %v1815
        %v1832 = vadd.f32 %v1795, %v1816
        %v1833 = vadd.f32 %v1796, %v1817
        %v1834 = vadd.f32 %v1797, %v1818
        %v1835 = vadd.f32 %v1798, %v1819
        %v1836 = vadd.f32 %v1799, %v1820
        %v1837 = vadd.f32 %v1800, %v1821
        %v1838 = vadd.f32 %v1801, %v1822
        %v1839 = vld [vmem:[#allocation6 + $0x19] sm:$0x1]
        %v1840 = vlaneseq
        %v1841 = vshrl.u32 %v1840, 7
        %v1842 = vsub.s32 0, %v1841
        %v1843 = vrot.slane %v1839, %v1842
        %v1844 = vmul.f32 %v1706, %v1843
        %v1845 = vmul.f32 %v1707, %v1843
        %v1846 = vmul.f32 %v1708, %v1843
        %v1847 = vmul.f32 %v1709, %v1843
        %v1848 = vmul.f32 %v1710, %v1843
        %v1849 = vmul.f32 %v1711, %v1843
        %v1850 = vmul.f32 %v1712, %v1843
        %v1851 = vmul.f32 %v1713, %v1843
        %v1852 = vmul.f32 %v1714, %v1843
        %v1853 = vmul.f32 %v1715, %v1843
        %v1854 = vmul.f32 %v1716, %v1843
        %v1855 = vmul.f32 %v1717, %v1843
        %v1856 = vmul.f32 %v1718, %v1843
        %v1857 = vmul.f32 %v1719, %v1843
        %v1858 = vmul.f32 %v1720, %v1843
        %v1859 = vmul.f32 %v1721, %v1843
        %v1860 = vadd.f32 %v1823, %v1844
        %v1861 = vadd.f32 %v1824, %v1845
        %v1862 = vadd.f32 %v1825, %v1846
        %v1863 = vadd.f32 %v1826, %v1847
        %v1864 = vadd.f32 %v1827, %v1848
        %v1865 = vadd.f32 %v1828, %v1849
        %v1866 = vadd.f32 %v1829, %v1850
        %v1867 = vadd.f32 %v1830, %v1851
        %v1868 = vadd.f32 %v1831, %v1852
        %v1869 = vadd.f32 %v1832, %v1853
        %v1870 = vadd.f32 %v1833, %v1854
        %v1871 = vadd.f32 %v1834, %v1855
        %v1872 = vadd.f32 %v1835, %v1856
        %v1873 = vadd.f32 %v1836, %v1857
        %v1874 = vadd.f32 %v1837, %v1858
        %v1875 = vadd.f32 %v1838, %v1859
        %v1876 = vld [vmem:[#allocation6 + $0x20] sm:$0x1]
        %v1877 = vlaneseq
        %v1878 = vshrl.u32 %v1877, 7
        %v1879 = vsub.s32 0, %v1878
        %v1880 = vrot.slane %v1876, %v1879
        %v1881 = vmul.f32 %v1708, %v1880
        %v1882 = vmul.f32 %v1709, %v1880
        %v1883 = vmul.f32 %v1710, %v1880
        %v1884 = vmul.f32 %v1711, %v1880
        %v1885 = vmul.f32 %v1712, %v1880
        %v1886 = vmul.f32 %v1713, %v1880
        %v1887 = vmul.f32 %v1714, %v1880
        %v1888 = vmul.f32 %v1715, %v1880
        %v1889 = vmul.f32 %v1716, %v1880
        %v1890 = vmul.f32 %v1717, %v1880
        %v1891 = vmul.f32 %v1718, %v1880
        %v1892 = vmul.f32 %v1719, %v1880
        %v1893 = vmul.f32 %v1720, %v1880
        %v1894 = vmul.f32 %v1721, %v1880
        %v1895 = vmul.f32 %v1722, %v1880
        %v1896 = vmul.f32 %v1723, %v1880
        %v1897 = vadd.f32 %v1860, %v1881
        %v1898 = vadd.f32 %v1861, %v1882
        %v1899 = vadd.f32 %v1862, %v1883
        %v1900 = vadd.f32 %v1863, %v1884
        %v1901 = vadd.f32 %v1864, %v1885
        %v1902 = vadd.f32 %v1865, %v1886
        %v1903 = vadd.f32 %v1866, %v1887
        %v1904 = vadd.f32 %v1867, %v1888
        %v1905 = vadd.f32 %v1868, %v1889
        %v1906 = vadd.f32 %v1869, %v1890
        %v1907 = vadd.f32 %v1870, %v1891
        %v1908 = vadd.f32 %v1871, %v1892
        %v1909 = vadd.f32 %v1872, %v1893
        %v1910 = vadd.f32 %v1873, %v1894
        %v1911 = vadd.f32 %v1874, %v1895
        %v1912 = vadd.f32 %v1875, %v1896
        %v1913 = vld [vmem:[#allocation6 + $0x27] sm:$0x1]
        %v1914 = vlaneseq
        %v1915 = vshrl.u32 %v1914, 7
        %v1916 = vsub.s32 0, %v1915
        %v1917 = vrot.slane %v1913, %v1916
        %v1918 = vmul.f32 %v1710, %v1917
        %v1919 = vmul.f32 %v1711, %v1917
        %v1920 = vmul.f32 %v1712, %v1917
        %v1921 = vmul.f32 %v1713, %v1917
        %v1922 = vmul.f32 %v1714, %v1917
        %v1923 = vmul.f32 %v1715, %v1917
        %v1924 = vmul.f32 %v1716, %v1917
        %v1925 = vmul.f32 %v1717, %v1917
        %v1926 = vmul.f32 %v1718, %v1917
        %v1927 = vmul.f32 %v1719, %v1917
        %v1928 = vmul.f32 %v1720, %v1917
        %v1929 = vmul.f32 %v1721, %v1917
        %v1930 = vmul.f32 %v1722, %v1917
        %v1931 = vmul.f32 %v1723, %v1917
        %v1932 = vmul.f32 %v1724, %v1917
        %v1933 = vmul.f32 %v1725, %v1917
        %v1934 = vadd.f32 %v1897, %v1918
        %v1935 = vadd.f32 %v1898, %v1919
        %v1936 = vadd.f32 %v1899, %v1920
        %v1937 = vadd.f32 %v1900, %v1921
        %v1938 = vadd.f32 %v1901, %v1922
        %v1939 = vadd.f32 %v1902, %v1923
        %v1940 = vadd.f32 %v1903, %v1924
        %v1941 = vadd.f32 %v1904, %v1925
        %v1942 = vadd.f32 %v1905, %v1926
        %v1943 = vadd.f32 %v1906, %v1927
        %v1944 = vadd.f32 %v1907, %v1928
        %v1945 = vadd.f32 %v1908, %v1929
        %v1946 = vadd.f32 %v1909, %v1930
        %v1947 = vadd.f32 %v1910, %v1931
        %v1948 = vadd.f32 %v1911, %v1932
        %v1949 = vadd.f32 %v1912, %v1933
        %v1950 = vld [vmem:[#allocation6 + $0x2e] sm:$0x1]
        %v1951 = vlaneseq
        %v1952 = vshrl.u32 %v1951, 7
        %v1953 = vsub.s32 0, %v1952
        %v1954 = vrot.slane %v1950, %v1953
        %v1955 = vmul.f32 %v1712, %v1954
        %v1956 = vmul.f32 %v1713, %v1954
        %v1957 = vmul.f32 %v1714, %v1954
        %v1958 = vmul.f32 %v1715, %v1954
        %v1959 = vmul.f32 %v1716, %v1954
        %v1960 = vmul.f32 %v1717, %v1954
        %v1961 = vmul.f32 %v1718, %v1954
        %v1962 = vmul.f32 %v1719, %v1954
        %v1963 = vmul.f32 %v1720, %v1954
        %v1964 = vmul.f32 %v1721, %v1954
        %v1965 = vmul.f32 %v1722, %v1954
        %v1966 = vmul.f32 %v1723, %v1954
        %v1967 = vmul.f32 %v1724, %v1954
        %v1968 = vmul.f32 %v1725, %v1954
        %v1969 = vmul.f32 %v1726, %v1954
        %v1970 = vmul.f32 %v1727, %v1954
        %v1971 = vadd.f32 %v1934, %v1955
        %v1972 = vadd.f32 %v1935, %v1956
        %v1973 = vadd.f32 %v1936, %v1957
        %v1974 = vadd.f32 %v1937, %v1958
        %v1975 = vadd.f32 %v1938, %v1959
        %v1976 = vadd.f32 %v1939, %v1960
        %v1977 = vadd.f32 %v1940, %v1961
        %v1978 = vadd.f32 %v1941, %v1962
        %v1979 = vadd.f32 %v1942, %v1963
        %v1980 = vadd.f32 %v1943, %v1964
        %v1981 = vadd.f32 %v1944, %v1965
        %v1982 = vadd.f32 %v1945, %v1966
        %v1983 = vadd.f32 %v1946, %v1967
        %v1984 = vadd.f32 %v1947, %v1968
        %v1985 = vadd.f32 %v1948, %v1969
        %v1986 = vadd.f32 %v1949, %v1970
        %v1987 = vld [vmem:[%s551 + $0x12] sm:$0xff]
        %v1988 = vld [vmem:[%s551 + $0x1a] sm:$0xff]
        %v1989 = vld [vmem:[%s551 + $0x3a] sm:$0xff]
        %v1990 = vld [vmem:[%s551 + $0x42] sm:$0xff]
        %v1991 = vld [vmem:[%s551 + $0x62] sm:$0xff]
        %v1992 = vld [vmem:[%s551 + $0x6a] sm:$0xff]
        %v1993 = vld [vmem:[%s551 + $0x8a] sm:$0xff]
        %v1994 = vld [vmem:[%s551 + $0x92] sm:$0xff]
        %v1995 = vld [vmem:[%s551 + $0xb2] sm:$0xff]
        %v1996 = vld [vmem:[%s551 + $0xba] sm:$0xff]
        %v1997 = vld [vmem:[%s551 + $0xda] sm:$0xff]
        %v1998 = vld [vmem:[%s551 + $0xe2] sm:$0xff]
        %v1999 = vld [vmem:[%s551 + $0x102] sm:$0xff]
        %v2000 = vld [vmem:[%s551 + $0x10a] sm:$0xff]
        %v2001 = vld [vmem:[%s551 + $0x12a] sm:$0xff]
        %v2002 = vld [vmem:[%s551 + $0x132] sm:$0xff]
        %v2003 = vld [vmem:[%s551 + $0x152] sm:$0xff]
        %v2004 = vld [vmem:[%s551 + $0x15a] sm:$0xff]
        %v2005 = vld [vmem:[%s551 + $0x17a] sm:$0xff]
        %v2006 = vld [vmem:[%s551 + $0x182] sm:$0xff]
        %v2007 = vld [vmem:[%s551 + $0x1a2] sm:$0xff]
        %v2008 = vld [vmem:[%s551 + $0x1aa] sm:$0xff]
        %v2009 = vld [vmem:[%s551 + $0x1ca] sm:$0xff]
        %v2010 = vld [vmem:[%s551 + $0x1d2] sm:$0xff]
        %v2011 = vld [vmem:[%s551 + $0x1f2] sm:$0xff]
        %v2012 = vld [vmem:[%s551 + $0x1fa] sm:$0xff]
        %v2013 = vld [vmem:[%s551 + $0x21a] sm:$0xff]
        %v2014 = vld [vmem:[%s551 + $0x222] sm:$0xff]
        %v2015 = vld [vmem:[#allocation6 + $0x5] sm:$0x1]
        %v2016 = vlaneseq
        %v2017 = vshrl.u32 %v2016, 7
        %v2018 = vsub.s32 0, %v2017
        %v2019 = vrot.slane %v2015, %v2018
        %v2020 = vmul.f32 %v1987, %v2019
        %v2021 = vmul.f32 %v1988, %v2019
        %v2022 = vmul.f32 %v1989, %v2019
        %v2023 = vmul.f32 %v1990, %v2019
        %v2024 = vmul.f32 %v1991, %v2019
        %v2025 = vmul.f32 %v1992, %v2019
        %v2026 = vmul.f32 %v1993, %v2019
        %v2027 = vmul.f32 %v1994, %v2019
        %v2028 = vmul.f32 %v1995, %v2019
        %v2029 = vmul.f32 %v1996, %v2019
        %v2030 = vmul.f32 %v1997, %v2019
        %v2031 = vmul.f32 %v1998, %v2019
        %v2032 = vmul.f32 %v1999, %v2019
        %v2033 = vmul.f32 %v2000, %v2019
        %v2034 = vmul.f32 %v2001, %v2019
        %v2035 = vmul.f32 %v2002, %v2019
        %v2036 = vadd.f32 %v1971, %v2020
        %v2037 = vadd.f32 %v1972, %v2021
        %v2038 = vadd.f32 %v1973, %v2022
        %v2039 = vadd.f32 %v1974, %v2023
        %v2040 = vadd.f32 %v1975, %v2024
        %v2041 = vadd.f32 %v1976, %v2025
        %v2042 = vadd.f32 %v1977, %v2026
        %v2043 = vadd.f32 %v1978, %v2027
        %v2044 = vadd.f32 %v1979, %v2028
        %v2045 = vadd.f32 %v1980, %v2029
        %v2046 = vadd.f32 %v1981, %v2030
        %v2047 = vadd.f32 %v1982, %v2031
        %v2048 = vadd.f32 %v1983, %v2032
        %v2049 = vadd.f32 %v1984, %v2033
        %v2050 = vadd.f32 %v1985, %v2034
        %v2051 = vadd.f32 %v1986, %v2035
        %v2052 = vld [vmem:[#allocation6 + $0xc] sm:$0x1]
        %v2053 = vlaneseq
        %v2054 = vshrl.u32 %v2053, 7
        %v2055 = vsub.s32 0, %v2054
        %v2056 = vrot.slane %v2052, %v2055
        %v2057 = vmul.f32 %v1989, %v2056
        %v2058 = vmul.f32 %v1990, %v2056
        %v2059 = vmul.f32 %v1991, %v2056
        %v2060 = vmul.f32 %v1992, %v2056
        %v2061 = vmul.f32 %v1993, %v2056
        %v2062 = vmul.f32 %v1994, %v2056
        %v2063 = vmul.f32 %v1995, %v2056
        %v2064 = vmul.f32 %v1996, %v2056
        %v2065 = vmul.f32 %v1997, %v2056
        %v2066 = vmul.f32 %v1998, %v2056
        %v2067 = vmul.f32 %v1999, %v2056
        %v2068 = vmul.f32 %v2000, %v2056
        %v2069 = vmul.f32 %v2001, %v2056
        %v2070 = vmul.f32 %v2002, %v2056
        %v2071 = vmul.f32 %v2003, %v2056
        %v2072 = vmul.f32 %v2004, %v2056
        %v2073 = vadd.f32 %v2036, %v2057
        %v2074 = vadd.f32 %v2037, %v2058
        %v2075 = vadd.f32 %v2038, %v2059
        %v2076 = vadd.f32 %v2039, %v2060
        %v2077 = vadd.f32 %v2040, %v2061
        %v2078 = vadd.f32 %v2041, %v2062
        %v2079 = vadd.f32 %v2042, %v2063
        %v2080 = vadd.f32 %v2043, %v2064
        %v2081 = vadd.f32 %v2044, %v2065
        %v2082 = vadd.f32 %v2045, %v2066
        %v2083 = vadd.f32 %v2046, %v2067
        %v2084 = vadd.f32 %v2047, %v2068
        %v2085 = vadd.f32 %v2048, %v2069
        %v2086 = vadd.f32 %v2049, %v2070
        %v2087 = vadd.f32 %v2050, %v2071
        %v2088 = vadd.f32 %v2051, %v2072
        %v2089 = vld [vmem:[#allocation6 + $0x13] sm:$0x1]
        %v2090 = vlaneseq
        %v2091 = vshrl.u32 %v2090, 7
        %v2092 = vsub.s32 0, %v2091
        %v2093 = vrot.slane %v2089, %v2092
        %v2094 = vmul.f32 %v1991, %v2093
        %v2095 = vmul.f32 %v1992, %v2093
        %v2096 = vmul.f32 %v1993, %v2093
        %v2097 = vmul.f32 %v1994, %v2093
        %v2098 = vmul.f32 %v1995, %v2093
        %v2099 = vmul.f32 %v1996, %v2093
        %v2100 = vmul.f32 %v1997, %v2093
        %v2101 = vmul.f32 %v1998, %v2093
        %v2102 = vmul.f32 %v1999, %v2093
        %v2103 = vmul.f32 %v2000, %v2093
        %v2104 = vmul.f32 %v2001, %v2093
        %v2105 = vmul.f32 %v2002, %v2093
        %v2106 = vmul.f32 %v2003, %v2093
        %v2107 = vmul.f32 %v2004, %v2093
        %v2108 = vmul.f32 %v2005, %v2093
        %v2109 = vmul.f32 %v2006, %v2093
        %v2110 = vadd.f32 %v2073, %v2094
        %v2111 = vadd.f32 %v2074, %v2095
        %v2112 = vadd.f32 %v2075, %v2096
        %v2113 = vadd.f32 %v2076, %v2097
        %v2114 = vadd.f32 %v2077, %v2098
        %v2115 = vadd.f32 %v2078, %v2099
        %v2116 = vadd.f32 %v2079, %v2100
        %v2117 = vadd.f32 %v2080, %v2101
        %v2118 = vadd.f32 %v2081, %v2102
        %v2119 = vadd.f32 %v2082, %v2103
        %v2120 = vadd.f32 %v2083, %v2104
        %v2121 = vadd.f32 %v2084, %v2105
        %v2122 = vadd.f32 %v2085, %v2106
        %v2123 = vadd.f32 %v2086, %v2107
        %v2124 = vadd.f32 %v2087, %v2108
        %v2125 = vadd.f32 %v2088, %v2109
        %v2126 = vld [vmem:[#allocation6 + $0x1a] sm:$0x1]
        %v2127 = vlaneseq
        %v2128 = vshrl.u32 %v2127, 7
        %v2129 = vsub.s32 0, %v2128
        %v2130 = vrot.slane %v2126, %v2129
        %v2131 = vmul.f32 %v1993, %v2130
        %v2132 = vmul.f32 %v1994, %v2130
        %v2133 = vmul.f32 %v1995, %v2130
        %v2134 = vmul.f32 %v1996, %v2130
        %v2135 = vmul.f32 %v1997, %v2130
        %v2136 = vmul.f32 %v1998, %v2130
        %v2137 = vmul.f32 %v1999, %v2130
        %v2138 = vmul.f32 %v2000, %v2130
        %v2139 = vmul.f32 %v2001, %v2130
        %v2140 = vmul.f32 %v2002, %v2130
        %v2141 = vmul.f32 %v2003, %v2130
        %v2142 = vmul.f32 %v2004, %v2130
        %v2143 = vmul.f32 %v2005, %v2130
        %v2144 = vmul.f32 %v2006, %v2130
        %v2145 = vmul.f32 %v2007, %v2130
        %v2146 = vmul.f32 %v2008, %v2130
        %v2147 = vadd.f32 %v2110, %v2131
        %v2148 = vadd.f32 %v2111, %v2132
        %v2149 = vadd.f32 %v2112, %v2133
        %v2150 = vadd.f32 %v2113, %v2134
        %v2151 = vadd.f32 %v2114, %v2135
        %v2152 = vadd.f32 %v2115, %v2136
        %v2153 = vadd.f32 %v2116, %v2137
        %v2154 = vadd.f32 %v2117, %v2138
        %v2155 = vadd.f32 %v2118, %v2139
        %v2156 = vadd.f32 %v2119, %v2140
        %v2157 = vadd.f32 %v2120, %v2141
        %v2158 = vadd.f32 %v2121, %v2142
        %v2159 = vadd.f32 %v2122, %v2143
        %v2160 = vadd.f32 %v2123, %v2144
        %v2161 = vadd.f32 %v2124, %v2145
        %v2162 = vadd.f32 %v2125, %v2146
        %v2163 = vld [vmem:[#allocation6 + $0x21] sm:$0x1]
        %v2164 = vlaneseq
        %v2165 = vshrl.u32 %v2164, 7
        %v2166 = vsub.s32 0, %v2165
        %v2167 = vrot.slane %v2163, %v2166
        %v2168 = vmul.f32 %v1995, %v2167
        %v2169 = vmul.f32 %v1996, %v2167
        %v2170 = vmul.f32 %v1997, %v2167
        %v2171 = vmul.f32 %v1998, %v2167
        %v2172 = vmul.f32 %v1999, %v2167
        %v2173 = vmul.f32 %v2000, %v2167
        %v2174 = vmul.f32 %v2001, %v2167
        %v2175 = vmul.f32 %v2002, %v2167
        %v2176 = vmul.f32 %v2003, %v2167
        %v2177 = vmul.f32 %v2004, %v2167
        %v2178 = vmul.f32 %v2005, %v2167
        %v2179 = vmul.f32 %v2006, %v2167
        %v2180 = vmul.f32 %v2007, %v2167
        %v2181 = vmul.f32 %v2008, %v2167
        %v2182 = vmul.f32 %v2009, %v2167
        %v2183 = vmul.f32 %v2010, %v2167
        %v2184 = vadd.f32 %v2147, %v2168
        %v2185 = vadd.f32 %v2148, %v2169
        %v2186 = vadd.f32 %v2149, %v2170
        %v2187 = vadd.f32 %v2150, %v2171
        %v2188 = vadd.f32 %v2151, %v2172
        %v2189 = vadd.f32 %v2152, %v2173
        %v2190 = vadd.f32 %v2153, %v2174
        %v2191 = vadd.f32 %v2154, %v2175
        %v2192 = vadd.f32 %v2155, %v2176
        %v2193 = vadd.f32 %v2156, %v2177
        %v2194 = vadd.f32 %v2157, %v2178
        %v2195 = vadd.f32 %v2158, %v2179
        %v2196 = vadd.f32 %v2159, %v2180
        %v2197 = vadd.f32 %v2160, %v2181
        %v2198 = vadd.f32 %v2161, %v2182
        %v2199 = vadd.f32 %v2162, %v2183
        %v2200 = vld [vmem:[#allocation6 + $0x28] sm:$0x1]
        %v2201 = vlaneseq
        %v2202 = vshrl.u32 %v2201, 7
        %v2203 = vsub.s32 0, %v2202
        %v2204 = vrot.slane %v2200, %v2203
        %v2205 = vmul.f32 %v1997, %v2204
        %v2206 = vmul.f32 %v1998, %v2204
        %v2207 = vmul.f32 %v1999, %v2204
        %v2208 = vmul.f32 %v2000, %v2204
        %v2209 = vmul.f32 %v2001, %v2204
        %v2210 = vmul.f32 %v2002, %v2204
        %v2211 = vmul.f32 %v2003, %v2204
        %v2212 = vmul.f32 %v2004, %v2204
        %v2213 = vmul.f32 %v2005, %v2204
        %v2214 = vmul.f32 %v2006, %v2204
        %v2215 = vmul.f32 %v2007, %v2204
        %v2216 = vmul.f32 %v2008, %v2204
        %v2217 = vmul.f32 %v2009, %v2204
        %v2218 = vmul.f32 %v2010, %v2204
        %v2219 = vmul.f32 %v2011, %v2204
        %v2220 = vmul.f32 %v2012, %v2204
        %v2221 = vadd.f32 %v2184, %v2205
        %v2222 = vadd.f32 %v2185, %v2206
        %v2223 = vadd.f32 %v2186, %v2207
        %v2224 = vadd.f32 %v2187, %v2208
        %v2225 = vadd.f32 %v2188, %v2209
        %v2226 = vadd.f32 %v2189, %v2210
        %v2227 = vadd.f32 %v2190, %v2211
        %v2228 = vadd.f32 %v2191, %v2212
        %v2229 = vadd.f32 %v2192, %v2213
        %v2230 = vadd.f32 %v2193, %v2214
        %v2231 = vadd.f32 %v2194, %v2215
        %v2232 = vadd.f32 %v2195, %v2216
        %v2233 = vadd.f32 %v2196, %v2217
        %v2234 = vadd.f32 %v2197, %v2218
        %v2235 = vadd.f32 %v2198, %v2219
        %v2236 = vadd.f32 %v2199, %v2220
        %v2237 = vld [vmem:[#allocation6 + $0x2f] sm:$0x1]
        %v2238 = vlaneseq
        %v2239 = vshrl.u32 %v2238, 7
        %v2240 = vsub.s32 0, %v2239
        %v2241 = vrot.slane %v2237, %v2240
        %v2242 = vmul.f32 %v1999, %v2241
        %v2243 = vmul.f32 %v2000, %v2241
        %v2244 = vmul.f32 %v2001, %v2241
        %v2245 = vmul.f32 %v2002, %v2241
        %v2246 = vmul.f32 %v2003, %v2241
        %v2247 = vmul.f32 %v2004, %v2241
        %v2248 = vmul.f32 %v2005, %v2241
        %v2249 = vmul.f32 %v2006, %v2241
        %v2250 = vmul.f32 %v2007, %v2241
        %v2251 = vmul.f32 %v2008, %v2241
        %v2252 = vmul.f32 %v2009, %v2241
        %v2253 = vmul.f32 %v2010, %v2241
        %v2254 = vmul.f32 %v2011, %v2241
        %v2255 = vmul.f32 %v2012, %v2241
        %v2256 = vmul.f32 %v2013, %v2241
        %v2257 = vmul.f32 %v2014, %v2241
        %v2258 = vadd.f32 %v2221, %v2242
        %v2259 = vadd.f32 %v2222, %v2243
        %v2260 = vadd.f32 %v2223, %v2244
        %v2261 = vadd.f32 %v2224, %v2245
        %v2262 = vadd.f32 %v2225, %v2246
        %v2263 = vadd.f32 %v2226, %v2247
        %v2264 = vadd.f32 %v2227, %v2248
        %v2265 = vadd.f32 %v2228, %v2249
        %v2266 = vadd.f32 %v2229, %v2250
        %v2267 = vadd.f32 %v2230, %v2251
        %v2268 = vadd.f32 %v2231, %v2252
        %v2269 = vadd.f32 %v2232, %v2253
        %v2270 = vadd.f32 %v2233, %v2254
        %v2271 = vadd.f32 %v2234, %v2255
        %v2272 = vadd.f32 %v2235, %v2256
        %v2273 = vadd.f32 %v2236, %v2257
        %v2274 = vld [vmem:[%s551 + $0x13] sm:$0xff]
        %v2275 = vld [vmem:[%s551 + $0x1b] sm:$0xff]
        %v2276 = vld [vmem:[%s551 + $0x3b] sm:$0xff]
        %v2277 = vld [vmem:[%s551 + $0x43] sm:$0xff]
        %v2278 = vld [vmem:[%s551 + $0x63] sm:$0xff]
        %v2279 = vld [vmem:[%s551 + $0x6b] sm:$0xff]
        %v2280 = vld [vmem:[%s551 + $0x8b] sm:$0xff]
        %v2281 = vld [vmem:[%s551 + $0x93] sm:$0xff]
        %v2282 = vld [vmem:[%s551 + $0xb3] sm:$0xff]
        %v2283 = vld [vmem:[%s551 + $0xbb] sm:$0xff]
        %v2284 = vld [vmem:[%s551 + $0xdb] sm:$0xff]
        %v2285 = vld [vmem:[%s551 + $0xe3] sm:$0xff]
        %v2286 = vld [vmem:[%s551 + $0x103] sm:$0xff]
        %v2287 = vld [vmem:[%s551 + $0x10b] sm:$0xff]
        %v2288 = vld [vmem:[%s551 + $0x12b] sm:$0xff]
        %v2289 = vld [vmem:[%s551 + $0x133] sm:$0xff]
        %v2290 = vld [vmem:[%s551 + $0x153] sm:$0xff]
        %v2291 = vld [vmem:[%s551 + $0x15b] sm:$0xff]
        %v2292 = vld [vmem:[%s551 + $0x17b] sm:$0xff]
        %v2293 = vld [vmem:[%s551 + $0x183] sm:$0xff]
        %v2294 = vld [vmem:[%s551 + $0x1a3] sm:$0xff]
        %v2295 = vld [vmem:[%s551 + $0x1ab] sm:$0xff]
        %v2296 = vld [vmem:[%s551 + $0x1cb] sm:$0xff]
        %v2297 = vld [vmem:[%s551 + $0x1d3] sm:$0xff]
        %v2298 = vld [vmem:[%s551 + $0x1f3] sm:$0xff]
        %v2299 = vld [vmem:[%s551 + $0x1fb] sm:$0xff]
        %v2300 = vld [vmem:[%s551 + $0x21b] sm:$0xff]
        %v2301 = vld [vmem:[%s551 + $0x223] sm:$0xff]
        %v2302 = vld [vmem:[#allocation6 + $0x6] sm:$0x1]
        %v2303 = vlaneseq
        %v2304 = vshrl.u32 %v2303, 7
        %v2305 = vsub.s32 0, %v2304
        %v2306 = vrot.slane %v2302, %v2305
        %v2307 = vmul.f32 %v2274, %v2306
        %v2308 = vmul.f32 %v2275, %v2306
        %v2309 = vmul.f32 %v2276, %v2306
        %v2310 = vmul.f32 %v2277, %v2306
        %v2311 = vmul.f32 %v2278, %v2306
        %v2312 = vmul.f32 %v2279, %v2306
        %v2313 = vmul.f32 %v2280, %v2306
        %v2314 = vmul.f32 %v2281, %v2306
        %v2315 = vmul.f32 %v2282, %v2306
        %v2316 = vmul.f32 %v2283, %v2306
        %v2317 = vmul.f32 %v2284, %v2306
        %v2318 = vmul.f32 %v2285, %v2306
        %v2319 = vmul.f32 %v2286, %v2306
        %v2320 = vmul.f32 %v2287, %v2306
        %v2321 = vmul.f32 %v2288, %v2306
        %v2322 = vmul.f32 %v2289, %v2306
        %v2323 = vadd.f32 %v2258, %v2307
        %v2324 = vadd.f32 %v2259, %v2308
        %v2325 = vadd.f32 %v2260, %v2309
        %v2326 = vadd.f32 %v2261, %v2310
        %v2327 = vadd.f32 %v2262, %v2311
        %v2328 = vadd.f32 %v2263, %v2312
        %v2329 = vadd.f32 %v2264, %v2313
        %v2330 = vadd.f32 %v2265, %v2314
        %v2331 = vadd.f32 %v2266, %v2315
        %v2332 = vadd.f32 %v2267, %v2316
        %v2333 = vadd.f32 %v2268, %v2317
        %v2334 = vadd.f32 %v2269, %v2318
        %v2335 = vadd.f32 %v2270, %v2319
        %v2336 = vadd.f32 %v2271, %v2320
        %v2337 = vadd.f32 %v2272, %v2321
        %v2338 = vadd.f32 %v2273, %v2322
        %v2339 = vld [vmem:[#allocation6 + $0xd] sm:$0x1]
        %v2340 = vlaneseq
        %v2341 = vshrl.u32 %v2340, 7
        %v2342 = vsub.s32 0, %v2341
        %v2343 = vrot.slane %v2339, %v2342
        %v2344 = vmul.f32 %v2276, %v2343
        %v2345 = vmul.f32 %v2277, %v2343
        %v2346 = vmul.f32 %v2278, %v2343
        %v2347 = vmul.f32 %v2279, %v2343
        %v2348 = vmul.f32 %v2280, %v2343
        %v2349 = vmul.f32 %v2281, %v2343
        %v2350 = vmul.f32 %v2282, %v2343
        %v2351 = vmul.f32 %v2283, %v2343
        %v2352 = vmul.f32 %v2284, %v2343
        %v2353 = vmul.f32 %v2285, %v2343
        %v2354 = vmul.f32 %v2286, %v2343
        %v2355 = vmul.f32 %v2287, %v2343
        %v2356 = vmul.f32 %v2288, %v2343
        %v2357 = vmul.f32 %v2289, %v2343
        %v2358 = vmul.f32 %v2290, %v2343
        %v2359 = vmul.f32 %v2291, %v2343
        %v2360 = vadd.f32 %v2323, %v2344
        %v2361 = vadd.f32 %v2324, %v2345
        %v2362 = vadd.f32 %v2325, %v2346
        %v2363 = vadd.f32 %v2326, %v2347
        %v2364 = vadd.f32 %v2327, %v2348
        %v2365 = vadd.f32 %v2328, %v2349
        %v2366 = vadd.f32 %v2329, %v2350
        %v2367 = vadd.f32 %v2330, %v2351
        %v2368 = vadd.f32 %v2331, %v2352
        %v2369 = vadd.f32 %v2332, %v2353
        %v2370 = vadd.f32 %v2333, %v2354
        %v2371 = vadd.f32 %v2334, %v2355
        %v2372 = vadd.f32 %v2335, %v2356
        %v2373 = vadd.f32 %v2336, %v2357
        %v2374 = vadd.f32 %v2337, %v2358
        %v2375 = vadd.f32 %v2338, %v2359
        %v2376 = vld [vmem:[#allocation6 + $0x14] sm:$0x1]
        %v2377 = vlaneseq
        %v2378 = vshrl.u32 %v2377, 7
        %v2379 = vsub.s32 0, %v2378
        %v2380 = vrot.slane %v2376, %v2379
        %v2381 = vmul.f32 %v2278, %v2380
        %v2382 = vmul.f32 %v2279, %v2380
        %v2383 = vmul.f32 %v2280, %v2380
        %v2384 = vmul.f32 %v2281, %v2380
        %v2385 = vmul.f32 %v2282, %v2380
        %v2386 = vmul.f32 %v2283, %v2380
        %v2387 = vmul.f32 %v2284, %v2380
        %v2388 = vmul.f32 %v2285, %v2380
        %v2389 = vmul.f32 %v2286, %v2380
        %v2390 = vmul.f32 %v2287, %v2380
        %v2391 = vmul.f32 %v2288, %v2380
        %v2392 = vmul.f32 %v2289, %v2380
        %v2393 = vmul.f32 %v2290, %v2380
        %v2394 = vmul.f32 %v2291, %v2380
        %v2395 = vmul.f32 %v2292, %v2380
        %v2396 = vmul.f32 %v2293, %v2380
        %v2397 = vadd.f32 %v2360, %v2381
        %v2398 = vadd.f32 %v2361, %v2382
        %v2399 = vadd.f32 %v2362, %v2383
        %v2400 = vadd.f32 %v2363, %v2384
        %v2401 = vadd.f32 %v2364, %v2385
        %v2402 = vadd.f32 %v2365, %v2386
        %v2403 = vadd.f32 %v2366, %v2387
        %v2404 = vadd.f32 %v2367, %v2388
        %v2405 = vadd.f32 %v2368, %v2389
        %v2406 = vadd.f32 %v2369, %v2390
        %v2407 = vadd.f32 %v2370, %v2391
        %v2408 = vadd.f32 %v2371, %v2392
        %v2409 = vadd.f32 %v2372, %v2393
        %v2410 = vadd.f32 %v2373, %v2394
        %v2411 = vadd.f32 %v2374, %v2395
        %v2412 = vadd.f32 %v2375, %v2396
        %v2413 = vld [vmem:[#allocation6 + $0x1b] sm:$0x1]
        %v2414 = vlaneseq
        %v2415 = vshrl.u32 %v2414, 7
        %v2416 = vsub.s32 0, %v2415
        %v2417 = vrot.slane %v2413, %v2416
        %v2418 = vmul.f32 %v2280, %v2417
        %v2419 = vmul.f32 %v2281, %v2417
        %v2420 = vmul.f32 %v2282, %v2417
        %v2421 = vmul.f32 %v2283, %v2417
        %v2422 = vmul.f32 %v2284, %v2417
        %v2423 = vmul.f32 %v2285, %v2417
        %v2424 = vmul.f32 %v2286, %v2417
        %v2425 = vmul.f32 %v2287, %v2417
        %v2426 = vmul.f32 %v2288, %v2417
        %v2427 = vmul.f32 %v2289, %v2417
        %v2428 = vmul.f32 %v2290, %v2417
        %v2429 = vmul.f32 %v2291, %v2417
        %v2430 = vmul.f32 %v2292, %v2417
        %v2431 = vmul.f32 %v2293, %v2417
        %v2432 = vmul.f32 %v2294, %v2417
        %v2433 = vmul.f32 %v2295, %v2417
        %v2434 = vadd.f32 %v2397, %v2418
        %v2435 = vadd.f32 %v2398, %v2419
        %v2436 = vadd.f32 %v2399, %v2420
        %v2437 = vadd.f32 %v2400, %v2421
        %v2438 = vadd.f32 %v2401, %v2422
        %v2439 = vadd.f32 %v2402, %v2423
        %v2440 = vadd.f32 %v2403, %v2424
        %v2441 = vadd.f32 %v2404, %v2425
        %v2442 = vadd.f32 %v2405, %v2426
        %v2443 = vadd.f32 %v2406, %v2427
        %v2444 = vadd.f32 %v2407, %v2428
        %v2445 = vadd.f32 %v2408, %v2429
        %v2446 = vadd.f32 %v2409, %v2430
        %v2447 = vadd.f32 %v2410, %v2431
        %v2448 = vadd.f32 %v2411, %v2432
        %v2449 = vadd.f32 %v2412, %v2433
        %v2450 = vld [vmem:[#allocation6 + $0x22] sm:$0x1]
        %v2451 = vlaneseq
        %v2452 = vshrl.u32 %v2451, 7
        %v2453 = vsub.s32 0, %v2452
        %v2454 = vrot.slane %v2450, %v2453
        %v2455 = vmul.f32 %v2282, %v2454
        %v2456 = vmul.f32 %v2283, %v2454
        %v2457 = vmul.f32 %v2284, %v2454
        %v2458 = vmul.f32 %v2285, %v2454
        %v2459 = vmul.f32 %v2286, %v2454
        %v2460 = vmul.f32 %v2287, %v2454
        %v2461 = vmul.f32 %v2288, %v2454
        %v2462 = vmul.f32 %v2289, %v2454
        %v2463 = vmul.f32 %v2290, %v2454
        %v2464 = vmul.f32 %v2291, %v2454
        %v2465 = vmul.f32 %v2292, %v2454
        %v2466 = vmul.f32 %v2293, %v2454
        %v2467 = vmul.f32 %v2294, %v2454
        %v2468 = vmul.f32 %v2295, %v2454
        %v2469 = vmul.f32 %v2296, %v2454
        %v2470 = vmul.f32 %v2297, %v2454
        %v2471 = vadd.f32 %v2434, %v2455
        %v2472 = vadd.f32 %v2435, %v2456
        %v2473 = vadd.f32 %v2436, %v2457
        %v2474 = vadd.f32 %v2437, %v2458
        %v2475 = vadd.f32 %v2438, %v2459
        %v2476 = vadd.f32 %v2439, %v2460
        %v2477 = vadd.f32 %v2440, %v2461
        %v2478 = vadd.f32 %v2441, %v2462
        %v2479 = vadd.f32 %v2442, %v2463
        %v2480 = vadd.f32 %v2443, %v2464
        %v2481 = vadd.f32 %v2444, %v2465
        %v2482 = vadd.f32 %v2445, %v2466
        %v2483 = vadd.f32 %v2446, %v2467
        %v2484 = vadd.f32 %v2447, %v2468
        %v2485 = vadd.f32 %v2448, %v2469
        %v2486 = vadd.f32 %v2449, %v2470
        %v2487 = vld [vmem:[#allocation6 + $0x29] sm:$0x1]
        %v2488 = vlaneseq
        %v2489 = vshrl.u32 %v2488, 7
        %v2490 = vsub.s32 0, %v2489
        %v2491 = vrot.slane %v2487, %v2490
        %v2492 = vmul.f32 %v2284, %v2491
        %v2493 = vmul.f32 %v2285, %v2491
        %v2494 = vmul.f32 %v2286, %v2491
        %v2495 = vmul.f32 %v2287, %v2491
        %v2496 = vmul.f32 %v2288, %v2491
        %v2497 = vmul.f32 %v2289, %v2491
        %v2498 = vmul.f32 %v2290, %v2491
        %v2499 = vmul.f32 %v2291, %v2491
        %v2500 = vmul.f32 %v2292, %v2491
        %v2501 = vmul.f32 %v2293, %v2491
        %v2502 = vmul.f32 %v2294, %v2491
        %v2503 = vmul.f32 %v2295, %v2491
        %v2504 = vmul.f32 %v2296, %v2491
        %v2505 = vmul.f32 %v2297, %v2491
        %v2506 = vmul.f32 %v2298, %v2491
        %v2507 = vmul.f32 %v2299, %v2491
        %v2508 = vadd.f32 %v2471, %v2492
        %v2509 = vadd.f32 %v2472, %v2493
        %v2510 = vadd.f32 %v2473, %v2494
        %v2511 = vadd.f32 %v2474, %v2495
        %v2512 = vadd.f32 %v2475, %v2496
        %v2513 = vadd.f32 %v2476, %v2497
        %v2514 = vadd.f32 %v2477, %v2498
        %v2515 = vadd.f32 %v2478, %v2499
        %v2516 = vadd.f32 %v2479, %v2500
        %v2517 = vadd.f32 %v2480, %v2501
        %v2518 = vadd.f32 %v2481, %v2502
        %v2519 = vadd.f32 %v2482, %v2503
        %v2520 = vadd.f32 %v2483, %v2504
        %v2521 = vadd.f32 %v2484, %v2505
        %v2522 = vadd.f32 %v2485, %v2506
        %v2523 = vadd.f32 %v2486, %v2507
        %v2524 = vld [vmem:[#allocation6 + $0x30] sm:$0x1]
        %v2525 = vlaneseq
        %v2526 = vshrl.u32 %v2525, 7
        %v2527 = vsub.s32 0, %v2526
        %v2528 = vrot.slane %v2524, %v2527
        %v2529 = vmul.f32 %v2286, %v2528
        %v2530 = vmul.f32 %v2287, %v2528
        %v2531 = vmul.f32 %v2288, %v2528
        %v2532 = vmul.f32 %v2289, %v2528
        %v2533 = vmul.f32 %v2290, %v2528
        %v2534 = vmul.f32 %v2291, %v2528
        %v2535 = vmul.f32 %v2292, %v2528
        %v2536 = vmul.f32 %v2293, %v2528
        %v2537 = vmul.f32 %v2294, %v2528
        %v2538 = vmul.f32 %v2295, %v2528
        %v2539 = vmul.f32 %v2296, %v2528
        %v2540 = vmul.f32 %v2297, %v2528
        %v2541 = vmul.f32 %v2298, %v2528
        %v2542 = vmul.f32 %v2299, %v2528
        %v2543 = vmul.f32 %v2300, %v2528
        %v2544 = vmul.f32 %v2301, %v2528
        %v2545 = vadd.f32 %v2508, %v2529
        %v2546 = vadd.f32 %v2509, %v2530
        %v2547 = vadd.f32 %v2510, %v2531
        %v2548 = vadd.f32 %v2511, %v2532
        %v2549 = vadd.f32 %v2512, %v2533
        %v2550 = vadd.f32 %v2513, %v2534
        %v2551 = vadd.f32 %v2514, %v2535
        %v2552 = vadd.f32 %v2515, %v2536
        %v2553 = vadd.f32 %v2516, %v2537
        %v2554 = vadd.f32 %v2517, %v2538
        %v2555 = vadd.f32 %v2518, %v2539
        %v2556 = vadd.f32 %v2519, %v2540
        %v2557 = vadd.f32 %v2520, %v2541
        %v2558 = vadd.f32 %v2521, %v2542
        %v2559 = vadd.f32 %v2522, %v2543
        %v2560 = vadd.f32 %v2523, %v2544
        %v2561 = vld [vmem:[%s3] sm:$0x1]
        %v2563 = vlaneseq
        %v2564 = vshrl.u32 %v2563, 7
        %v2565 = vsub.s32 0, %v2564
        %v2566 = vrot.slane %v2561, %v2565
        %v2568 = vadd.f32 %v2545, %v2566
        %v2569 = vadd.f32 %v2546, %v2566
        %v2570 = vadd.f32 %v2547, %v2566
        %v2571 = vadd.f32 %v2548, %v2566
        %v2572 = vadd.f32 %v2549, %v2566
        %v2573 = vadd.f32 %v2550, %v2566
        %v2574 = vadd.f32 %v2551, %v2566
        %v2575 = vadd.f32 %v2552, %v2566
        %v2576 = vadd.f32 %v2553, %v2566
        %v2577 = vadd.f32 %v2554, %v2566
        %v2578 = vadd.f32 %v2555, %v2566
        %v2579 = vadd.f32 %v2556, %v2566
        %v2580 = vadd.f32 %v2557, %v2566
        %v2581 = vadd.f32 %v2558, %v2566
        %v2582 = vadd.f32 %v2559, %v2566
        %v2583 = vadd.f32 %v2560, %v2566
        %2584 = vadd.xlane.f32.xlu0 %v2568
        %v2585 = vpop.xlane.xlu0 %2584
        %2586 = vadd.xlane.f32.xlu0 %v2569
        %v2587 = vpop.xlane.xlu0 %2586
        %2588 = vadd.xlane.f32.xlu0 %v2570
        %v2589 = vpop.xlane.xlu0 %2588
        %2590 = vadd.xlane.f32.xlu0 %v2571
        %v2591 = vpop.xlane.xlu0 %2590
        %2592 = vadd.xlane.f32.xlu0 %v2572
        %v2593 = vpop.xlane.xlu0 %2592
        %2594 = vadd.xlane.f32.xlu0 %v2573
        %v2595 = vpop.xlane.xlu0 %2594
        %2596 = vadd.xlane.f32.xlu0 %v2574
        %v2597 = vpop.xlane.xlu0 %2596
        %2598 = vadd.xlane.f32.xlu0 %v2575
        %v2599 = vpop.xlane.xlu0 %2598
        %2600 = vadd.xlane.f32.xlu0 %v2576
        %v2601 = vpop.xlane.xlu0 %2600
        %2602 = vadd.xlane.f32.xlu0 %v2577
        %v2603 = vpop.xlane.xlu0 %2602
        %2604 = vadd.xlane.f32.xlu0 %v2578
        %v2605 = vpop.xlane.xlu0 %2604
        %2606 = vadd.xlane.f32.xlu0 %v2579
        %v2607 = vpop.xlane.xlu0 %2606
        %2608 = vadd.xlane.f32.xlu0 %v2580
        %v2609 = vpop.xlane.xlu0 %2608
        %2610 = vadd.xlane.f32.xlu0 %v2581
        %v2611 = vpop.xlane.xlu0 %2610
        %2612 = vadd.xlane.f32.xlu0 %v2582
        %v2613 = vpop.xlane.xlu0 %2612
        %2614 = vadd.xlane.f32.xlu0 %v2583
        %v2615 = vpop.xlane.xlu0 %2614
        %v2616 = vrcp.pop 128.0
        %v2617 = vmul.f32 %v2585, %v2616
        %v2618 = vmul.f32 %v2587, %v2616
        %v2619 = vmul.f32 %v2589, %v2616
        %v2620 = vmul.f32 %v2591, %v2616
        %v2621 = vmul.f32 %v2593, %v2616
        %v2622 = vmul.f32 %v2595, %v2616
        %v2623 = vmul.f32 %v2597, %v2616
        %v2624 = vmul.f32 %v2599, %v2616
        %v2625 = vmul.f32 %v2601, %v2616
        %v2626 = vmul.f32 %v2603, %v2616
        %v2627 = vmul.f32 %v2605, %v2616
        %v2628 = vmul.f32 %v2607, %v2616
        %v2629 = vmul.f32 %v2609, %v2616
        %v2630 = vmul.f32 %v2611, %v2616
        %v2631 = vmul.f32 %v2613, %v2616
        %v2632 = vmul.f32 %v2615, %v2616
        %v2633 = vsub.f32 %v2568, %v2617
        %v2634 = vsub.f32 %v2569, %v2618
        %v2635 = vsub.f32 %v2570, %v2619
        %v2636 = vsub.f32 %v2571, %v2620
        %v2637 = vsub.f32 %v2572, %v2621
        %v2638 = vsub.f32 %v2573, %v2622
        %v2639 = vsub.f32 %v2574, %v2623
        %v2640 = vsub.f32 %v2575, %v2624
        %v2641 = vsub.f32 %v2576, %v2625
        %v2642 = vsub.f32 %v2577, %v2626
        %v2643 = vsub.f32 %v2578, %v2627
        %v2644 = vsub.f32 %v2579, %v2628
        %v2645 = vsub.f32 %v2580, %v2629
        %v2646 = vsub.f32 %v2581, %v2630
        %v2647 = vsub.f32 %v2582, %v2631
        %v2648 = vsub.f32 %v2583, %v2632
        %v2649 = vmul.f32 %v2633, %v2633
        %v2650 = vmul.f32 %v2634, %v2634
        %v2651 = vmul.f32 %v2635, %v2635
        %v2652 = vmul.f32 %v2636, %v2636
        %v2653 = vmul.f32 %v2637, %v2637
        %v2654 = vmul.f32 %v2638, %v2638
        %v2655 = vmul.f32 %v2639, %v2639
        %v2656 = vmul.f32 %v2640, %v2640
        %v2657 = vmul.f32 %v2641, %v2641
        %v2658 = vmul.f32 %v2642, %v2642
        %v2659 = vmul.f32 %v2643, %v2643
        %v2660 = vmul.f32 %v2644, %v2644
        %v2661 = vmul.f32 %v2645, %v2645
        %v2662 = vmul.f32 %v2646, %v2646
        %v2663 = vmul.f32 %v2647, %v2647
        %v2664 = vmul.f32 %v2648, %v2648
        %2665 = vadd.xlane.f32.xlu0 %v2649
        %v2666 = vpop.xlane.xlu0 %2665
        %2667 = vadd.xlane.f32.xlu0 %v2650
        %v2668 = vpop.xlane.xlu0 %2667
        %2669 = vadd.xlane.f32.xlu0 %v2651
        %v2670 = vpop.xlane.xlu0 %2669
        %2671 = vadd.xlane.f32.xlu0 %v2652
        %v2672 = vpop.xlane.xlu0 %2671
        %2673 = vadd.xlane.f32.xlu0 %v2653
        %v2674 = vpop.xlane.xlu0 %2673
        %2675 = vadd.xlane.f32.xlu0 %v2654
        %v2676 = vpop.xlane.xlu0 %2675
        %2677 = vadd.xlane.f32.xlu0 %v2655
        %v2678 = vpop.xlane.xlu0 %2677
        %2679 = vadd.xlane.f32.xlu0 %v2656
        %v2680 = vpop.xlane.xlu0 %2679
        %2681 = vadd.xlane.f32.xlu0 %v2657
        %v2682 = vpop.xlane.xlu0 %2681
        %2683 = vadd.xlane.f32.xlu0 %v2658
        %v2684 = vpop.xlane.xlu0 %2683
        %2685 = vadd.xlane.f32.xlu0 %v2659
        %v2686 = vpop.xlane.xlu0 %2685
        %2687 = vadd.xlane.f32.xlu0 %v2660
        %v2688 = vpop.xlane.xlu0 %2687
        %2689 = vadd.xlane.f32.xlu0 %v2661
        %v2690 = vpop.xlane.xlu0 %2689
        %2691 = vadd.xlane.f32.xlu0 %v2662
        %v2692 = vpop.xlane.xlu0 %2691
        %2693 = vadd.xlane.f32.xlu0 %v2663
        %v2694 = vpop.xlane.xlu0 %2693
        %2695 = vadd.xlane.f32.xlu0 %v2664
        %v2696 = vpop.xlane.xlu0 %2695
        %v2697 = vmul.f32 %v2666, %v2616
        %v2698 = vmul.f32 %v2668, %v2616
        %v2699 = vmul.f32 %v2670, %v2616
        %v2700 = vmul.f32 %v2672, %v2616
        %v2701 = vmul.f32 %v2674, %v2616
        %v2702 = vmul.f32 %v2676, %v2616
        %v2703 = vmul.f32 %v2678, %v2616
        %v2704 = vmul.f32 %v2680, %v2616
        %v2705 = vmul.f32 %v2682, %v2616
        %v2706 = vmul.f32 %v2684, %v2616
        %v2707 = vmul.f32 %v2686, %v2616
        %v2708 = vmul.f32 %v2688, %v2616
        %v2709 = vmul.f32 %v2690, %v2616
        %v2710 = vmul.f32 %v2692, %v2616
        %v2711 = vmul.f32 %v2694, %v2616
        %v2712 = vmul.f32 %v2696, %v2616
        %v2713 = vadd.f32 %v2697, 1e-05
        %v2714 = vadd.f32 %v2698, 1e-05
        %v2715 = vadd.f32 %v2699, 1e-05
        %v2716 = vadd.f32 %v2700, 1e-05
        %v2717 = vadd.f32 %v2701, 1e-05
        %v2718 = vadd.f32 %v2702, 1e-05
        %v2719 = vadd.f32 %v2703, 1e-05
        %v2720 = vadd.f32 %v2704, 1e-05
        %v2721 = vadd.f32 %v2705, 1e-05
        %v2722 = vadd.f32 %v2706, 1e-05
        %v2723 = vadd.f32 %v2707, 1e-05
        %v2724 = vadd.f32 %v2708, 1e-05
        %v2725 = vadd.f32 %v2709, 1e-05
        %v2726 = vadd.f32 %v2710, 1e-05
        %v2727 = vadd.f32 %v2711, 1e-05
        %v2728 = vadd.f32 %v2712, 1e-05
        %v2729 = vrsqrt.pop %v2713
        %v2730 = vrsqrt.pop %v2714
        %v2731 = vrsqrt.pop %v2715
        %v2732 = vrsqrt.pop %v2716
        %v2733 = vrsqrt.pop %v2717
        %v2734 = vrsqrt.pop %v2718
        %v2735 = vrsqrt.pop %v2719
        %v2736 = vrsqrt.pop %v2720
        %v2737 = vrsqrt.pop %v2721
        %v2738 = vrsqrt.pop %v2722
        %v2739 = vrsqrt.pop %v2723
        %v2740 = vrsqrt.pop %v2724
        %v2741 = vrsqrt.pop %v2725
        %v2742 = vrsqrt.pop %v2726
        %v2743 = vrsqrt.pop %v2727
        %v2744 = vrsqrt.pop %v2728
        %v2745 = vmul.f32 %v2633, %v2729
        %v2746 = vmul.f32 %v2634, %v2730
        %v2747 = vmul.f32 %v2635, %v2731
        %v2748 = vmul.f32 %v2636, %v2732
        %v2749 = vmul.f32 %v2637, %v2733
        %v2750 = vmul.f32 %v2638, %v2734
        %v2751 = vmul.f32 %v2639, %v2735
        %v2752 = vmul.f32 %v2640, %v2736
        %v2753 = vmul.f32 %v2641, %v2737
        %v2754 = vmul.f32 %v2642, %v2738
        %v2755 = vmul.f32 %v2643, %v2739
        %v2756 = vmul.f32 %v2644, %v2740
        %v2757 = vmul.f32 %v2645, %v2741
        %v2758 = vmul.f32 %v2646, %v2742
        %v2759 = vmul.f32 %v2647, %v2743
        %v2760 = vmul.f32 %v2648, %v2744
        %v2761 = vld [vmem:[%s398] sm:$0x7]
        %v2762 = vadd.f32 %v2761, 1.0
        %v2763 = vlaneseq
        %v2764 = vshrl.u32 %v2763, 7
        %v2765 = vsub.s32 0, %v2764
        %v2766 = vrot.slane %v2762, %v2765
        %v2767 = vmul.f32 %v2766, %v2745
        %v2768 = vmul.f32 %v2766, %v2746
        %v2769 = vmul.f32 %v2766, %v2747
        %v2770 = vmul.f32 %v2766, %v2748
        %v2771 = vmul.f32 %v2766, %v2749
        %v2772 = vmul.f32 %v2766, %v2750
        %v2773 = vmul.f32 %v2766, %v2751
        %v2774 = vmul.f32 %v2766, %v2752
        %v2775 = vmul.f32 %v2766, %v2753
        %v2776 = vmul.f32 %v2766, %v2754
        %v2777 = vmul.f32 %v2766, %v2755
        %v2778 = vmul.f32 %v2766, %v2756
        %v2779 = vmul.f32 %v2766, %v2757
        %v2780 = vmul.f32 %v2766, %v2758
        %v2781 = vmul.f32 %v2766, %v2759
        %v2782 = vmul.f32 %v2766, %v2760
        %v2783 = vlaneseq
        %v2784 = vshrl.u32 %v2783, 7
        %v2785 = vsub.s32 1, %v2784
        %v2786 = vrot.slane %v2761, %v2785
        %v2787 = vadd.f32 %v2767, %v2786
        %v2788 = vadd.f32 %v2768, %v2786
        %v2789 = vadd.f32 %v2769, %v2786
        %v2790 = vadd.f32 %v2770, %v2786
        %v2791 = vadd.f32 %v2771, %v2786
        %v2792 = vadd.f32 %v2772, %v2786
        %v2793 = vadd.f32 %v2773, %v2786
        %v2794 = vadd.f32 %v2774, %v2786
        %v2795 = vadd.f32 %v2775, %v2786
        %v2796 = vadd.f32 %v2776, %v2786
        %v2797 = vadd.f32 %v2777, %v2786
        %v2798 = vadd.f32 %v2778, %v2786
        %v2799 = vadd.f32 %v2779, %v2786
        %v2800 = vadd.f32 %v2780, %v2786
        %v2801 = vadd.f32 %v2781, %v2786
        %v2802 = vadd.f32 %v2782, %v2786
        %v2803 = vpack.c.bf16 %v2788, %v2787
        %v2804 = vpack.c.bf16 %v2790, %v2789
        %v2805 = vpack.c.bf16 %v2792, %v2791
        %v2806 = vpack.c.bf16 %v2794, %v2793
        %v2807 = vpack.c.bf16 %v2796, %v2795
        %v2808 = vpack.c.bf16 %v2798, %v2797
        %v2809 = vpack.c.bf16 %v2800, %v2799
        %v2810 = vpack.c.bf16 %v2802, %v2801
        %v2811 = vld [vmem:[#allocation8] sm:$0xff]
        %v2812 = vld [vmem:[#allocation8 + $0x8] sm:$0xff]
        %v2813 = vld [vmem:[#allocation8 + $0x10] sm:$0xff]
        %v2814 = vld [vmem:[#allocation8 + $0x18] sm:$0xff]
        %v2815 = vld [vmem:[#allocation8 + $0x20] sm:$0xff]
        %v2816 = vld [vmem:[#allocation8 + $0x28] sm:$0xff]
        %v2817 = vld [vmem:[#allocation8 + $0x30] sm:$0xff]
        %v2818 = vld [vmem:[#allocation8 + $0x38] sm:$0xff]
        %v2819 = vld [vmem:[#allocation8 + $0x40] sm:$0xff]
        %v2820 = vld [vmem:[#allocation8 + $0x48] sm:$0xff]
        %v2821 = vld [vmem:[#allocation8 + $0x50] sm:$0xff]
        %v2822 = vld [vmem:[#allocation8 + $0x58] sm:$0xff]
        %v2823 = vld [vmem:[#allocation8 + $0x60] sm:$0xff]
        %v2824 = vld [vmem:[#allocation8 + $0x68] sm:$0xff]
        %v2825 = vld [vmem:[#allocation8 + $0x70] sm:$0xff]
        %v2826 = vld [vmem:[#allocation8 + $0x78] sm:$0xff]
        %v2827 = vld [vmem:[#allocation8 + $0x80] sm:$0xff]
        %v2828 = vld [vmem:[#allocation8 + $0x88] sm:$0xff]
        %v2829 = vld [vmem:[#allocation8 + $0x90] sm:$0xff]
        %v2830 = vld [vmem:[#allocation8 + $0x98] sm:$0xff]
        %v2831 = vld [vmem:[#allocation8 + $0xa0] sm:$0xff]
        %v2832 = vld [vmem:[#allocation8 + $0xa8] sm:$0xff]
        %v2833 = vld [vmem:[#allocation8 + $0xb0] sm:$0xff]
        %v2834 = vld [vmem:[#allocation8 + $0xb8] sm:$0xff]
        %v2835 = vld [vmem:[#allocation8 + $0xc0] sm:$0xff]
        %v2836 = vld [vmem:[#allocation8 + $0xc8] sm:$0xff]
        %v2837 = vld [vmem:[#allocation8 + $0xd0] sm:$0xff]
        %v2838 = vld [vmem:[#allocation8 + $0xd8] sm:$0xff]
        %v2839 = vld [vmem:[#allocation8 + $0xe0] sm:$0xff]
        %v2840 = vld [vmem:[#allocation8 + $0xe8] sm:$0xff]
        %v2841 = vld [vmem:[#allocation8 + $0xf0] sm:$0xff]
        %v2842 = vld [vmem:[#allocation8 + $0xf8] sm:$0xff]
        %v2843 = vld [vmem:[%s5] sm:$0xf]
        %v2845 = vlaneseq
        %v2846 = vshrl.u32 %v2845, 7
        %v2847 = vsub.s32 0, %v2846
        %v2848 = vrot.slane %v2843, %v2847
        %v2849 = vlaneseq
        %v2850 = vshrl.u32 %v2849, 7
        %v2851 = vsub.s32 1, %v2850
        %v2852 = vrot.slane %v2843, %v2851
        %v2853 = vlaneseq
        %v2854 = vshrl.u32 %v2853, 7
        %v2855 = vsub.s32 2, %v2854
        %v2856 = vrot.slane %v2843, %v2855
        %v2857 = vlaneseq
        %v2858 = vshrl.u32 %v2857, 7
        %v2859 = vsub.s32 3, %v2858
        %v2860 = vrot.slane %v2843, %v2859
        %v2897 = vunpack.c.l.b16 %v2811
        %v2898 = vunpack.c.h.b16 %v2811
        %v2899 = vunpack.c.l.b16 %v2812
        %v2900 = vunpack.c.h.b16 %v2812
        %v2901 = vunpack.c.l.b16 %v2813
        %v2902 = vunpack.c.h.b16 %v2813
        %v2903 = vunpack.c.l.b16 %v2814
        %v2904 = vunpack.c.h.b16 %v2814
        %v2905 = vunpack.c.l.b16 %v2815
        %v2906 = vunpack.c.h.b16 %v2815
        %v2907 = vunpack.c.l.b16 %v2816
        %v2908 = vunpack.c.h.b16 %v2816
        %v2909 = vunpack.c.l.b16 %v2817
        %v2910 = vunpack.c.h.b16 %v2817
        %v2911 = vunpack.c.l.b16 %v2818
        %v2912 = vunpack.c.h.b16 %v2818
        %v2913 = vunpack.c.l.b16 %v2819
        %v2914 = vunpack.c.h.b16 %v2819
        %v2915 = vunpack.c.l.b16 %v2820
        %v2916 = vunpack.c.h.b16 %v2820
        %v2917 = vunpack.c.l.b16 %v2821
        %v2918 = vunpack.c.h.b16 %v2821
        %v2919 = vunpack.c.l.b16 %v2822
        %v2920 = vunpack.c.h.b16 %v2822
        %v2921 = vunpack.c.l.b16 %v2823
        %v2922 = vunpack.c.h.b16 %v2823
        %v2923 = vunpack.c.l.b16 %v2824
        %v2924 = vunpack.c.h.b16 %v2824
        %v2925 = vunpack.c.l.b16 %v2825
        %v2926 = vunpack.c.h.b16 %v2825
        %v2927 = vunpack.c.l.b16 %v2826
        %v2928 = vunpack.c.h.b16 %v2826
        %v2929 = vunpack.c.l.b16 %v2827
        %v2930 = vunpack.c.h.b16 %v2827
        %v2931 = vunpack.c.l.b16 %v2828
        %v2932 = vunpack.c.h.b16 %v2828
        %v2933 = vunpack.c.l.b16 %v2829
        %v2934 = vunpack.c.h.b16 %v2829
        %v2935 = vunpack.c.l.b16 %v2830
        %v2936 = vunpack.c.h.b16 %v2830
        %v2937 = vunpack.c.l.b16 %v2831
        %v2938 = vunpack.c.h.b16 %v2831
        %v2939 = vunpack.c.l.b16 %v2832
        %v2940 = vunpack.c.h.b16 %v2832
        %v2941 = vunpack.c.l.b16 %v2833
        %v2942 = vunpack.c.h.b16 %v2833
        %v2943 = vunpack.c.l.b16 %v2834
        %v2944 = vunpack.c.h.b16 %v2834
        %v2945 = vunpack.c.l.b16 %v2835
        %v2946 = vunpack.c.h.b16 %v2835
        %v2947 = vunpack.c.l.b16 %v2836
        %v2948 = vunpack.c.h.b16 %v2836
        %v2949 = vunpack.c.l.b16 %v2837
        %v2950 = vunpack.c.h.b16 %v2837
        %v2951 = vunpack.c.l.b16 %v2838
        %v2952 = vunpack.c.h.b16 %v2838
        %v2953 = vunpack.c.l.b16 %v2839
        %v2954 = vunpack.c.h.b16 %v2839
        %v2955 = vunpack.c.l.b16 %v2840
        %v2956 = vunpack.c.h.b16 %v2840
        %v2957 = vunpack.c.l.b16 %v2841
        %v2958 = vunpack.c.h.b16 %v2841
        %v2959 = vunpack.c.l.b16 %v2842
        %v2960 = vunpack.c.h.b16 %v2842
        %v2961 = vpack.c.b16 %v2901, %v2897
        %v2962 = vpack.c.b16 %v2902, %v2898
        %v2963 = vpack.c.b16 %v2903, %v2899
        %v2964 = vpack.c.b16 %v2904, %v2900
        %v2965 = vpack.c.b16 %v2909, %v2905
        %v2966 = vpack.c.b16 %v2910, %v2906
        %v2967 = vpack.c.b16 %v2911, %v2907
        %v2968 = vpack.c.b16 %v2912, %v2908
        %v2969 = vpack.c.b16 %v2917, %v2913
        %v2970 = vpack.c.b16 %v2918, %v2914
        %v2971 = vpack.c.b16 %v2919, %v2915
        %v2972 = vpack.c.b16 %v2920, %v2916
        %v2973 = vpack.c.b16 %v2925, %v2921
        %v2974 = vpack.c.b16 %v2926, %v2922
        %v2975 = vpack.c.b16 %v2927, %v2923
        %v2976 = vpack.c.b16 %v2928, %v2924
        %v2977 = vpack.c.b16 %v2933, %v2929
        %v2978 = vpack.c.b16 %v2934, %v2930
        %v2979 = vpack.c.b16 %v2935, %v2931
        %v2980 = vpack.c.b16 %v2936, %v2932
        %v2981 = vpack.c.b16 %v2941, %v2937
        %v2982 = vpack.c.b16 %v2942, %v2938
        %v2983 = vpack.c.b16 %v2943, %v2939
        %v2984 = vpack.c.b16 %v2944, %v2940
        %v2985 = vpack.c.b16 %v2949, %v2945
        %v2986 = vpack.c.b16 %v2950, %v2946
        %v2987 = vpack.c.b16 %v2951, %v2947
        %v2988 = vpack.c.b16 %v2952, %v2948
        %v2989 = vpack.c.b16 %v2957, %v2953
        %v2990 = vpack.c.b16 %v2958, %v2954
        %v2991 = vpack.c.b16 %v2959, %v2955
        %v2992 = vpack.c.b16 %v2960, %v2956
        %3025 = vmatprep.subr.bf16.mxu0 %v2962
        %3026 = vmatpush1.bf16.msra.mxu0 %v2961
        %3027 = vmatprep.subr.bf16.mxu0 %v2966
        %3028 = vmatpush1.bf16.msra.mxu0 %v2965
        %3029 = vmatprep.subr.bf16.mxu0 %v2970
        %3030 = vmatpush1.bf16.msra.mxu0 %v2969
        %3031 = vmatprep.subr.bf16.mxu0 %v2974
        %3032 = vmatpush1.bf16.msra.mxu0 %v2973
        %3033 = vmatprep.subr.bf16.mxu0 %v2978
        %3034 = vmatpush1.bf16.msra.mxu0 %v2977
        %3035 = vmatprep.subr.bf16.mxu0 %v2982
        %3036 = vmatpush1.bf16.msra.mxu0 %v2981
        %3037 = vmatprep.subr.bf16.mxu0 %v2986
        %3038 = vmatpush1.bf16.msra.mxu0 %v2985
        %3039 = vmatprep.subr.bf16.mxu0 %v2990
        %3040 = vmatpush1.bf16.msra.mxu0 %v2989
        %3041 = vmatprep.subr.bf16.mxu0 0
        %3042 = vmatpush1.bf16.msra.mxu0 0
        %3043 = vmatprep.subr.bf16.mxu0 0
        %3044 = vmatpush1.bf16.msra.mxu0 0
        %3045 = vmatprep.subr.bf16.mxu0 0
        %3046 = vmatpush1.bf16.msra.mxu0 0
        %3047 = vmatprep.subr.bf16.mxu0 0
        %3048 = vmatpush1.bf16.msra.mxu0 0
        %3049 = vmatprep.subr.bf16.mxu0 0
        %3050 = vmatpush1.bf16.msra.mxu0 0
        %3051 = vmatprep.subr.bf16.mxu0 0
        %3052 = vmatpush1.bf16.msra.mxu0 0
        %3053 = vmatprep.subr.bf16.mxu0 0
        %3054 = vmatpush1.bf16.msra.mxu0 0
        %3055 = vmatprep.subr.bf16.mxu0 0
        %3056 = vmatpush1.bf16.msra.mxu0 0
        %3057 = vmatprep.mubr.bf16.mxu0 0
        %3058 = vmatmul.mubr.bf16.gmra.mrb[0].mxu0 %v2803
        %v3059 = vpop.f32.mrb[0].mxu0
        %v3060 = vadd.f32 %v2848, %v3059
        %v3061 = vpop.f32.mrb[0].mxu0
        %v3062 = vadd.f32 %v2852, %v3061
        %v3063 = vpop.f32.mrb[0].mxu0
        %v3064 = vadd.f32 %v2848, %v3063
        %v3065 = vpop.f32.mrb[0].mxu0
        %v3066 = vadd.f32 %v2852, %v3065
        %3067 = vmatprep.mubr.bf16.mxu0 0
        %3068 = vmatmul.mubr.bf16.gmra.mrb[0].mxu0 %v2804
        %v3069 = vpop.f32.mrb[0].mxu0
        %v3070 = vadd.f32 %v2848, %v3069
        %v3071 = vpop.f32.mrb[0].mxu0
        %v3072 = vadd.f32 %v2852, %v3071
        %v3073 = vpop.f32.mrb[0].mxu0
        %v3074 = vadd.f32 %v2848, %v3073
        %v3075 = vpop.f32.mrb[0].mxu0
        %v3076 = vadd.f32 %v2852, %v3075
        %3077 = vmatprep.mubr.bf16.mxu0 0
        %3078 = vmatmul.mubr.bf16.gmra.mrb[0].mxu0 %v2805
        %v3079 = vpop.f32.mrb[0].mxu0
        %v3080 = vadd.f32 %v2848, %v3079
        %v3081 = vpop.f32.mrb[0].mxu0
        %v3082 = vadd.f32 %v2852, %v3081
        %v3083 = vpop.f32.mrb[0].mxu0
        %v3084 = vadd.f32 %v2848, %v3083
        %v3085 = vpop.f32.mrb[0].mxu0
        %v3086 = vadd.f32 %v2852, %v3085
        %3087 = vmatprep.mubr.bf16.mxu0 0
        %3088 = vmatmul.mubr.bf16.gmra.mrb[0].mxu0 %v2806
        %v3089 = vpop.f32.mrb[0].mxu0
        %v3090 = vadd.f32 %v2848, %v3089
        %v3091 = vpop.f32.mrb[0].mxu0
        %v3092 = vadd.f32 %v2852, %v3091
        %v3093 = vpop.f32.mrb[0].mxu0
        %v3094 = vadd.f32 %v2848, %v3093
        %v3095 = vpop.f32.mrb[0].mxu0
        %v3096 = vadd.f32 %v2852, %v3095
        %3097 = vmatprep.mubr.bf16.mxu0 0
        %3098 = vmatmul.mubr.bf16.gmra.mrb[0].mxu0 %v2807
        %v3099 = vpop.f32.mrb[0].mxu0
        %v3100 = vadd.f32 %v2848, %v3099
        %v3101 = vpop.f32.mrb[0].mxu0
        %v3102 = vadd.f32 %v2852, %v3101
        %v3103 = vpop.f32.mrb[0].mxu0
        %v3104 = vadd.f32 %v2848, %v3103
        %v3105 = vpop.f32.mrb[0].mxu0
        %v3106 = vadd.f32 %v2852, %v3105
        %3107 = vmatprep.mubr.bf16.mxu0 0
        %3108 = vmatmul.mubr.bf16.gmra.mrb[0].mxu0 %v2808
        %v3109 = vpop.f32.mrb[0].mxu0
        %v3110 = vadd.f32 %v2848, %v3109
        %v3111 = vpop.f32.mrb[0].mxu0
        %v3112 = vadd.f32 %v2852, %v3111
        %v3113 = vpop.f32.mrb[0].mxu0
        %v3114 = vadd.f32 %v2848, %v3113
        %v3115 = vpop.f32.mrb[0].mxu0
        %v3116 = vadd.f32 %v2852, %v3115
        %3117 = vmatprep.mubr.bf16.mxu0 0
        %3118 = vmatmul.mubr.bf16.gmra.mrb[0].mxu0 %v2809
        %v3119 = vpop.f32.mrb[0].mxu0
        %v3120 = vadd.f32 %v2848, %v3119
        %v3121 = vpop.f32.mrb[0].mxu0
        %v3122 = vadd.f32 %v2852, %v3121
        %v3123 = vpop.f32.mrb[0].mxu0
        %v3124 = vadd.f32 %v2848, %v3123
        %v3125 = vpop.f32.mrb[0].mxu0
        %v3126 = vadd.f32 %v2852, %v3125
        %3127 = vmatprep.mubr.bf16.mxu0 0
        %3128 = vmatmul.mubr.bf16.gmra.mrb[0].mxu0 %v2810
        %v3129 = vpop.f32.mrb[0].mxu0
        %v3130 = vadd.f32 %v2848, %v3129
        %v3131 = vpop.f32.mrb[0].mxu0
        %v3132 = vadd.f32 %v2852, %v3131
        %v3133 = vpop.f32.mrb[0].mxu0
        %v3134 = vadd.f32 %v2848, %v3133
        %v3135 = vpop.f32.mrb[0].mxu0
        %v3136 = vadd.f32 %v2852, %v3135
        %3137 = vdwg.mxu0
        %3138 = vmatprep.subr.bf16.mxu0 %v2964
        %3139 = vmatpush1.bf16.msra.mxu0 %v2963
        %3140 = vmatprep.subr.bf16.mxu0 %v2968
        %3141 = vmatpush1.bf16.msra.mxu0 %v2967
        %3142 = vmatprep.subr.bf16.mxu0 %v2972
        %3143 = vmatpush1.bf16.msra.mxu0 %v2971
        %3144 = vmatprep.subr.bf16.mxu0 %v2976
        %3145 = vmatpush1.bf16.msra.mxu0 %v2975
        %3146 = vmatprep.subr.bf16.mxu0 %v2980
        %3147 = vmatpush1.bf16.msra.mxu0 %v2979
        %3148 = vmatprep.subr.bf16.mxu0 %v2984
        %3149 = vmatpush1.bf16.msra.mxu0 %v2983
        %3150 = vmatprep.subr.bf16.mxu0 %v2988
        %3151 = vmatpush1.bf16.msra.mxu0 %v2987
        %3152 = vmatprep.subr.bf16.mxu0 %v2992
        %3153 = vmatpush1.bf16.msra.mxu0 %v2991
        %3154 = vmatprep.subr.bf16.mxu0 0
        %3155 = vmatpush1.bf16.msra.mxu0 0
        %3156 = vmatprep.subr.bf16.mxu0 0
        %3157 = vmatpush1.bf16.msra.mxu0 0
        %3158 = vmatprep.subr.bf16.mxu0 0
        %3159 = vmatpush1.bf16.msra.mxu0 0
        %3160 = vmatprep.subr.bf16.mxu0 0
        %3161 = vmatpush1.bf16.msra.mxu0 0
        %3162 = vmatprep.subr.bf16.mxu0 0
        %3163 = vmatpush1.bf16.msra.mxu0 0
        %3164 = vmatprep.subr.bf16.mxu0 0
        %3165 = vmatpush1.bf16.msra.mxu0 0
        %3166 = vmatprep.subr.bf16.mxu0 0
        %3167 = vmatpush1.bf16.msra.mxu0 0
        %3168 = vmatprep.subr.bf16.mxu0 0
        %3169 = vmatpush1.bf16.msra.mxu0 0
        %3170 = vmatprep.mubr.bf16.mxu0 0
        %3171 = vmatmul.mubr.bf16.gmra.mrb[0].mxu0 %v2803
        %v3172 = vpop.f32.mrb[0].mxu0
        %v3173 = vadd.f32 %v2856, %v3172
        %v3174 = vpop.f32.mrb[0].mxu0
        %v3175 = vadd.f32 %v2860, %v3174
        %v3176 = vpop.f32.mrb[0].mxu0
        %v3177 = vadd.f32 %v2856, %v3176
        %v3178 = vpop.f32.mrb[0].mxu0
        %v3179 = vadd.f32 %v2860, %v3178
        %3180 = vmatprep.mubr.bf16.mxu0 0
        %3181 = vmatmul.mubr.bf16.gmra.mrb[0].mxu0 %v2804
        %v3182 = vpop.f32.mrb[0].mxu0
        %v3183 = vadd.f32 %v2856, %v3182
        %v3184 = vpop.f32.mrb[0].mxu0
        %v3185 = vadd.f32 %v2860, %v3184
        %v3186 = vpop.f32.mrb[0].mxu0
        %v3187 = vadd.f32 %v2856, %v3186
        %v3188 = vpop.f32.mrb[0].mxu0
        %v3189 = vadd.f32 %v2860, %v3188
        %3190 = vmatprep.mubr.bf16.mxu0 0
        %3191 = vmatmul.mubr.bf16.gmra.mrb[0].mxu0 %v2805
        %v3192 = vpop.f32.mrb[0].mxu0
        %v3193 = vadd.f32 %v2856, %v3192
        %v3194 = vpop.f32.mrb[0].mxu0
        %v3195 = vadd.f32 %v2860, %v3194
        %v3196 = vpop.f32.mrb[0].mxu0
        %v3197 = vadd.f32 %v2856, %v3196
        %v3198 = vpop.f32.mrb[0].mxu0
        %v3199 = vadd.f32 %v2860, %v3198
        %3200 = vmatprep.mubr.bf16.mxu0 0
        %3201 = vmatmul.mubr.bf16.gmra.mrb[0].mxu0 %v2806
        %v3202 = vpop.f32.mrb[0].mxu0
        %v3203 = vadd.f32 %v2856, %v3202
        %v3204 = vpop.f32.mrb[0].mxu0
        %v3205 = vadd.f32 %v2860, %v3204
        %v3206 = vpop.f32.mrb[0].mxu0
        %v3207 = vadd.f32 %v2856, %v3206
        %v3208 = vpop.f32.mrb[0].mxu0
        %v3209 = vadd.f32 %v2860, %v3208
        %3210 = vmatprep.mubr.bf16.mxu0 0
        %3211 = vmatmul.mubr.bf16.gmra.mrb[0].mxu0 %v2807
        %v3212 = vpop.f32.mrb[0].mxu0
        %v3213 = vadd.f32 %v2856, %v3212
        %v3214 = vpop.f32.mrb[0].mxu0
        %v3215 = vadd.f32 %v2860, %v3214
        %v3216 = vpop.f32.mrb[0].mxu0
        %v3217 = vadd.f32 %v2856, %v3216
        %v3218 = vpop.f32.mrb[0].mxu0
        %v3219 = vadd.f32 %v2860, %v3218
        %3220 = vmatprep.mubr.bf16.mxu0 0
        %3221 = vmatmul.mubr.bf16.gmra.mrb[0].mxu0 %v2808
        %v3222 = vpop.f32.mrb[0].mxu0
        %v3223 = vadd.f32 %v2856, %v3222
        %v3224 = vpop.f32.mrb[0].mxu0
        %v3225 = vadd.f32 %v2860, %v3224
        %v3226 = vpop.f32.mrb[0].mxu0
        %v3227 = vadd.f32 %v2856, %v3226
        %v3228 = vpop.f32.mrb[0].mxu0
        %v3229 = vadd.f32 %v2860, %v3228
        %3230 = vmatprep.mubr.bf16.mxu0 0
        %3231 = vmatmul.mubr.bf16.gmra.mrb[0].mxu0 %v2809
        %v3232 = vpop.f32.mrb[0].mxu0
        %v3233 = vadd.f32 %v2856, %v3232
        %v3234 = vpop.f32.mrb[0].mxu0
        %v3235 = vadd.f32 %v2860, %v3234
        %v3236 = vpop.f32.mrb[0].mxu0
        %v3237 = vadd.f32 %v2856, %v3236
        %v3238 = vpop.f32.mrb[0].mxu0
        %v3239 = vadd.f32 %v2860, %v3238
        %3240 = vmatprep.mubr.bf16.mxu0 0
        %3241 = vmatmul.mubr.bf16.gmra.mrb[0].mxu0 %v2810
        %v3242 = vpop.f32.mrb[0].mxu0
        %v3243 = vadd.f32 %v2856, %v3242
        %v3244 = vpop.f32.mrb[0].mxu0
        %v3245 = vadd.f32 %v2860, %v3244
        %v3246 = vpop.f32.mrb[0].mxu0
        %v3247 = vadd.f32 %v2856, %v3246
        %v3248 = vpop.f32.mrb[0].mxu0
        %v3249 = vadd.f32 %v2860, %v3248
        %3250 = vdwg.mxu0
        %v3251 = vxor.u32 %v3060, 2147483648
        %v3252 = vxor.u32 %v3062, 2147483648
        %v3253 = vxor.u32 %v3173, 2147483648
        %v3254 = vxor.u32 %v3175, 2147483648
        %v3255 = vxor.u32 %v3064, 2147483648
        %v3256 = vxor.u32 %v3066, 2147483648
        %v3257 = vxor.u32 %v3177, 2147483648
        %v3258 = vxor.u32 %v3179, 2147483648
        %v3259 = vxor.u32 %v3070, 2147483648
        %v3260 = vxor.u32 %v3072, 2147483648
        %v3261 = vxor.u32 %v3183, 2147483648
        %v3262 = vxor.u32 %v3185, 2147483648
        %v3263 = vxor.u32 %v3074, 2147483648
        %v3264 = vxor.u32 %v3076, 2147483648
        %v3265 = vxor.u32 %v3187, 2147483648
        %v3266 = vxor.u32 %v3189, 2147483648
        %v3267 = vxor.u32 %v3080, 2147483648
        %v3268 = vxor.u32 %v3082, 2147483648
        %v3269 = vxor.u32 %v3193, 2147483648
        %v3270 = vxor.u32 %v3195, 2147483648
        %v3271 = vxor.u32 %v3084, 2147483648
        %v3272 = vxor.u32 %v3086, 2147483648
        %v3273 = vxor.u32 %v3197, 2147483648
        %v3274 = vxor.u32 %v3199, 2147483648
        %v3275 = vxor.u32 %v3090, 2147483648
        %v3276 = vxor.u32 %v3092, 2147483648
        %v3277 = vxor.u32 %v3203, 2147483648
        %v3278 = vxor.u32 %v3205, 2147483648
        %v3279 = vxor.u32 %v3094, 2147483648
        %v3280 = vxor.u32 %v3096, 2147483648
        %v3281 = vxor.u32 %v3207, 2147483648
        %v3282 = vxor.u32 %v3209, 2147483648
        %v3283 = vxor.u32 %v3100, 2147483648
        %v3284 = vxor.u32 %v3102, 2147483648
        %v3285 = vxor.u32 %v3213, 2147483648
        %v3286 = vxor.u32 %v3215, 2147483648
        %v3287 = vxor.u32 %v3104, 2147483648
        %v3288 = vxor.u32 %v3106, 2147483648
        %v3289 = vxor.u32 %v3217, 2147483648
        %v3290 = vxor.u32 %v3219, 2147483648
        %v3291 = vxor.u32 %v3110, 2147483648
        %v3292 = vxor.u32 %v3112, 2147483648
        %v3293 = vxor.u32 %v3223, 2147483648
        %v3294 = vxor.u32 %v3225, 2147483648
        %v3295 = vxor.u32 %v3114, 2147483648
        %v3296 = vxor.u32 %v3116, 2147483648
        %v3297 = vxor.u32 %v3227, 2147483648
        %v3298 = vxor.u32 %v3229, 2147483648
        %v3299 = vxor.u32 %v3120, 2147483648
        %v3300 = vxor.u32 %v3122, 2147483648
        %v3301 = vxor.u32 %v3233, 2147483648
        %v3302 = vxor.u32 %v3235, 2147483648
        %v3303 = vxor.u32 %v3124, 2147483648
        %v3304 = vxor.u32 %v3126, 2147483648
        %v3305 = vxor.u32 %v3237, 2147483648
        %v3306 = vxor.u32 %v3239, 2147483648
        %v3307 = vxor.u32 %v3130, 2147483648
        %v3308 = vxor.u32 %v3132, 2147483648
        %v3309 = vxor.u32 %v3243, 2147483648
        %v3310 = vxor.u32 %v3245, 2147483648
        %v3311 = vxor.u32 %v3134, 2147483648
        %v3312 = vxor.u32 %v3136, 2147483648
        %v3313 = vxor.u32 %v3247, 2147483648
        %v3314 = vxor.u32 %v3249, 2147483648
        %v3315 = vmul.f32 %v3251, 1.442695
        %v3316 = vpow.pop %v3315
        %v3317 = vmul.f32 %v3252, 1.442695
        %v3318 = vpow.pop %v3317
        %v3319 = vmul.f32 %v3253, 1.442695
        %v3320 = vpow.pop %v3319
        %v3321 = vmul.f32 %v3254, 1.442695
        %v3322 = vpow.pop %v3321
        %v3323 = vmul.f32 %v3255, 1.442695
        %v3324 = vpow.pop %v3323
        %v3325 = vmul.f32 %v3256, 1.442695
        %v3326 = vpow.pop %v3325
        %v3327 = vmul.f32 %v3257, 1.442695
        %v3328 = vpow.pop %v3327
        %v3329 = vmul.f32 %v3258, 1.442695
        %v3330 = vpow.pop %v3329
        %v3331 = vmul.f32 %v3259, 1.442695
        %v3332 = vpow.pop %v3331
        %v3333 = vmul.f32 %v3260, 1.442695
        %v3334 = vpow.pop %v3333
        %v3335 = vmul.f32 %v3261, 1.442695
        %v3336 = vpow.pop %v3335
        %v3337 = vmul.f32 %v3262, 1.442695
        %v3338 = vpow.pop %v3337
        %v3339 = vmul.f32 %v3263, 1.442695
        %v3340 = vpow.pop %v3339
        %v3341 = vmul.f32 %v3264, 1.442695
        %v3342 = vpow.pop %v3341
        %v3343 = vmul.f32 %v3265, 1.442695
        %v3344 = vpow.pop %v3343
        %v3345 = vmul.f32 %v3266, 1.442695
        %v3346 = vpow.pop %v3345
        %v3347 = vmul.f32 %v3267, 1.442695
        %v3348 = vpow.pop %v3347
        %v3349 = vmul.f32 %v3268, 1.442695
        %v3350 = vpow.pop %v3349
        %v3351 = vmul.f32 %v3269, 1.442695
        %v3352 = vpow.pop %v3351
        %v3353 = vmul.f32 %v3270, 1.442695
        %v3354 = vpow.pop %v3353
        %v3355 = vmul.f32 %v3271, 1.442695
        %v3356 = vpow.pop %v3355
        %v3357 = vmul.f32 %v3272, 1.442695
        %v3358 = vpow.pop %v3357
        %v3359 = vmul.f32 %v3273, 1.442695
        %v3360 = vpow.pop %v3359
        %v3361 = vmul.f32 %v3274, 1.442695
        %v3362 = vpow.pop %v3361
        %v3363 = vmul.f32 %v3275, 1.442695
        %v3364 = vpow.pop %v3363
        %v3365 = vmul.f32 %v3276, 1.442695
        %v3366 = vpow.pop %v3365
        %v3367 = vmul.f32 %v3277, 1.442695
        %v3368 = vpow.pop %v3367
        %v3369 = vmul.f32 %v3278, 1.442695
        %v3370 = vpow.pop %v3369
        %v3371 = vmul.f32 %v3279, 1.442695
        %v3372 = vpow.pop %v3371
        %v3373 = vmul.f32 %v3280, 1.442695
        %v3374 = vpow.pop %v3373
        %v3375 = vmul.f32 %v3281, 1.442695
        %v3376 = vpow.pop %v3375
        %v3377 = vmul.f32 %v3282, 1.442695
        %v3378 = vpow.pop %v3377
        %v3379 = vmul.f32 %v3283, 1.442695
        %v3380 = vpow.pop %v3379
        %v3381 = vmul.f32 %v3284, 1.442695
        %v3382 = vpow.pop %v3381
        %v3383 = vmul.f32 %v3285, 1.442695
        %v3384 = vpow.pop %v3383
        %v3385 = vmul.f32 %v3286, 1.442695
        %v3386 = vpow.pop %v3385
        %v3387 = vmul.f32 %v3287, 1.442695
        %v3388 = vpow.pop %v3387
        %v3389 = vmul.f32 %v3288, 1.442695
        %v3390 = vpow.pop %v3389
        %v3391 = vmul.f32 %v3289, 1.442695
        %v3392 = vpow.pop %v3391
        %v3393 = vmul.f32 %v3290, 1.442695
        %v3394 = vpow.pop %v3393
        %v3395 = vmul.f32 %v3291, 1.442695
        %v3396 = vpow.pop %v3395
        %v3397 = vmul.f32 %v3292, 1.442695
        %v3398 = vpow.pop %v3397
        %v3399 = vmul.f32 %v3293, 1.442695
        %v3400 = vpow.pop %v3399
        %v3401 = vmul.f32 %v3294, 1.442695
        %v3402 = vpow.pop %v3401
        %v3403 = vmul.f32 %v3295, 1.442695
        %v3404 = vpow.pop %v3403
        %v3405 = vmul.f32 %v3296, 1.442695
        %v3406 = vpow.pop %v3405
        %v3407 = vmul.f32 %v3297, 1.442695
        %v3408 = vpow.pop %v3407
        %v3409 = vmul.f32 %v3298, 1.442695
        %v3410 = vpow.pop %v3409
        %v3411 = vmul.f32 %v3299, 1.442695
        %v3412 = vpow.pop %v3411
        %v3413 = vmul.f32 %v3300, 1.442695
        %v3414 = vpow.pop %v3413
        %v3415 = vmul.f32 %v3301, 1.442695
        %v3416 = vpow.pop %v3415
        %v3417 = vmul.f32 %v3302, 1.442695
        %v3418 = vpow.pop %v3417
        %v3419 = vmul.f32 %v3303, 1.442695
        %v3420 = vpow.pop %v3419
        %v3421 = vmul.f32 %v3304, 1.442695
        %v3422 = vpow.pop %v3421
        %v3423 = vmul.f32 %v3305, 1.442695
        %v3424 = vpow.pop %v3423
        %v3425 = vmul.f32 %v3306, 1.442695
        %v3426 = vpow.pop %v3425
        %v3427 = vmul.f32 %v3307, 1.442695
        %v3428 = vpow.pop %v3427
        %v3429 = vmul.f32 %v3308, 1.442695
        %v3430 = vpow.pop %v3429
        %v3431 = vmul.f32 %v3309, 1.442695
        %v3432 = vpow.pop %v3431
        %v3433 = vmul.f32 %v3310, 1.442695
        %v3434 = vpow.pop %v3433
        %v3435 = vmul.f32 %v3311, 1.442695
        %v3436 = vpow.pop %v3435
        %v3437 = vmul.f32 %v3312, 1.442695
        %v3438 = vpow.pop %v3437
        %v3439 = vmul.f32 %v3313, 1.442695
        %v3440 = vpow.pop %v3439
        %v3441 = vmul.f32 %v3314, 1.442695
        %v3442 = vpow.pop %v3441
        %v3443 = vadd.f32 %v3316, 1.0
        %v3444 = vadd.f32 %v3318, 1.0
        %v3445 = vadd.f32 %v3320, 1.0
        %v3446 = vadd.f32 %v3322, 1.0
        %v3447 = vadd.f32 %v3324, 1.0
        %v3448 = vadd.f32 %v3326, 1.0
        %v3449 = vadd.f32 %v3328, 1.0
        %v3450 = vadd.f32 %v3330, 1.0
        %v3451 = vadd.f32 %v3332, 1.0
        %v3452 = vadd.f32 %v3334, 1.0
        %v3453 = vadd.f32 %v3336, 1.0
        %v3454 = vadd.f32 %v3338, 1.0
        %v3455 = vadd.f32 %v3340, 1.0
        %v3456 = vadd.f32 %v3342, 1.0
        %v3457 = vadd.f32 %v3344, 1.0
        %v3458 = vadd.f32 %v3346, 1.0
        %v3459 = vadd.f32 %v3348, 1.0
        %v3460 = vadd.f32 %v3350, 1.0
        %v3461 = vadd.f32 %v3352, 1.0
        %v3462 = vadd.f32 %v3354, 1.0
        %v3463 = vadd.f32 %v3356, 1.0
        %v3464 = vadd.f32 %v3358, 1.0
        %v3465 = vadd.f32 %v3360, 1.0
        %v3466 = vadd.f32 %v3362, 1.0
        %v3467 = vadd.f32 %v3364, 1.0
        %v3468 = vadd.f32 %v3366, 1.0
        %v3469 = vadd.f32 %v3368, 1.0
        %v3470 = vadd.f32 %v3370, 1.0
        %v3471 = vadd.f32 %v3372, 1.0
        %v3472 = vadd.f32 %v3374, 1.0
        %v3473 = vadd.f32 %v3376, 1.0
        %v3474 = vadd.f32 %v3378, 1.0
        %v3475 = vadd.f32 %v3380, 1.0
        %v3476 = vadd.f32 %v3382, 1.0
        %v3477 = vadd.f32 %v3384, 1.0
        %v3478 = vadd.f32 %v3386, 1.0
        %v3479 = vadd.f32 %v3388, 1.0
        %v3480 = vadd.f32 %v3390, 1.0
        %v3481 = vadd.f32 %v3392, 1.0
        %v3482 = vadd.f32 %v3394, 1.0
        %v3483 = vadd.f32 %v3396, 1.0
        %v3484 = vadd.f32 %v3398, 1.0
        %v3485 = vadd.f32 %v3400, 1.0
        %v3486 = vadd.f32 %v3402, 1.0
        %v3487 = vadd.f32 %v3404, 1.0
        %v3488 = vadd.f32 %v3406, 1.0
        %v3489 = vadd.f32 %v3408, 1.0
        %v3490 = vadd.f32 %v3410, 1.0
        %v3491 = vadd.f32 %v3412, 1.0
        %v3492 = vadd.f32 %v3414, 1.0
        %v3493 = vadd.f32 %v3416, 1.0
        %v3494 = vadd.f32 %v3418, 1.0
        %v3495 = vadd.f32 %v3420, 1.0
        %v3496 = vadd.f32 %v3422, 1.0
        %v3497 = vadd.f32 %v3424, 1.0
        %v3498 = vadd.f32 %v3426, 1.0
        %v3499 = vadd.f32 %v3428, 1.0
        %v3500 = vadd.f32 %v3430, 1.0
        %v3501 = vadd.f32 %v3432, 1.0
        %v3502 = vadd.f32 %v3434, 1.0
        %v3503 = vadd.f32 %v3436, 1.0
        %v3504 = vadd.f32 %v3438, 1.0
        %v3505 = vadd.f32 %v3440, 1.0
        %v3506 = vadd.f32 %v3442, 1.0
        %v3507 = vrcp.pop %v3443
        %v3508 = vmul.f32 1.0, %v3507
        %v3509 = vrcp.pop %v3444
        %v3510 = vmul.f32 1.0, %v3509
        %v3511 = vrcp.pop %v3445
        %v3512 = vmul.f32 1.0, %v3511
        %v3513 = vrcp.pop %v3446
        %v3514 = vmul.f32 1.0, %v3513
        %v3515 = vrcp.pop %v3447
        %v3516 = vmul.f32 1.0, %v3515
        %v3517 = vrcp.pop %v3448
        %v3518 = vmul.f32 1.0, %v3517
        %v3519 = vrcp.pop %v3449
        %v3520 = vmul.f32 1.0, %v3519
        %v3521 = vrcp.pop %v3450
        %v3522 = vmul.f32 1.0, %v3521
        %v3523 = vrcp.pop %v3451
        %v3524 = vmul.f32 1.0, %v3523
        %v3525 = vrcp.pop %v3452
        %v3526 = vmul.f32 1.0, %v3525
        %v3527 = vrcp.pop %v3453
        %v3528 = vmul.f32 1.0, %v3527
        %v3529 = vrcp.pop %v3454
        %v3530 = vmul.f32 1.0, %v3529
        %v3531 = vrcp.pop %v3455
        %v3532 = vmul.f32 1.0, %v3531
        %v3533 = vrcp.pop %v3456
        %v3534 = vmul.f32 1.0, %v3533
        %v3535 = vrcp.pop %v3457
        %v3536 = vmul.f32 1.0, %v3535
        %v3537 = vrcp.pop %v3458
        %v3538 = vmul.f32 1.0, %v3537
        %v3539 = vrcp.pop %v3459
        %v3540 = vmul.f32 1.0, %v3539
        %v3541 = vrcp.pop %v3460
        %v3542 = vmul.f32 1.0, %v3541
        %v3543 = vrcp.pop %v3461
        %v3544 = vmul.f32 1.0, %v3543
        %v3545 = vrcp.pop %v3462
        %v3546 = vmul.f32 1.0, %v3545
        %v3547 = vrcp.pop %v3463
        %v3548 = vmul.f32 1.0, %v3547
        %v3549 = vrcp.pop %v3464
        %v3550 = vmul.f32 1.0, %v3549
        %v3551 = vrcp.pop %v3465
        %v3552 = vmul.f32 1.0, %v3551
        %v3553 = vrcp.pop %v3466
        %v3554 = vmul.f32 1.0, %v3553
        %v3555 = vrcp.pop %v3467
        %v3556 = vmul.f32 1.0, %v3555
        %v3557 = vrcp.pop %v3468
        %v3558 = vmul.f32 1.0, %v3557
        %v3559 = vrcp.pop %v3469
        %v3560 = vmul.f32 1.0, %v3559
        %v3561 = vrcp.pop %v3470
        %v3562 = vmul.f32 1.0, %v3561
        %v3563 = vrcp.pop %v3471
        %v3564 = vmul.f32 1.0, %v3563
        %v3565 = vrcp.pop %v3472
        %v3566 = vmul.f32 1.0, %v3565
        %v3567 = vrcp.pop %v3473
        %v3568 = vmul.f32 1.0, %v3567
        %v3569 = vrcp.pop %v3474
        %v3570 = vmul.f32 1.0, %v3569
        %v3571 = vrcp.pop %v3475
        %v3572 = vmul.f32 1.0, %v3571
        %v3573 = vrcp.pop %v3476
        %v3574 = vmul.f32 1.0, %v3573
        %v3575 = vrcp.pop %v3477
        %v3576 = vmul.f32 1.0, %v3575
        %v3577 = vrcp.pop %v3478
        %v3578 = vmul.f32 1.0, %v3577
        %v3579 = vrcp.pop %v3479
        %v3580 = vmul.f32 1.0, %v3579
        %v3581 = vrcp.pop %v3480
        %v3582 = vmul.f32 1.0, %v3581
        %v3583 = vrcp.pop %v3481
        %v3584 = vmul.f32 1.0, %v3583
        %v3585 = vrcp.pop %v3482
        %v3586 = vmul.f32 1.0, %v3585
        %v3587 = vrcp.pop %v3483
        %v3588 = vmul.f32 1.0, %v3587
        %v3589 = vrcp.pop %v3484
        %v3590 = vmul.f32 1.0, %v3589
        %v3591 = vrcp.pop %v3485
        %v3592 = vmul.f32 1.0, %v3591
        %v3593 = vrcp.pop %v3486
        %v3594 = vmul.f32 1.0, %v3593
        %v3595 = vrcp.pop %v3487
        %v3596 = vmul.f32 1.0, %v3595
        %v3597 = vrcp.pop %v3488
        %v3598 = vmul.f32 1.0, %v3597
        %v3599 = vrcp.pop %v3489
        %v3600 = vmul.f32 1.0, %v3599
        %v3601 = vrcp.pop %v3490
        %v3602 = vmul.f32 1.0, %v3601
        %v3603 = vrcp.pop %v3491
        %v3604 = vmul.f32 1.0, %v3603
        %v3605 = vrcp.pop %v3492
        %v3606 = vmul.f32 1.0, %v3605
        %v3607 = vrcp.pop %v3493
        %v3608 = vmul.f32 1.0, %v3607
        %v3609 = vrcp.pop %v3494
        %v3610 = vmul.f32 1.0, %v3609
        %v3611 = vrcp.pop %v3495
        %v3612 = vmul.f32 1.0, %v3611
        %v3613 = vrcp.pop %v3496
        %v3614 = vmul.f32 1.0, %v3613
        %v3615 = vrcp.pop %v3497
        %v3616 = vmul.f32 1.0, %v3615
        %v3617 = vrcp.pop %v3498
        %v3618 = vmul.f32 1.0, %v3617
        %v3619 = vrcp.pop %v3499
        %v3620 = vmul.f32 1.0, %v3619
        %v3621 = vrcp.pop %v3500
        %v3622 = vmul.f32 1.0, %v3621
        %v3623 = vrcp.pop %v3501
        %v3624 = vmul.f32 1.0, %v3623
        %v3625 = vrcp.pop %v3502
        %v3626 = vmul.f32 1.0, %v3625
        %v3627 = vrcp.pop %v3503
        %v3628 = vmul.f32 1.0, %v3627
        %v3629 = vrcp.pop %v3504
        %v3630 = vmul.f32 1.0, %v3629
        %v3631 = vrcp.pop %v3505
        %v3632 = vmul.f32 1.0, %v3631
        %v3633 = vrcp.pop %v3506
        %v3634 = vmul.f32 1.0, %v3633
        %v3635 = vmul.f32 %v3060, %v3508
        %v3636 = vmul.f32 %v3062, %v3510
        %v3637 = vmul.f32 %v3173, %v3512
        %v3638 = vmul.f32 %v3175, %v3514
        %v3639 = vmul.f32 %v3064, %v3516
        %v3640 = vmul.f32 %v3066, %v3518
        %v3641 = vmul.f32 %v3177, %v3520
        %v3642 = vmul.f32 %v3179, %v3522
        %v3643 = vmul.f32 %v3070, %v3524
        %v3644 = vmul.f32 %v3072, %v3526
        %v3645 = vmul.f32 %v3183, %v3528
        %v3646 = vmul.f32 %v3185, %v3530
        %v3647 = vmul.f32 %v3074, %v3532
        %v3648 = vmul.f32 %v3076, %v3534
        %v3649 = vmul.f32 %v3187, %v3536
        %v3650 = vmul.f32 %v3189, %v3538
        %v3651 = vmul.f32 %v3080, %v3540
        %v3652 = vmul.f32 %v3082, %v3542
        %v3653 = vmul.f32 %v3193, %v3544
        %v3654 = vmul.f32 %v3195, %v3546
        %v3655 = vmul.f32 %v3084, %v3548
        %v3656 = vmul.f32 %v3086, %v3550
        %v3657 = vmul.f32 %v3197, %v3552
        %v3658 = vmul.f32 %v3199, %v3554
        %v3659 = vmul.f32 %v3090, %v3556
        %v3660 = vmul.f32 %v3092, %v3558
        %v3661 = vmul.f32 %v3203, %v3560
        %v3662 = vmul.f32 %v3205, %v3562
        %v3663 = vmul.f32 %v3094, %v3564
        %v3664 = vmul.f32 %v3096, %v3566
        %v3665 = vmul.f32 %v3207, %v3568
        %v3666 = vmul.f32 %v3209, %v3570
        %v3667 = vmul.f32 %v3100, %v3572
        %v3668 = vmul.f32 %v3102, %v3574
        %v3669 = vmul.f32 %v3213, %v3576
        %v3670 = vmul.f32 %v3215, %v3578
        %v3671 = vmul.f32 %v3104, %v3580
        %v3672 = vmul.f32 %v3106, %v3582
        %v3673 = vmul.f32 %v3217, %v3584
        %v3674 = vmul.f32 %v3219, %v3586
        %v3675 = vmul.f32 %v3110, %v3588
        %v3676 = vmul.f32 %v3112, %v3590
        %v3677 = vmul.f32 %v3223, %v3592
        %v3678 = vmul.f32 %v3225, %v3594
        %v3679 = vmul.f32 %v3114, %v3596
        %v3680 = vmul.f32 %v3116, %v3598
        %v3681 = vmul.f32 %v3227, %v3600
        %v3682 = vmul.f32 %v3229, %v3602
        %v3683 = vmul.f32 %v3120, %v3604
        %v3684 = vmul.f32 %v3122, %v3606
        %v3685 = vmul.f32 %v3233, %v3608
        %v3686 = vmul.f32 %v3235, %v3610
        %v3687 = vmul.f32 %v3124, %v3612
        %v3688 = vmul.f32 %v3126, %v3614
        %v3689 = vmul.f32 %v3237, %v3616
        %v3690 = vmul.f32 %v3239, %v3618
        %v3691 = vmul.f32 %v3130, %v3620
        %v3692 = vmul.f32 %v3132, %v3622
        %v3693 = vmul.f32 %v3243, %v3624
        %v3694 = vmul.f32 %v3245, %v3626
        %v3695 = vmul.f32 %v3134, %v3628
        %v3696 = vmul.f32 %v3136, %v3630
        %v3697 = vmul.f32 %v3247, %v3632
        %v3698 = vmul.f32 %v3249, %v3634
        %v3699 = vpack.c.bf16 %v3639, %v3635
        %v3700 = vpack.c.bf16 %v3640, %v3636
        %v3701 = vpack.c.bf16 %v3641, %v3637
        %v3702 = vpack.c.bf16 %v3642, %v3638
        %v3703 = vpack.c.bf16 %v3647, %v3643
        %v3704 = vpack.c.bf16 %v3648, %v3644
        %v3705 = vpack.c.bf16 %v3649, %v3645
        %v3706 = vpack.c.bf16 %v3650, %v3646
        %v3707 = vpack.c.bf16 %v3655, %v3651
        %v3708 = vpack.c.bf16 %v3656, %v3652
        %v3709 = vpack.c.bf16 %v3657, %v3653
        %v3710 = vpack.c.bf16 %v3658, %v3654
        %v3711 = vpack.c.bf16 %v3663, %v3659
        %v3712 = vpack.c.bf16 %v3664, %v3660
        %v3713 = vpack.c.bf16 %v3665, %v3661
        %v3714 = vpack.c.bf16 %v3666, %v3662
        %v3715 = vpack.c.bf16 %v3671, %v3667
        %v3716 = vpack.c.bf16 %v3672, %v3668
        %v3717 = vpack.c.bf16 %v3673, %v3669
        %v3718 = vpack.c.bf16 %v3674, %v3670
        %v3719 = vpack.c.bf16 %v3679, %v3675
        %v3720 = vpack.c.bf16 %v3680, %v3676
        %v3721 = vpack.c.bf16 %v3681, %v3677
        %v3722 = vpack.c.bf16 %v3682, %v3678
        %v3723 = vpack.c.bf16 %v3687, %v3683
        %v3724 = vpack.c.bf16 %v3688, %v3684
        %v3725 = vpack.c.bf16 %v3689, %v3685
        %v3726 = vpack.c.bf16 %v3690, %v3686
        %v3727 = vpack.c.bf16 %v3695, %v3691
        %v3728 = vpack.c.bf16 %v3696, %v3692
        %v3729 = vpack.c.bf16 %v3697, %v3693
        %v3730 = vpack.c.bf16 %v3698, %v3694
        %v3731 = vld [vmem:[#allocation9] sm:$0xf]
        %v3732 = vld [vmem:[#allocation9 + $0x4] sm:$0xf]
        %v3733 = vld [vmem:[#allocation9 + $0x8] sm:$0xf]
        %v3734 = vld [vmem:[#allocation9 + $0xc] sm:$0xf]
        %v3735 = vld [vmem:[#allocation9 + $0x10] sm:$0xf]
        %v3736 = vld [vmem:[#allocation9 + $0x14] sm:$0xf]
        %v3737 = vld [vmem:[#allocation9 + $0x18] sm:$0xf]
        %v3738 = vld [vmem:[#allocation9 + $0x1c] sm:$0xf]
        %v3739 = vld [vmem:[#allocation9 + $0x20] sm:$0xf]
        %v3740 = vld [vmem:[#allocation9 + $0x24] sm:$0xf]
        %v3741 = vld [vmem:[#allocation9 + $0x28] sm:$0xf]
        %v3742 = vld [vmem:[#allocation9 + $0x2c] sm:$0xf]
        %v3743 = vld [vmem:[#allocation9 + $0x30] sm:$0xf]
        %v3744 = vld [vmem:[#allocation9 + $0x34] sm:$0xf]
        %v3745 = vld [vmem:[#allocation9 + $0x38] sm:$0xf]
        %v3746 = vld [vmem:[#allocation9 + $0x3c] sm:$0xf]
        %v3747 = vld [vmem:[#allocation9 + $0x40] sm:$0xf]
        %v3748 = vld [vmem:[#allocation9 + $0x44] sm:$0xf]
        %v3749 = vld [vmem:[#allocation9 + $0x48] sm:$0xf]
        %v3750 = vld [vmem:[#allocation9 + $0x4c] sm:$0xf]
        %v3751 = vld [vmem:[#allocation9 + $0x50] sm:$0xf]
        %v3752 = vld [vmem:[#allocation9 + $0x54] sm:$0xf]
        %v3753 = vld [vmem:[#allocation9 + $0x58] sm:$0xf]
        %v3754 = vld [vmem:[#allocation9 + $0x5c] sm:$0xf]
        %v3755 = vld [vmem:[#allocation9 + $0x60] sm:$0xf]
        %v3756 = vld [vmem:[#allocation9 + $0x64] sm:$0xf]
        %v3757 = vld [vmem:[#allocation9 + $0x68] sm:$0xf]
        %v3758 = vld [vmem:[#allocation9 + $0x6c] sm:$0xf]
        %v3759 = vld [vmem:[#allocation9 + $0x70] sm:$0xf]
        %v3760 = vld [vmem:[#allocation9 + $0x74] sm:$0xf]
        %v3761 = vld [vmem:[#allocation9 + $0x78] sm:$0xf]
        %v3762 = vld [vmem:[#allocation9 + $0x7c] sm:$0xf]
        %v3763 = vld [vmem:[#allocation9 + $0x80] sm:$0xf]
        %v3764 = vld [vmem:[#allocation9 + $0x84] sm:$0xf]
        %v3765 = vld [vmem:[#allocation9 + $0x88] sm:$0xf]
        %v3766 = vld [vmem:[#allocation9 + $0x8c] sm:$0xf]
        %v3767 = vld [vmem:[#allocation9 + $0x90] sm:$0xf]
        %v3768 = vld [vmem:[#allocation9 + $0x94] sm:$0xf]
        %v3769 = vld [vmem:[#allocation9 + $0x98] sm:$0xf]
        %v3770 = vld [vmem:[#allocation9 + $0x9c] sm:$0xf]
        %v3771 = vld [vmem:[#allocation9 + $0xa0] sm:$0xf]
        %v3772 = vld [vmem:[#allocation9 + $0xa4] sm:$0xf]
        %v3773 = vld [vmem:[#allocation9 + $0xa8] sm:$0xf]
        %v3774 = vld [vmem:[#allocation9 + $0xac] sm:$0xf]
        %v3775 = vld [vmem:[#allocation9 + $0xb0] sm:$0xf]
        %v3776 = vld [vmem:[#allocation9 + $0xb4] sm:$0xf]
        %v3777 = vld [vmem:[#allocation9 + $0xb8] sm:$0xf]
        %v3778 = vld [vmem:[#allocation9 + $0xbc] sm:$0xf]
        %v3779 = vld [vmem:[#allocation9 + $0xc0] sm:$0xf]
        %v3780 = vld [vmem:[#allocation9 + $0xc4] sm:$0xf]
        %v3781 = vld [vmem:[#allocation9 + $0xc8] sm:$0xf]
        %v3782 = vld [vmem:[#allocation9 + $0xcc] sm:$0xf]
        %v3783 = vld [vmem:[#allocation9 + $0xd0] sm:$0xf]
        %v3784 = vld [vmem:[#allocation9 + $0xd4] sm:$0xf]
        %v3785 = vld [vmem:[#allocation9 + $0xd8] sm:$0xf]
        %v3786 = vld [vmem:[#allocation9 + $0xdc] sm:$0xf]
        %v3787 = vld [vmem:[#allocation9 + $0xe0] sm:$0xf]
        %v3788 = vld [vmem:[#allocation9 + $0xe4] sm:$0xf]
        %v3789 = vld [vmem:[#allocation9 + $0xe8] sm:$0xf]
        %v3790 = vld [vmem:[#allocation9 + $0xec] sm:$0xf]
        %v3791 = vld [vmem:[#allocation9 + $0xf0] sm:$0xf]
        %v3792 = vld [vmem:[#allocation9 + $0xf4] sm:$0xf]
        %v3793 = vld [vmem:[#allocation9 + $0xf8] sm:$0xf]
        %v3794 = vld [vmem:[#allocation9 + $0xfc] sm:$0xf]
        %v3795 = vld [vmem:[%s7] sm:$0x1]
        %v3797 = vlaneseq
        %v3798 = vshrl.u32 %v3797, 7
        %v3799 = vsub.s32 0, %v3798
        %v3800 = vrot.slane %v3795, %v3799
        %v3866 = vunpack.c.l.b16 %v3731
        %v3867 = vunpack.c.l.b16 %v3732
        %v3868 = vunpack.c.l.b16 %v3733
        %v3869 = vunpack.c.l.b16 %v3734
        %v3870 = vunpack.c.l.b16 %v3735
        %v3871 = vunpack.c.l.b16 %v3736
        %v3872 = vunpack.c.l.b16 %v3737
        %v3873 = vunpack.c.l.b16 %v3738
        %v3874 = vunpack.c.l.b16 %v3739
        %v3875 = vunpack.c.l.b16 %v3740
        %v3876 = vunpack.c.l.b16 %v3741
        %v3877 = vunpack.c.l.b16 %v3742
        %v3878 = vunpack.c.l.b16 %v3743
        %v3879 = vunpack.c.l.b16 %v3744
        %v3880 = vunpack.c.l.b16 %v3745
        %v3881 = vunpack.c.l.b16 %v3746
        %v3882 = vunpack.c.l.b16 %v3747
        %v3883 = vunpack.c.l.b16 %v3748
        %v3884 = vunpack.c.l.b16 %v3749
        %v3885 = vunpack.c.l.b16 %v3750
        %v3886 = vunpack.c.l.b16 %v3751
        %v3887 = vunpack.c.l.b16 %v3752
        %v3888 = vunpack.c.l.b16 %v3753
        %v3889 = vunpack.c.l.b16 %v3754
        %v3890 = vunpack.c.l.b16 %v3755
        %v3891 = vunpack.c.l.b16 %v3756
        %v3892 = vunpack.c.l.b16 %v3757
        %v3893 = vunpack.c.l.b16 %v3758
        %v3894 = vunpack.c.l.b16 %v3759
        %v3895 = vunpack.c.l.b16 %v3760
        %v3896 = vunpack.c.l.b16 %v3761
        %v3897 = vunpack.c.l.b16 %v3762
        %v3898 = vunpack.c.l.b16 %v3763
        %v3899 = vunpack.c.l.b16 %v3764
        %v3900 = vunpack.c.l.b16 %v3765
        %v3901 = vunpack.c.l.b16 %v3766
        %v3902 = vunpack.c.l.b16 %v3767
        %v3903 = vunpack.c.l.b16 %v3768
        %v3904 = vunpack.c.l.b16 %v3769
        %v3905 = vunpack.c.l.b16 %v3770
        %v3906 = vunpack.c.l.b16 %v3771
        %v3907 = vunpack.c.l.b16 %v3772
        %v3908 = vunpack.c.l.b16 %v3773
        %v3909 = vunpack.c.l.b16 %v3774
        %v3910 = vunpack.c.l.b16 %v3775
        %v3911 = vunpack.c.l.b16 %v3776
        %v3912 = vunpack.c.l.b16 %v3777
        %v3913 = vunpack.c.l.b16 %v3778
        %v3914 = vunpack.c.l.b16 %v3779
        %v3915 = vunpack.c.l.b16 %v3780
        %v3916 = vunpack.c.l.b16 %v3781
        %v3917 = vunpack.c.l.b16 %v3782
        %v3918 = vunpack.c.l.b16 %v3783
        %v3919 = vunpack.c.l.b16 %v3784
        %v3920 = vunpack.c.l.b16 %v3785
        %v3921 = vunpack.c.l.b16 %v3786
        %v3922 = vunpack.c.l.b16 %v3787
        %v3923 = vunpack.c.l.b16 %v3788
        %v3924 = vunpack.c.l.b16 %v3789
        %v3925 = vunpack.c.l.b16 %v3790
        %v3926 = vunpack.c.l.b16 %v3791
        %v3927 = vunpack.c.l.b16 %v3792
        %v3928 = vunpack.c.l.b16 %v3793
        %v3929 = vunpack.c.l.b16 %v3794
        %v3930 = vpack.c.b16 %v3867, %v3866
        %v3931 = vpack.c.b16 %v3869, %v3868
        %v3932 = vpack.c.b16 %v3871, %v3870
        %v3933 = vpack.c.b16 %v3873, %v3872
        %v3934 = vpack.c.b16 %v3875, %v3874
        %v3935 = vpack.c.b16 %v3877, %v3876
        %v3936 = vpack.c.b16 %v3879, %v3878
        %v3937 = vpack.c.b16 %v3881, %v3880
        %v3938 = vpack.c.b16 %v3883, %v3882
        %v3939 = vpack.c.b16 %v3885, %v3884
        %v3940 = vpack.c.b16 %v3887, %v3886
        %v3941 = vpack.c.b16 %v3889, %v3888
        %v3942 = vpack.c.b16 %v3891, %v3890
        %v3943 = vpack.c.b16 %v3893, %v3892
        %v3944 = vpack.c.b16 %v3895, %v3894
        %v3945 = vpack.c.b16 %v3897, %v3896
        %v3946 = vpack.c.b16 %v3899, %v3898
        %v3947 = vpack.c.b16 %v3901, %v3900
        %v3948 = vpack.c.b16 %v3903, %v3902
        %v3949 = vpack.c.b16 %v3905, %v3904
        %v3950 = vpack.c.b16 %v3907, %v3906
        %v3951 = vpack.c.b16 %v3909, %v3908
        %v3952 = vpack.c.b16 %v3911, %v3910
        %v3953 = vpack.c.b16 %v3913, %v3912
        %v3954 = vpack.c.b16 %v3915, %v3914
        %v3955 = vpack.c.b16 %v3917, %v3916
        %v3956 = vpack.c.b16 %v3919, %v3918
        %v3957 = vpack.c.b16 %v3921, %v3920
        %v3958 = vpack.c.b16 %v3923, %v3922
        %v3959 = vpack.c.b16 %v3925, %v3924
        %v3960 = vpack.c.b16 %v3927, %v3926
        %v3961 = vpack.c.b16 %v3929, %v3928
        %3994 = vmatprep.subr.bf16.mxu0 0
        %3995 = vmatpush1.bf16.msra.mxu0 %v3930
        %3996 = vmatprep.subr.bf16.mxu0 0
        %3997 = vmatpush1.bf16.msra.mxu0 %v3931
        %3998 = vmatprep.subr.bf16.mxu0 0
        %3999 = vmatpush1.bf16.msra.mxu0 %v3932
        %4000 = vmatprep.subr.bf16.mxu0 0
        %4001 = vmatpush1.bf16.msra.mxu0 %v3933
        %4002 = vmatprep.subr.bf16.mxu0 0
        %4003 = vmatpush1.bf16.msra.mxu0 %v3934
        %4004 = vmatprep.subr.bf16.mxu0 0
        %4005 = vmatpush1.bf16.msra.mxu0 %v3935
        %4006 = vmatprep.subr.bf16.mxu0 0
        %4007 = vmatpush1.bf16.msra.mxu0 %v3936
        %4008 = vmatprep.subr.bf16.mxu0 0
        %4009 = vmatpush1.bf16.msra.mxu0 %v3937
        %4010 = vmatprep.subr.bf16.mxu0 0
        %4011 = vmatpush1.bf16.msra.mxu0 %v3938
        %4012 = vmatprep.subr.bf16.mxu0 0
        %4013 = vmatpush1.bf16.msra.mxu0 %v3939
        %4014 = vmatprep.subr.bf16.mxu0 0
        %4015 = vmatpush1.bf16.msra.mxu0 %v3940
        %4016 = vmatprep.subr.bf16.mxu0 0
        %4017 = vmatpush1.bf16.msra.mxu0 %v3941
        %4018 = vmatprep.subr.bf16.mxu0 0
        %4019 = vmatpush1.bf16.msra.mxu0 %v3942
        %4020 = vmatprep.subr.bf16.mxu0 0
        %4021 = vmatpush1.bf16.msra.mxu0 %v3943
        %4022 = vmatprep.subr.bf16.mxu0 0
        %4023 = vmatpush1.bf16.msra.mxu0 %v3944
        %4024 = vmatprep.subr.bf16.mxu0 0
        %4025 = vmatpush1.bf16.msra.mxu0 %v3945
        %4026 = vmatprep.mubr.bf16.mxu0 %v3700
        %4027 = vmatmul.mubr.bf16.gmra.mrb[0].mxu0 %v3699
        %v4028 = vpop.f32.mrb[0].mxu0
        %v4029 = vadd.f32 %v3800, %v4028
        %v4030 = vpop.f32.mrb[0].mxu0
        %v4031 = vpop.f32.mrb[0].mxu0
        %v4032 = vadd.f32 %v3800, %v4031
        %v4033 = vpop.f32.mrb[0].mxu0
        %4034 = vmatprep.mubr.bf16.mxu0 %v3704
        %4035 = vmatmul.mubr.bf16.gmra.mrb[0].mxu0 %v3703
        %v4036 = vpop.f32.mrb[0].mxu0
        %v4037 = vadd.f32 %v3800, %v4036
        %v4038 = vpop.f32.mrb[0].mxu0
        %v4039 = vpop.f32.mrb[0].mxu0
        %v4040 = vadd.f32 %v3800, %v4039
        %v4041 = vpop.f32.mrb[0].mxu0
        %4042 = vmatprep.mubr.bf16.mxu0 %v3708
        %4043 = vmatmul.mubr.bf16.gmra.mrb[0].mxu0 %v3707
        %v4044 = vpop.f32.mrb[0].mxu0
        %v4045 = vadd.f32 %v3800, %v4044
        %v4046 = vpop.f32.mrb[0].mxu0
        %v4047 = vpop.f32.mrb[0].mxu0
        %v4048 = vadd.f32 %v3800, %v4047
        %v4049 = vpop.f32.mrb[0].mxu0
        %4050 = vmatprep.mubr.bf16.mxu0 %v3712
        %4051 = vmatmul.mubr.bf16.gmra.mrb[0].mxu0 %v3711
        %v4052 = vpop.f32.mrb[0].mxu0
        %v4053 = vadd.f32 %v3800, %v4052
        %v4054 = vpop.f32.mrb[0].mxu0
        %v4055 = vpop.f32.mrb[0].mxu0
        %v4056 = vadd.f32 %v3800, %v4055
        %v4057 = vpop.f32.mrb[0].mxu0
        %4058 = vmatprep.mubr.bf16.mxu0 %v3716
        %4059 = vmatmul.mubr.bf16.gmra.mrb[0].mxu0 %v3715
        %v4060 = vpop.f32.mrb[0].mxu0
        %v4061 = vadd.f32 %v3800, %v4060
        %v4062 = vpop.f32.mrb[0].mxu0
        %v4063 = vpop.f32.mrb[0].mxu0
        %v4064 = vadd.f32 %v3800, %v4063
        %v4065 = vpop.f32.mrb[0].mxu0
        %4066 = vmatprep.mubr.bf16.mxu0 %v3720
        %4067 = vmatmul.mubr.bf16.gmra.mrb[0].mxu0 %v3719
        %v4068 = vpop.f32.mrb[0].mxu0
        %v4069 = vadd.f32 %v3800, %v4068
        %v4070 = vpop.f32.mrb[0].mxu0
        %v4071 = vpop.f32.mrb[0].mxu0
        %v4072 = vadd.f32 %v3800, %v4071
        %v4073 = vpop.f32.mrb[0].mxu0
        %4074 = vmatprep.mubr.bf16.mxu0 %v3724
        %4075 = vmatmul.mubr.bf16.gmra.mrb[0].mxu0 %v3723
        %v4076 = vpop.f32.mrb[0].mxu0
        %v4077 = vadd.f32 %v3800, %v4076
        %v4078 = vpop.f32.mrb[0].mxu0
        %v4079 = vpop.f32.mrb[0].mxu0
        %v4080 = vadd.f32 %v3800, %v4079
        %v4081 = vpop.f32.mrb[0].mxu0
        %4082 = vmatprep.mubr.bf16.mxu0 %v3728
        %4083 = vmatmul.mubr.bf16.gmra.mrb[0].mxu0 %v3727
        %v4084 = vpop.f32.mrb[0].mxu0
        %v4085 = vadd.f32 %v3800, %v4084
        %v4086 = vpop.f32.mrb[0].mxu0
        %v4087 = vpop.f32.mrb[0].mxu0
        %v4088 = vadd.f32 %v3800, %v4087
        %v4089 = vpop.f32.mrb[0].mxu0
        %4090 = vdwg.mxu0
        %4091 = vmatprep.subr.bf16.mxu0 0
        %4092 = vmatpush1.bf16.msra.mxu0 %v3946
        %4093 = vmatprep.subr.bf16.mxu0 0
        %4094 = vmatpush1.bf16.msra.mxu0 %v3947
        %4095 = vmatprep.subr.bf16.mxu0 0
        %4096 = vmatpush1.bf16.msra.mxu0 %v3948
        %4097 = vmatprep.subr.bf16.mxu0 0
        %4098 = vmatpush1.bf16.msra.mxu0 %v3949
        %4099 = vmatprep.subr.bf16.mxu0 0
        %4100 = vmatpush1.bf16.msra.mxu0 %v3950
        %4101 = vmatprep.subr.bf16.mxu0 0
        %4102 = vmatpush1.bf16.msra.mxu0 %v3951
        %4103 = vmatprep.subr.bf16.mxu0 0
        %4104 = vmatpush1.bf16.msra.mxu0 %v3952
        %4105 = vmatprep.subr.bf16.mxu0 0
        %4106 = vmatpush1.bf16.msra.mxu0 %v3953
        %4107 = vmatprep.subr.bf16.mxu0 0
        %4108 = vmatpush1.bf16.msra.mxu0 %v3954
        %4109 = vmatprep.subr.bf16.mxu0 0
        %4110 = vmatpush1.bf16.msra.mxu0 %v3955
        %4111 = vmatprep.subr.bf16.mxu0 0
        %4112 = vmatpush1.bf16.msra.mxu0 %v3956
        %4113 = vmatprep.subr.bf16.mxu0 0
        %4114 = vmatpush1.bf16.msra.mxu0 %v3957
        %4115 = vmatprep.subr.bf16.mxu0 0
        %4116 = vmatpush1.bf16.msra.mxu0 %v3958
        %4117 = vmatprep.subr.bf16.mxu0 0
        %4118 = vmatpush1.bf16.msra.mxu0 %v3959
        %4119 = vmatprep.subr.bf16.mxu0 0
        %4120 = vmatpush1.bf16.msra.mxu0 %v3960
        %4121 = vmatprep.subr.bf16.mxu0 0
        %4122 = vmatpush1.bf16.msra.mxu0 %v3961
        %4123 = vmatprep.mubr.bf16.mxu0 %v3702
        %4124 = vmatmul.mubr.bf16.gmra.mrb[0].mxu0 %v3701
        %v4125 = vpop.f32.mrb[0].mxu0
        %v4126 = vadd.f32 %v4029, %v4125
        %v4127 = vpop.f32.mrb[0].mxu0
        %v4128 = vpop.f32.mrb[0].mxu0
        %v4129 = vadd.f32 %v4032, %v4128
        %v4130 = vpop.f32.mrb[0].mxu0
        %4131 = vmatprep.mubr.bf16.mxu0 %v3706
        %4132 = vmatmul.mubr.bf16.gmra.mrb[0].mxu0 %v3705
        %v4133 = vpop.f32.mrb[0].mxu0
        %v4134 = vadd.f32 %v4037, %v4133
        %v4135 = vpop.f32.mrb[0].mxu0
        %v4136 = vpop.f32.mrb[0].mxu0
        %v4137 = vadd.f32 %v4040, %v4136
        %v4138 = vpop.f32.mrb[0].mxu0
        %4139 = vmatprep.mubr.bf16.mxu0 %v3710
        %4140 = vmatmul.mubr.bf16.gmra.mrb[0].mxu0 %v3709
        %v4141 = vpop.f32.mrb[0].mxu0
        %v4142 = vadd.f32 %v4045, %v4141
        %v4143 = vpop.f32.mrb[0].mxu0
        %v4144 = vpop.f32.mrb[0].mxu0
        %v4145 = vadd.f32 %v4048, %v4144
        %v4146 = vpop.f32.mrb[0].mxu0
        %4147 = vmatprep.mubr.bf16.mxu0 %v3714
        %4148 = vmatmul.mubr.bf16.gmra.mrb[0].mxu0 %v3713
        %v4149 = vpop.f32.mrb[0].mxu0
        %v4150 = vadd.f32 %v4053, %v4149
        %v4151 = vpop.f32.mrb[0].mxu0
        %v4152 = vpop.f32.mrb[0].mxu0
        %v4153 = vadd.f32 %v4056, %v4152
        %v4154 = vpop.f32.mrb[0].mxu0
        %4155 = vmatprep.mubr.bf16.mxu0 %v3718
        %4156 = vmatmul.mubr.bf16.gmra.mrb[0].mxu0 %v3717
        %v4157 = vpop.f32.mrb[0].mxu0
        %v4158 = vadd.f32 %v4061, %v4157
        %v4159 = vpop.f32.mrb[0].mxu0
        %v4160 = vpop.f32.mrb[0].mxu0
        %v4161 = vadd.f32 %v4064, %v4160
        %v4162 = vpop.f32.mrb[0].mxu0
        %4163 = vmatprep.mubr.bf16.mxu0 %v3722
        %4164 = vmatmul.mubr.bf16.gmra.mrb[0].mxu0 %v3721
        %v4165 = vpop.f32.mrb[0].mxu0
        %v4166 = vadd.f32 %v4069, %v4165
        %v4167 = vpop.f32.mrb[0].mxu0
        %v4168 = vpop.f32.mrb[0].mxu0
        %v4169 = vadd.f32 %v4072, %v4168
        %v4170 = vpop.f32.mrb[0].mxu0
        %4171 = vmatprep.mubr.bf16.mxu0 %v3726
        %4172 = vmatmul.mubr.bf16.gmra.mrb[0].mxu0 %v3725
        %v4173 = vpop.f32.mrb[0].mxu0
        %v4174 = vadd.f32 %v4077, %v4173
        %v4175 = vpop.f32.mrb[0].mxu0
        %v4176 = vpop.f32.mrb[0].mxu0
        %v4177 = vadd.f32 %v4080, %v4176
        %v4178 = vpop.f32.mrb[0].mxu0
        %4179 = vmatprep.mubr.bf16.mxu0 %v3730
        %4180 = vmatmul.mubr.bf16.gmra.mrb[0].mxu0 %v3729
        %v4181 = vpop.f32.mrb[0].mxu0
        %v4182 = vadd.f32 %v4085, %v4181
        %v4183 = vpop.f32.mrb[0].mxu0
        %v4184 = vpop.f32.mrb[0].mxu0
        %v4185 = vadd.f32 %v4088, %v4184
        %v4186 = vpop.f32.mrb[0].mxu0
        %4187 = vdwg.mxu0
        %s4188 = smul.u32 %s549, 16
        %s4189 = scalar_lea.vmem %s346, %s4188 [#allocation3]
        %v4190 = vld [vmem:[%s4189] sm:$0xff]
        %v4191 = vld [vmem:[%s4189 + $0x8] sm:$0xff]
        %v4192 = vld [vmem:[%s4189 + $0x10] sm:$0xff]
        %v4193 = vld [vmem:[%s4189 + $0x18] sm:$0xff]
        %v4194 = vld [vmem:[%s4189 + $0x20] sm:$0xff]
        %v4195 = vld [vmem:[%s4189 + $0x28] sm:$0xff]
        %v4196 = vld [vmem:[%s4189 + $0x30] sm:$0xff]
        %v4197 = vld [vmem:[%s4189 + $0x38] sm:$0xff]
        %v4198 = vld [vmem:[%s4189 + $0x40] sm:$0xff]
        %v4199 = vld [vmem:[%s4189 + $0x48] sm:$0xff]
        %v4200 = vld [vmem:[%s4189 + $0x50] sm:$0xff]
        %v4201 = vld [vmem:[%s4189 + $0x58] sm:$0xff]
        %v4202 = vld [vmem:[%s4189 + $0x60] sm:$0xff]
        %v4203 = vld [vmem:[%s4189 + $0x68] sm:$0xff]
        %v4204 = vld [vmem:[%s4189 + $0x70] sm:$0xff]
        %v4205 = vld [vmem:[%s4189 + $0x78] sm:$0xff]
        %v4206 = vlaneseq
        %v4207 = vshrl.u32 %v4206, 7
        %v4208 = vsub.s32 2, %v4207
        %v4209 = vrot.slane %v2761, %v4208
        %v4210 = vmul.f32 %v4126, %v4209
        %v4211 = vmul.f32 %v4129, %v4209
        %v4212 = vmul.f32 %v4134, %v4209
        %v4213 = vmul.f32 %v4137, %v4209
        %v4214 = vmul.f32 %v4142, %v4209
        %v4215 = vmul.f32 %v4145, %v4209
        %v4216 = vmul.f32 %v4150, %v4209
        %v4217 = vmul.f32 %v4153, %v4209
        %v4218 = vmul.f32 %v4158, %v4209
        %v4219 = vmul.f32 %v4161, %v4209
        %v4220 = vmul.f32 %v4166, %v4209
        %v4221 = vmul.f32 %v4169, %v4209
        %v4222 = vmul.f32 %v4174, %v4209
        %v4223 = vmul.f32 %v4177, %v4209
        %v4224 = vmul.f32 %v4182, %v4209
        %v4225 = vmul.f32 %v4185, %v4209
        %v4226 = vadd.f32 %v4210, %v4190
        %v4227 = vadd.f32 %v4211, %v4191
        %v4228 = vadd.f32 %v4212, %v4192
        %v4229 = vadd.f32 %v4213, %v4193
        %v4230 = vadd.f32 %v4214, %v4194
        %v4231 = vadd.f32 %v4215, %v4195
        %v4232 = vadd.f32 %v4216, %v4196
        %v4233 = vadd.f32 %v4217, %v4197
        %v4234 = vadd.f32 %v4218, %v4198
        %v4235 = vadd.f32 %v4219, %v4199
        %v4236 = vadd.f32 %v4220, %v4200
        %v4237 = vadd.f32 %v4221, %v4201
        %v4238 = vadd.f32 %v4222, %v4202
        %v4239 = vadd.f32 %v4223, %v4203
        %v4240 = vadd.f32 %v4224, %v4204
        %v4241 = vadd.f32 %v4225, %v4205
        %4242 = vst [vmem:[%s394] sm:$0xff] %v4226
        %4243 = vst [vmem:[%s394 + $0x8] sm:$0xff] %v4227
        %4244 = vst [vmem:[%s394 + $0x10] sm:$0xff] %v4228
        %4245 = vst [vmem:[%s394 + $0x18] sm:$0xff] %v4229
        %4246 = vst [vmem:[%s394 + $0x20] sm:$0xff] %v4230
        %4247 = vst [vmem:[%s394 + $0x28] sm:$0xff] %v4231
        %4248 = vst [vmem:[%s394 + $0x30] sm:$0xff] %v4232
        %4249 = vst [vmem:[%s394 + $0x38] sm:$0xff] %v4233
        %4250 = vst [vmem:[%s394 + $0x40] sm:$0xff] %v4234
        %4251 = vst [vmem:[%s394 + $0x48] sm:$0xff] %v4235
        %4252 = vst [vmem:[%s394 + $0x50] sm:$0xff] %v4236
        %4253 = vst [vmem:[%s394 + $0x58] sm:$0xff] %v4237
        %4254 = vst [vmem:[%s394 + $0x60] sm:$0xff] %v4238
        %4255 = vst [vmem:[%s394 + $0x68] sm:$0xff] %v4239
        %4256 = vst [vmem:[%s394 + $0x70] sm:$0xff] %v4240
        %4257 = vst [vmem:[%s394 + $0x78] sm:$0xff] %v4241
        %s4258 = sand.u32 %s227, 1
        %s4259 = scalar_lea.sflag [#allocation5], %s4258
        %s4260 = sand.u32 %s227, 1
        %s4261 = smul.addr %s4260, 128
        %s4262 = scalar_lea.vmem [#allocation11], %s4261
        // Predicated region
        $region73: #{tpu_custom_call.1} parent=51 // pred_check
          %p4263 = pneg %p237
        $region74: #{tpu_custom_call.1} parent=51 // pred_check_branch
          %4265 = sbr.rel (%p4263) target = $region76
        $region75: #{tpu_custom_call.1} parent=51 // pred_region
          %s4266 = smul.u32 16, %s32
          %s4268 = ssub.s32 2048, 2048
          %4269 = vsyncadd %s4259, %s4268
          %s4270 = smul.addr %s31, 32
          %s4271 = sadd.s32 %s4266, %s4270
          %s4272 = smul.addr %s4271, 128
          %s4273 = scalar_lea.hbm %s8, %s4272
          %s4274 = sshll.u32 %s4262, 4
          %s4275 = int_to_ptr.vmem [resolvable:$true] %s4274
          %4280 = dma.vmem_to_hbm [thread:$0]  %s4275, 2048, %s4273, %s4259, 128, 128, 8
        $region76: #{tpu_custom_call.1} parent=51 // pred_fallthru
          _
      $region52: #{tpu_custom_call.1} parent=5 // pred_fallthru
        _
      %p4281 = scmp.le.s32.totalorder 2, %s22
      // Predicated region
      $region77: #{tpu_custom_call.1} parent=5 // pred_check
        %p4282 = pneg %p4281
      $region78: #{tpu_custom_call.1} parent=5 // pred_check_branch
        %4284 = sbr.rel (%p4282) target = $region80
      $region79: #{tpu_custom_call.1} parent=5 // pred_region
        %s4285 = ssub.s32 %s22, 2
        // Predicated region
        $region81: #{tpu_custom_call.1} parent=79 // pred_check
          %p4286 = pneg %p243
        $region82: #{tpu_custom_call.1} parent=79 // pred_check_branch
          %4288 = sbr.rel (%p4286) target = $region84
        $region83: #{tpu_custom_call.1} parent=79 // pred_region
          %s4289 = sand.u32 %s228, 1
          %s4290 = scalar_lea.sflag [#allocation5], %s4289
          %s4291 = sand.u32 %s228, 1
          %s4292 = smul.addr %s4291, 128
          %s4293 = scalar_lea.vmem [#allocation11], %s4292
          %4294 = dma.done %s4290, 2048
        $region84: #{tpu_custom_call.1} parent=79 // pred_fallthru
          _
      $region80: #{tpu_custom_call.1} parent=5 // pred_fallthru
        _
    $region6: #{tpu_custom_call.1} parent=1 // loop_footer
      %s26 = sadd.s32 1, %s22
    $region7: #{tpu_custom_call.1} parent=1 // loop_footer_branch
      %21 = sbr.rel target = $region3
    $region8: #{tpu_custom_call.1} parent=1 // loop_exit
      _
    %4295 = vsyncpa [#allocation4], 1
    %s4296 = scalar_lea.sflag [#allocation4], 1
    %4297 = vsyncpa %s4296, 1
    %4298 = vsyncpa [#allocation7], 1
    %4299 = vsyncpa [#allocation10], 1
    %4300 = vsyncpa [#allocation5], 1
    %s4301 = scalar_lea.sflag [#allocation5], 1
    %4302 = vsyncpa %s4301, 1

</llo_original>
